<compile_context>
chip_gen: v5e
topology: v5e:2x2
jax: 0.10.0
libtpu: 0.0.40
codegen_flags: <defaults>
</compile_context>

<pallas_src>
import functools

import jax
import jax.numpy as jnp
from jax.experimental import pallas as pl
from jax.experimental.pallas import tpu as pltpu


# ---------------------------------------------------------------------------
# Helpers
# ---------------------------------------------------------------------------
def _round_up(n, m):
    return ((n + m - 1) // m) * m


def _pick_time_chunk(T, target=8):
    """Largest divisor of T that is <= target (time chunk for the grid)."""
    for c in range(min(T, target), 0, -1):
        if T % c == 0:
            return c
    return 1


# ---------------------------------------------------------------------------
# Fused multi-layer GRU (+ final Linear) Pallas kernel
# ---------------------------------------------------------------------------
def make_gru_stack_kernel(n_layers, Tc, Hp):
    """Build the fused kernel for a static (n_layers, Tc, Hp) configuration.

    Ref order (inputs, outputs, scratch):
      x_ref                                     (Tc, Bp, Ep)  bf16  time-chunk of embeddings
      [w_ih, w_hh, b_comb, b_hn] * n_layers                   layer params (pre-padded)
      w_out_ref (Hp, Cp) bf16, b_out_ref (1, Cp) f32
      logits_ref (Bp, Cp) f32                                 output (written on last chunk)
      h_state (n_layers, Bp, Hp) f32                          persistent hidden states
      gi_buf  (Tc, Bp, 3Hp) f32                               per-chunk hoisted input gates
      ybuf    (Tc, Bp, Hp)  bf16                              per-chunk inter-layer activations
    """

    def kernel(*refs):
        x_ref = refs[0]
        layer_refs = refs[1:1 + 4 * n_layers]
        w_out_ref = refs[1 + 4 * n_layers]
        b_out_ref = refs[2 + 4 * n_layers]
        logits_ref = refs[3 + 4 * n_layers]
        h_state, gi_buf, ybuf = refs[4 + 4 * n_layers:]

        c = pl.program_id(0)
        Bp = h_state.shape[1]

        @pl.when(c == 0)
        def _init():
            # h_0 is zeros (matches reference _init_state); padded lanes stay 0.
            h_state[...] = jnp.zeros_like(h_state)

        for l in range(n_layers):
            wih_ref, whh_ref, bcomb_ref, bhn_ref = layer_refs[4 * l:4 * l + 4]

            # ---- Hoisted input projection for the whole chunk (one big MXU matmul).
            if l == 0:
                xin = x_ref[...].reshape(Tc * Bp, x_ref.shape[-1])          # bf16
            else:
                xin = ybuf[...].reshape(Tc * Bp, Hp)                        # bf16
            gi = jnp.dot(xin, wih_ref[...], preferred_element_type=jnp.float32)
            gi_buf[...] = (gi + bcomb_ref[...]).reshape(Tc, Bp, 3 * Hp)

            whh = whh_ref[...]        # (Hp, 3Hp) bf16, loaded once per chunk
            bhn = bhn_ref[...]        # (1, Hp)   f32

            # ---- Sequential recurrence over the chunk (small GEMM + VPU/EUP gates).
            def step(t, carry, _l=l, _whh=whh, _bhn=bhn):
                h_prev = h_state[_l]                                        # (Bp, Hp) f32
                gi_t = gi_buf[t]                                            # (Bp, 3Hp) f32
                gh = jnp.dot(h_prev.astype(jnp.bfloat16), _whh,
                             preferred_element_type=jnp.float32)            # (Bp, 3Hp)
                # Gate math kept in f32 (gi already carries b_ih+b_hh for r,z; b_ih for n).
                r = jax.nn.sigmoid(gi_t[:, :Hp] + gh[:, :Hp])
                z = jax.nn.sigmoid(gi_t[:, Hp:2 * Hp] + gh[:, Hp:2 * Hp])
                n = jnp.tanh(gi_t[:, 2 * Hp:] + r * (gh[:, 2 * Hp:] + _bhn))
                h_new = (1.0 - z) * n + z * h_prev
                h_state[_l] = h_new
                if _l < n_layers - 1:                   # top layer output never leaves VMEM
                    ybuf[t] = h_new.astype(ybuf.dtype)
                return carry

            jax.lax.fori_loop(0, Tc, step, 0, unroll=True)

        # ---- Fused Linear head on the last chunk (dropout(h_t) is a no-op in the ref).
        @pl.when(c == pl.num_programs(0) - 1)
        def _finalize():
            h_top = h_state[n_layers - 1].astype(jnp.bfloat16)              # (Bp, Hp)
            logits_ref[...] = (
                jnp.dot(h_top, w_out_ref[...], preferred_element_type=jnp.float32)
                + b_out_ref[...]
            )

    return kernel


# ---------------------------------------------------------------------------
# Forward wrapper
# ---------------------------------------------------------------------------
@functools.partial(jax.jit, static_argnames=("n_classes",))
def gru_forward(prepared, token_ids, *, n_classes):
    """token_ids: (B, T) int32 -> logits (B, n_classes) float32."""
    B, T = token_ids.shape
    layers = prepared["layers"]
    n_layers = len(layers)
    Ep = prepared["embed"].shape[1]
    Hp = layers[0]["w_hh"].shape[0]
    Cp = prepared["w_out"].shape[1]
    Bp = _round_up(B, 8)
    Tc = _pick_time_chunk(T, target=8)
    n_chunks = T // Tc

    # Pad batch with token 0; fuse the (B,T)->(T,B) transpose into the gather
    # (transpose the tiny int ids, gather directly into time-major bf16).
    tok = jnp.pad(token_ids, ((0, Bp - B), (0, 0)))
    x = jnp.take(prepared["embed"], jnp.transpose(tok), axis=0)   # (T, Bp, Ep) bf16

    inputs = [x]
    in_specs = [pl.BlockSpec((Tc, Bp, Ep), lambda c: (c, 0, 0))]
    for layer in layers:
        for name in ("w_ih", "w_hh", "b_comb", "b_hn"):
            arr = layer[name]
            inputs.append(arr)
            in_specs.append(pl.BlockSpec(arr.shape, lambda c: (0, 0)))
    inputs += [prepared["w_out"], prepared["b_out"]]
    in_specs += [
        pl.BlockSpec(prepared["w_out"].shape, lambda c: (0, 0)),
        pl.BlockSpec(prepared["b_out"].shape, lambda c: (0, 0)),
    ]

    kernel = make_gru_stack_kernel(n_layers, Tc, Hp)

    logits_p = pl.pallas_call(
        kernel,
        out_shape=jax.ShapeDtypeStruct((Bp, Cp), jnp.float32),
        grid_spec=pltpu.PrefetchScalarGridSpec(
            num_scalar_prefetch=0,
            grid=(n_chunks,),
            in_specs=in_specs,
            out_specs=pl.BlockSpec((Bp, Cp), lambda c: (0, 0)),
            scratch_shapes=[
                pltpu.VMEM((n_layers, Bp, Hp), jnp.float32),   # per-layer hidden state (f32)
                pltpu.VMEM((Tc, Bp, 3 * Hp), jnp.float32),     # hoisted input gates per chunk
                pltpu.VMEM((Tc, Bp, Hp), jnp.bfloat16),        # inter-layer chunk activations
            ],
        ),
        compiler_params=pltpu.CompilerParams(
            dimension_semantics=("arbitrary",),      # time chunks are inherently sequential
            vmem_limit_bytes=32 * 1024 * 1024,       # explicit budget (fits v5e/v6e/v7x)
        ),
    )(*inputs)

    # TODO(synk): on v7x a leading "parallel" batch-chunk grid axis (per-core h state)
    # would use the second TensorCore; omitted here for the tiny test batch.
    return logits_p[:B, :n_classes]


# ---------------------------------------------------------------------------
# One-time parameter preparation (pre-transpose, per-gate pad, fold biases, bf16)
# ---------------------------------------------------------------------------
def _pad_gates_t(w, in_pad, H, Hp):
    """w: (3H, in_dim) PyTorch layout -> (in_pad, 3*Hp), transposed, padded per gate."""
    in_dim = w.shape[1]
    w_t = jnp.transpose(w)                         # (in_dim, 3H)
    gates = []
    for g in range(3):
        blk = w_t[:, g * H:(g + 1) * H]
        gates.append(jnp.pad(blk, ((0, in_pad - in_dim), (0, Hp - H))))
    return jnp.concatenate(gates, axis=1)


def prepare_params(raw):
    E = raw["embed"].shape[1]
    H = raw["gru_layers"][0]["w_hh"].shape[1]
    C = raw["w_out"].shape[0]
    Ep, Hp, Cp = _round_up(E, 128), _round_up(H, 128), _round_up(C, 128)

    prepared = {
        "embed": jnp.pad(raw["embed"], ((0, 0), (0, Ep - E))).astype(jnp.bfloat16),
        "layers": [],
        "w_out": jnp.pad(jnp.transpose(raw["w_out"]),
                         ((0, Hp - H), (0, Cp - C))).astype(jnp.bfloat16),
        "b_out": jnp.pad(raw["b_out"], (0, Cp - C)).reshape(1, Cp).astype(jnp.float32),
    }
    for i, layer in enumerate(raw["gru_layers"]):
        in_pad = Ep if i == 0 else Hp
        b_ih, b_hh = layer["b_ih"], layer["b_hh"]
        # Fold b_ih+b_hh for the r,z gates; keep b_ih only for n (b_hh_n stays inside r*(...)).
        b_comb = jnp.concatenate([
            jnp.pad(b_ih[:H] + b_hh[:H], (0, Hp - H)),
            jnp.pad(b_ih[H:2 * H] + b_hh[H:2 * H], (0, Hp - H)),
            jnp.pad(b_ih[2 * H:], (0, Hp - H)),
        ]).reshape(1, 3 * Hp).astype(jnp.float32)
        b_hn = jnp.pad(b_hh[2 * H:], (0, Hp - H)).reshape(1, Hp).astype(jnp.float32)
        prepared["layers"].append({
            "w_ih": _pad_gates_t(layer["w_ih"], in_pad, H, Hp).astype(jnp.bfloat16),
            "w_hh": _pad_gates_t(layer["w_hh"], Hp, H, Hp).astype(jnp.bfloat16),
            "b_comb": b_comb,
            "b_hn": b_hn,
        })
    return prepared


# ---------------------------------------------------------------------------
# Pure-JAX f32 reference (for correctness check)
# ---------------------------------------------------------------------------
def gru_forward_ref(params, token_ids):
    x = jnp.take(params["embed"], token_ids, axis=0).astype(jnp.float32)  # (B, T, E)
    B = x.shape[0]
    for layer in params["gru_layers"]:
        H = layer["w_hh"].shape[1]
        w_ih_t, w_hh_t = layer["w_ih"].T, layer["w_hh"].T
        b_ih, b_hh = layer["b_ih"], layer["b_hh"]

        def step(h, x_t):
            gi = x_t @ w_ih_t + b_ih
            gh = h @ w_hh_t + b_hh
            i_r, i_z, i_n = gi[:, :H], gi[:, H:2 * H], gi[:, 2 * H:]
            h_r, h_z, h_n = gh[:, :H], gh[:, H:2 * H], gh[:, 2 * H:]
            r = jax.nn.sigmoid(i_r + h_r)
            z = jax.nn.sigmoid(i_z + h_z)
            n = jnp.tanh(i_n + r * h_n)
            h_new = (1.0 - z) * n + z * h
            return h_new, h_new

        h0 = jnp.zeros((B, H), jnp.float32)
        _, ys = jax.lax.scan(step, h0, jnp.transpose(x, (1, 0, 2)))
        x = jnp.transpose(ys, (1, 0, 2))
    h_t = x[:, -1, :]
    return h_t @ params["w_out"].T + params["b_out"]


# ---------------------------------------------------------------------------
# Deterministic parameter init (PyTorch shapes; synthetic values)
# ---------------------------------------------------------------------------
def init_params(key, n_layers, hidden_dim, n_vocab, embed_dim, n_classes):
    keys = iter(jax.random.split(key, 3 + 4 * n_layers))
    scale = 1.0 / jnp.sqrt(hidden_dim)

    def u(k, shape):
        return jax.random.uniform(k, shape, jnp.float32, -scale, scale)

    params = {
        "embed": jax.random.normal(next(keys), (n_vocab, embed_dim), jnp.float32) * 0.1,
        "gru_layers": [],
        "w_out": u(next(keys), (n_classes, hidden_dim)),
        "b_out": u(next(keys), (n_classes,)),
    }
    for layer in range(n_layers):
        in_dim = embed_dim if layer == 0 else hidden_dim
        params["gru_layers"].append({
            "w_ih": u(next(keys), (3 * hidden_dim, in_dim)),
            "w_hh": u(next(keys), (3 * hidden_dim, hidden_dim)),
            "b_ih": u(next(keys), (3 * hidden_dim,)),
            "b_hh": u(next(keys), (3 * hidden_dim,)),
        })
    return params


# ---------------------------------------------------------------------------
if __name__ == "__main__":
    n_layers, hidden_dim, n_vocab, embed_dim, n_classes = 2, 32, 50, 16, 4
    batch, seq = 2, 8

    key = jax.random.PRNGKey(0)
    pkey, xkey = jax.random.split(key)
    raw_params = init_params(pkey, n_layers, hidden_dim, n_vocab, embed_dim, n_classes)
    prepared = prepare_params(raw_params)
    token_ids = jax.random.randint(xkey, (batch, seq), 0, n_vocab, dtype=jnp.int32)

    logits = gru_forward(prepared, token_ids, n_classes=n_classes)
    logits = jax.block_until_ready(logits)

    ref = gru_forward_ref(raw_params, token_ids)
    assert logits.shape == (batch, n_classes)
    # bf16 MXU operands (f32 accumulation) -> loosened tolerance vs. pure-f32 reference.
    assert jnp.allclose(logits, ref, atol=5e-2, rtol=5e-2), (logits, ref)

    print("KERNEL_OK")
</pallas_src>

<mosaic_0001>
module attributes {stable_mosaic.version = 11 : i64} {
  func.func @kernel(%arg0: i32, %arg1: memref<8x8x128xbf16, #tpu.memory_space<vmem>>, %arg2: memref<128x384xbf16, #tpu.memory_space<vmem>>, %arg3: memref<128x384xbf16, #tpu.memory_space<vmem>>, %arg4: memref<1x384xf32, #tpu.memory_space<vmem>>, %arg5: memref<1x128xf32, #tpu.memory_space<vmem>>, %arg6: memref<128x384xbf16, #tpu.memory_space<vmem>>, %arg7: memref<128x384xbf16, #tpu.memory_space<vmem>>, %arg8: memref<1x384xf32, #tpu.memory_space<vmem>>, %arg9: memref<1x128xf32, #tpu.memory_space<vmem>>, %arg10: memref<128x128xbf16, #tpu.memory_space<vmem>>, %arg11: memref<1x128xf32, #tpu.memory_space<vmem>>, %arg12: memref<8x128xf32, #tpu.memory_space<vmem>>, %arg13: memref<2x8x128xf32, #tpu.memory_space<vmem>>, %arg14: memref<8x8x384xf32, #tpu.memory_space<vmem>>, %arg15: memref<8x8x128xbf16, #tpu.memory_space<vmem>>) attributes {dimension_semantics = [#tpu.dimension_semantics<arbitrary>], iteration_bounds = array<i64: 1>, scalar_prefetch = 0 : i64, scratch_operands = 3 : i64, tpu.core_type = #tpu.core_type<tc>, window_params = [{transform_indices = @transform_0, window_bounds = array<i64: 8, 8, 128>}, {pipeline_mode = #tpu.pipeline_mode<synchronous>, transform_indices = @transform_1, window_bounds = array<i64: 128, 384>}, {pipeline_mode = #tpu.pipeline_mode<synchronous>, transform_indices = @transform_2, window_bounds = array<i64: 128, 384>}, {pipeline_mode = #tpu.pipeline_mode<synchronous>, transform_indices = @transform_3, window_bounds = array<i64: 1, 384>}, {pipeline_mode = #tpu.pipeline_mode<synchronous>, transform_indices = @transform_4, window_bounds = array<i64: 1, 128>}, {pipeline_mode = #tpu.pipeline_mode<synchronous>, transform_indices = @transform_5, window_bounds = array<i64: 128, 384>}, {pipeline_mode = #tpu.pipeline_mode<synchronous>, transform_indices = @transform_6, window_bounds = array<i64: 128, 384>}, {pipeline_mode = #tpu.pipeline_mode<synchronous>, transform_indices = @transform_7, window_bounds = array<i64: 1, 384>}, {pipeline_mode = #tpu.pipeline_mode<synchronous>, transform_indices = @transform_8, window_bounds = array<i64: 1, 128>}, {pipeline_mode = #tpu.pipeline_mode<synchronous>, transform_indices = @transform_9, window_bounds = array<i64: 128, 128>}, {pipeline_mode = #tpu.pipeline_mode<synchronous>, transform_indices = @transform_10, window_bounds = array<i64: 1, 128>}, {pipeline_mode = #tpu.pipeline_mode<synchronous>, transform_indices = @transform_11, window_bounds = array<i64: 8, 128>}]} {
    %c0_i32 = arith.constant 0 : i32
    %0 = arith.cmpi eq, %arg0, %c0_i32 : i32
    %1 = arith.extui %0 : i1 to i32
    %c0_i32_0 = arith.constant 0 : i32
    %2 = arith.cmpi ne, %1, %c0_i32_0 : i32
    scf.if %2 {
      %cst_248 = arith.constant 0.000000e+00 : f32
      %676 = vector.broadcast %cst_248 : f32 to vector<2x8x128xf32>
      %c0_249 = arith.constant 0 : index
      %c0_250 = arith.constant 0 : index
      %c0_251 = arith.constant 0 : index
      %677 = vector.load %arg13[%c0_249, %c0_250, %c0_251] : memref<2x8x128xf32, #tpu.memory_space<vmem>>, vector<2x8x128xf32>
      tpu.vector_store %arg13[%c0_249, %c0_250, %c0_251], %676 {strides = array<i32>} : memref<2x8x128xf32, #tpu.memory_space<vmem>>, vector<2x8x128xf32>,
    } else {
    }
    %c0 = arith.constant 0 : index
    %c0_1 = arith.constant 0 : index
    %c0_2 = arith.constant 0 : index
    %3 = vector.load %arg1[%c0, %c0_1, %c0_2] : memref<8x8x128xbf16, #tpu.memory_space<vmem>>, vector<8x8x128xbf16>
    %4 = vector.shape_cast %3 : vector<8x8x128xbf16> to vector<64x128xbf16>
    %c0_3 = arith.constant 0 : index
    %c0_4 = arith.constant 0 : index
    %5 = vector.load %arg2[%c0_3, %c0_4] : memref<128x384xbf16, #tpu.memory_space<vmem>>, vector<128x384xbf16>
    %cst = arith.constant dense<0.000000e+00> : vector<64x384xf32>
    %6 = tpu.matmul %4, %5, %cst {dimension_numbers = #tpu.dot_dimension_numbers<[1], [0], [0], [1], [0, 0, 1, 1], [], []>} : vector<64x128xbf16>, vector<128x384xbf16>, vector<64x384xf32> -> vector<64x384xf32>
    %c0_5 = arith.constant 0 : index
    %c0_6 = arith.constant 0 : index
    %7 = vector.load %arg4[%c0_5, %c0_6] : memref<1x384xf32, #tpu.memory_space<vmem>>, vector<1x384xf32>
    %8 = vector.broadcast %7 : vector<1x384xf32> to vector<64x384xf32>
    %9 = arith.addf %6, %8 : vector<64x384xf32>
    %10 = vector.shape_cast %9 : vector<64x384xf32> to vector<8x8x384xf32>
    %c0_7 = arith.constant 0 : index
    %c0_8 = arith.constant 0 : index
    %c0_9 = arith.constant 0 : index
    %11 = vector.load %arg14[%c0_7, %c0_8, %c0_9] : memref<8x8x384xf32, #tpu.memory_space<vmem>>, vector<8x8x384xf32>
    tpu.vector_store %arg14[%c0_7, %c0_8, %c0_9], %10 {strides = array<i32>} : memref<8x8x384xf32, #tpu.memory_space<vmem>>, vector<8x8x384xf32>,
    %c0_10 = arith.constant 0 : index
    %c0_11 = arith.constant 0 : index
    %12 = vector.load %arg3[%c0_10, %c0_11] : memref<128x384xbf16, #tpu.memory_space<vmem>>, vector<128x384xbf16>
    %c0_12 = arith.constant 0 : index
    %c0_13 = arith.constant 0 : index
    %13 = vector.load %arg5[%c0_12, %c0_13] : memref<1x128xf32, #tpu.memory_space<vmem>>, vector<1x128xf32>
    %c0_i32_14 = arith.constant 0 : i32
    %c0_15 = arith.constant 0 : index
    %c0_16 = arith.constant 0 : index
    %c0_17 = arith.constant 0 : index
    %14 = vector.load %arg13[%c0_15, %c0_16, %c0_17] : memref<2x8x128xf32, #tpu.memory_space<vmem>>, vector<1x8x128xf32>
    %15 = vector.shape_cast %14 : vector<1x8x128xf32> to vector<8x128xf32>
    %16 = arith.index_cast %c0_i32_14 : i32 to index
    %c0_18 = arith.constant 0 : index
    %c0_19 = arith.constant 0 : index
    %17 = vector.load %arg14[%16, %c0_18, %c0_19] : memref<8x8x384xf32, #tpu.memory_space<vmem>>, vector<1x8x384xf32>
    %18 = vector.shape_cast %17 : vector<1x8x384xf32> to vector<8x384xf32>
    %19 = arith.truncf %15 : vector<8x128xf32> to vector<8x128xbf16>
    %cst_20 = arith.constant dense<0.000000e+00> : vector<8x384xf32>
    %20 = tpu.matmul %19, %12, %cst_20 {dimension_numbers = #tpu.dot_dimension_numbers<[1], [0], [0], [1], [0, 0, 1, 1], [], []>} : vector<8x128xbf16>, vector<128x384xbf16>, vector<8x384xf32> -> vector<8x384xf32>
    %21 = vector.extract_strided_slice %18 {offsets = [0, 0], sizes = [8, 128], strides = [1, 1]} : vector<8x384xf32> to vector<8x128xf32>
    %22 = vector.extract_strided_slice %20 {offsets = [0, 0], sizes = [8, 128], strides = [1, 1]} : vector<8x384xf32> to vector<8x128xf32>
    %23 = arith.addf %21, %22 : vector<8x128xf32>
    %24 = arith.negf %23 : vector<8x128xf32>
    %25 = math.exp %24 : vector<8x128xf32>
    %cst_21 = arith.constant 1.000000e+00 : f32
    %26 = vector.broadcast %cst_21 : f32 to vector<8x128xf32>
    %27 = arith.addf %26, %25 : vector<8x128xf32>
    %28 = arith.divf %26, %27 : vector<8x128xf32>
    %29 = vector.extract_strided_slice %18 {offsets = [0, 128], sizes = [8, 128], strides = [1, 1]} : vector<8x384xf32> to vector<8x128xf32>
    %30 = vector.extract_strided_slice %20 {offsets = [0, 128], sizes = [8, 128], strides = [1, 1]} : vector<8x384xf32> to vector<8x128xf32>
    %31 = arith.addf %29, %30 : vector<8x128xf32>
    %32 = arith.negf %31 : vector<8x128xf32>
    %33 = math.exp %32 : vector<8x128xf32>
    %cst_22 = arith.constant 1.000000e+00 : f32
    %34 = vector.broadcast %cst_22 : f32 to vector<8x128xf32>
    %35 = arith.addf %34, %33 : vector<8x128xf32>
    %36 = arith.divf %34, %35 : vector<8x128xf32>
    %37 = vector.extract_strided_slice %18 {offsets = [0, 256], sizes = [8, 128], strides = [1, 1]} : vector<8x384xf32> to vector<8x128xf32>
    %38 = vector.extract_strided_slice %20 {offsets = [0, 256], sizes = [8, 128], strides = [1, 1]} : vector<8x384xf32> to vector<8x128xf32>
    %39 = vector.broadcast %13 : vector<1x128xf32> to vector<8x128xf32>
    %40 = arith.addf %38, %39 : vector<8x128xf32>
    %41 = arith.mulf %28, %40 : vector<8x128xf32>
    %42 = arith.addf %37, %41 : vector<8x128xf32>
    %43 = math.tanh %42 : vector<8x128xf32>
    %cst_23 = arith.constant 1.000000e+00 : f32
    %44 = vector.broadcast %cst_23 : f32 to vector<8x128xf32>
    %45 = arith.subf %44, %36 : vector<8x128xf32>
    %46 = arith.mulf %45, %43 : vector<8x128xf32>
    %47 = arith.mulf %36, %15 : vector<8x128xf32>
    %48 = arith.addf %46, %47 : vector<8x128xf32>
    %c0_24 = arith.constant 0 : index
    %c0_25 = arith.constant 0 : index
    %c0_26 = arith.constant 0 : index
    %49 = vector.load %arg13[%c0_24, %c0_25, %c0_26] : memref<2x8x128xf32, #tpu.memory_space<vmem>>, vector<1x8x128xf32>
    %50 = vector.shape_cast %49 : vector<1x8x128xf32> to vector<8x128xf32>
    %51 = vector.shape_cast %48 : vector<8x128xf32> to vector<1x8x128xf32>
    tpu.vector_store %arg13[%c0_24, %c0_25, %c0_26], %51 {strides = array<i32>} : memref<2x8x128xf32, #tpu.memory_space<vmem>>, vector<1x8x128xf32>,
    %52 = arith.truncf %48 : vector<8x128xf32> to vector<8x128xbf16>
    %53 = arith.index_cast %c0_i32_14 : i32 to index
    %c0_27 = arith.constant 0 : index
    %c0_28 = arith.constant 0 : index
    %54 = vector.load %arg15[%53, %c0_27, %c0_28] : memref<8x8x128xbf16, #tpu.memory_space<vmem>>, vector<1x8x128xbf16>
    %55 = vector.shape_cast %54 : vector<1x8x128xbf16> to vector<8x128xbf16>
    %56 = vector.shape_cast %52 : vector<8x128xbf16> to vector<1x8x128xbf16>
    tpu.vector_store %arg15[%53, %c0_27, %c0_28], %56 {strides = array<i32>} : memref<8x8x128xbf16, #tpu.memory_space<vmem>>, vector<1x8x128xbf16>,
    %c1_i32 = arith.constant 1 : i32
    %c0_29 = arith.constant 0 : index
    %c0_30 = arith.constant 0 : index
    %c0_31 = arith.constant 0 : index
    %57 = vector.load %arg13[%c0_29, %c0_30, %c0_31] : memref<2x8x128xf32, #tpu.memory_space<vmem>>, vector<1x8x128xf32>
    %58 = vector.shape_cast %57 : vector<1x8x128xf32> to vector<8x128xf32>
    %59 = arith.index_cast %c1_i32 : i32 to index
    %c0_32 = arith.constant 0 : index
    %c0_33 = arith.constant 0 : index
    %60 = vector.load %arg14[%59, %c0_32, %c0_33] : memref<8x8x384xf32, #tpu.memory_space<vmem>>, vector<1x8x384xf32>
    %61 = vector.shape_cast %60 : vector<1x8x384xf32> to vector<8x384xf32>
    %62 = arith.truncf %58 : vector<8x128xf32> to vector<8x128xbf16>
    %cst_34 = arith.constant dense<0.000000e+00> : vector<8x384xf32>
    %63 = tpu.matmul %62, %12, %cst_34 {dimension_numbers = #tpu.dot_dimension_numbers<[1], [0], [0], [1], [0, 0, 1, 1], [], []>} : vector<8x128xbf16>, vector<128x384xbf16>, vector<8x384xf32> -> vector<8x384xf32>
    %64 = vector.extract_strided_slice %61 {offsets = [0, 0], sizes = [8, 128], strides = [1, 1]} : vector<8x384xf32> to vector<8x128xf32>
    %65 = vector.extract_strided_slice %63 {offsets = [0, 0], sizes = [8, 128], strides = [1, 1]} : vector<8x384xf32> to vector<8x128xf32>
    %66 = arith.addf %64, %65 : vector<8x128xf32>
    %67 = arith.negf %66 : vector<8x128xf32>
    %68 = math.exp %67 : vector<8x128xf32>
    %cst_35 = arith.constant 1.000000e+00 : f32
    %69 = vector.broadcast %cst_35 : f32 to vector<8x128xf32>
    %70 = arith.addf %69, %68 : vector<8x128xf32>
    %71 = arith.divf %69, %70 : vector<8x128xf32>
    %72 = vector.extract_strided_slice %61 {offsets = [0, 128], sizes = [8, 128], strides = [1, 1]} : vector<8x384xf32> to vector<8x128xf32>
    %73 = vector.extract_strided_slice %63 {offsets = [0, 128], sizes = [8, 128], strides = [1, 1]} : vector<8x384xf32> to vector<8x128xf32>
    %74 = arith.addf %72, %73 : vector<8x128xf32>
    %75 = arith.negf %74 : vector<8x128xf32>
    %76 = math.exp %75 : vector<8x128xf32>
    %cst_36 = arith.constant 1.000000e+00 : f32
    %77 = vector.broadcast %cst_36 : f32 to vector<8x128xf32>
    %78 = arith.addf %77, %76 : vector<8x128xf32>
    %79 = arith.divf %77, %78 : vector<8x128xf32>
    %80 = vector.extract_strided_slice %61 {offsets = [0, 256], sizes = [8, 128], strides = [1, 1]} : vector<8x384xf32> to vector<8x128xf32>
    %81 = vector.extract_strided_slice %63 {offsets = [0, 256], sizes = [8, 128], strides = [1, 1]} : vector<8x384xf32> to vector<8x128xf32>
    %82 = vector.broadcast %13 : vector<1x128xf32> to vector<8x128xf32>
    %83 = arith.addf %81, %82 : vector<8x128xf32>
    %84 = arith.mulf %71, %83 : vector<8x128xf32>
    %85 = arith.addf %80, %84 : vector<8x128xf32>
    %86 = math.tanh %85 : vector<8x128xf32>
    %cst_37 = arith.constant 1.000000e+00 : f32
    %87 = vector.broadcast %cst_37 : f32 to vector<8x128xf32>
    %88 = arith.subf %87, %79 : vector<8x128xf32>
    %89 = arith.mulf %88, %86 : vector<8x128xf32>
    %90 = arith.mulf %79, %58 : vector<8x128xf32>
    %91 = arith.addf %89, %90 : vector<8x128xf32>
    %c0_38 = arith.constant 0 : index
    %c0_39 = arith.constant 0 : index
    %c0_40 = arith.constant 0 : index
    %92 = vector.load %arg13[%c0_38, %c0_39, %c0_40] : memref<2x8x128xf32, #tpu.memory_space<vmem>>, vector<1x8x128xf32>
    %93 = vector.shape_cast %92 : vector<1x8x128xf32> to vector<8x128xf32>
    %94 = vector.shape_cast %91 : vector<8x128xf32> to vector<1x8x128xf32>
    tpu.vector_store %arg13[%c0_38, %c0_39, %c0_40], %94 {strides = array<i32>} : memref<2x8x128xf32, #tpu.memory_space<vmem>>, vector<1x8x128xf32>,
    %95 = arith.truncf %91 : vector<8x128xf32> to vector<8x128xbf16>
    %96 = arith.index_cast %c1_i32 : i32 to index
    %c0_41 = arith.constant 0 : index
    %c0_42 = arith.constant 0 : index
    %97 = vector.load %arg15[%96, %c0_41, %c0_42] : memref<8x8x128xbf16, #tpu.memory_space<vmem>>, vector<1x8x128xbf16>
    %98 = vector.shape_cast %97 : vector<1x8x128xbf16> to vector<8x128xbf16>
    %99 = vector.shape_cast %95 : vector<8x128xbf16> to vector<1x8x128xbf16>
    tpu.vector_store %arg15[%96, %c0_41, %c0_42], %99 {strides = array<i32>} : memref<8x8x128xbf16, #tpu.memory_space<vmem>>, vector<1x8x128xbf16>,
    %c2_i32 = arith.constant 2 : i32
    %c0_43 = arith.constant 0 : index
    %c0_44 = arith.constant 0 : index
    %c0_45 = arith.constant 0 : index
    %100 = vector.load %arg13[%c0_43, %c0_44, %c0_45] : memref<2x8x128xf32, #tpu.memory_space<vmem>>, vector<1x8x128xf32>
    %101 = vector.shape_cast %100 : vector<1x8x128xf32> to vector<8x128xf32>
    %102 = arith.index_cast %c2_i32 : i32 to index
    %c0_46 = arith.constant 0 : index
    %c0_47 = arith.constant 0 : index
    %103 = vector.load %arg14[%102, %c0_46, %c0_47] : memref<8x8x384xf32, #tpu.memory_space<vmem>>, vector<1x8x384xf32>
    %104 = vector.shape_cast %103 : vector<1x8x384xf32> to vector<8x384xf32>
    %105 = arith.truncf %101 : vector<8x128xf32> to vector<8x128xbf16>
    %cst_48 = arith.constant dense<0.000000e+00> : vector<8x384xf32>
    %106 = tpu.matmul %105, %12, %cst_48 {dimension_numbers = #tpu.dot_dimension_numbers<[1], [0], [0], [1], [0, 0, 1, 1], [], []>} : vector<8x128xbf16>, vector<128x384xbf16>, vector<8x384xf32> -> vector<8x384xf32>
    %107 = vector.extract_strided_slice %104 {offsets = [0, 0], sizes = [8, 128], strides = [1, 1]} : vector<8x384xf32> to vector<8x128xf32>
    %108 = vector.extract_strided_slice %106 {offsets = [0, 0], sizes = [8, 128], strides = [1, 1]} : vector<8x384xf32> to vector<8x128xf32>
    %109 = arith.addf %107, %108 : vector<8x128xf32>
    %110 = arith.negf %109 : vector<8x128xf32>
    %111 = math.exp %110 : vector<8x128xf32>
    %cst_49 = arith.constant 1.000000e+00 : f32
    %112 = vector.broadcast %cst_49 : f32 to vector<8x128xf32>
    %113 = arith.addf %112, %111 : vector<8x128xf32>
    %114 = arith.divf %112, %113 : vector<8x128xf32>
    %115 = vector.extract_strided_slice %104 {offsets = [0, 128], sizes = [8, 128], strides = [1, 1]} : vector<8x384xf32> to vector<8x128xf32>
    %116 = vector.extract_strided_slice %106 {offsets = [0, 128], sizes = [8, 128], strides = [1, 1]} : vector<8x384xf32> to vector<8x128xf32>
    %117 = arith.addf %115, %116 : vector<8x128xf32>
    %118 = arith.negf %117 : vector<8x128xf32>
    %119 = math.exp %118 : vector<8x128xf32>
    %cst_50 = arith.constant 1.000000e+00 : f32
    %120 = vector.broadcast %cst_50 : f32 to vector<8x128xf32>
    %121 = arith.addf %120, %119 : vector<8x128xf32>
    %122 = arith.divf %120, %121 : vector<8x128xf32>
    %123 = vector.extract_strided_slice %104 {offsets = [0, 256], sizes = [8, 128], strides = [1, 1]} : vector<8x384xf32> to vector<8x128xf32>
    %124 = vector.extract_strided_slice %106 {offsets = [0, 256], sizes = [8, 128], strides = [1, 1]} : vector<8x384xf32> to vector<8x128xf32>
    %125 = vector.broadcast %13 : vector<1x128xf32> to vector<8x128xf32>
    %126 = arith.addf %124, %125 : vector<8x128xf32>
    %127 = arith.mulf %114, %126 : vector<8x128xf32>
    %128 = arith.addf %123, %127 : vector<8x128xf32>
    %129 = math.tanh %128 : vector<8x128xf32>
    %cst_51 = arith.constant 1.000000e+00 : f32
    %130 = vector.broadcast %cst_51 : f32 to vector<8x128xf32>
    %131 = arith.subf %130, %122 : vector<8x128xf32>
    %132 = arith.mulf %131, %129 : vector<8x128xf32>
    %133 = arith.mulf %122, %101 : vector<8x128xf32>
    %134 = arith.addf %132, %133 : vector<8x128xf32>
    %c0_52 = arith.constant 0 : index
    %c0_53 = arith.constant 0 : index
    %c0_54 = arith.constant 0 : index
    %135 = vector.load %arg13[%c0_52, %c0_53, %c0_54] : memref<2x8x128xf32, #tpu.memory_space<vmem>>, vector<1x8x128xf32>
    %136 = vector.shape_cast %135 : vector<1x8x128xf32> to vector<8x128xf32>
    %137 = vector.shape_cast %134 : vector<8x128xf32> to vector<1x8x128xf32>
    tpu.vector_store %arg13[%c0_52, %c0_53, %c0_54], %137 {strides = array<i32>} : memref<2x8x128xf32, #tpu.memory_space<vmem>>, vector<1x8x128xf32>,
    %138 = arith.truncf %134 : vector<8x128xf32> to vector<8x128xbf16>
    %139 = arith.index_cast %c2_i32 : i32 to index
    %c0_55 = arith.constant 0 : index
    %c0_56 = arith.constant 0 : index
    %140 = vector.load %arg15[%139, %c0_55, %c0_56] : memref<8x8x128xbf16, #tpu.memory_space<vmem>>, vector<1x8x128xbf16>
    %141 = vector.shape_cast %140 : vector<1x8x128xbf16> to vector<8x128xbf16>
    %142 = vector.shape_cast %138 : vector<8x128xbf16> to vector<1x8x128xbf16>
    tpu.vector_store %arg15[%139, %c0_55, %c0_56], %142 {strides = array<i32>} : memref<8x8x128xbf16, #tpu.memory_space<vmem>>, vector<1x8x128xbf16>,
    %c3_i32 = arith.constant 3 : i32
    %c0_57 = arith.constant 0 : index
    %c0_58 = arith.constant 0 : index
    %c0_59 = arith.constant 0 : index
    %143 = vector.load %arg13[%c0_57, %c0_58, %c0_59] : memref<2x8x128xf32, #tpu.memory_space<vmem>>, vector<1x8x128xf32>
    %144 = vector.shape_cast %143 : vector<1x8x128xf32> to vector<8x128xf32>
    %145 = arith.index_cast %c3_i32 : i32 to index
    %c0_60 = arith.constant 0 : index
    %c0_61 = arith.constant 0 : index
    %146 = vector.load %arg14[%145, %c0_60, %c0_61] : memref<8x8x384xf32, #tpu.memory_space<vmem>>, vector<1x8x384xf32>
    %147 = vector.shape_cast %146 : vector<1x8x384xf32> to vector<8x384xf32>
    %148 = arith.truncf %144 : vector<8x128xf32> to vector<8x128xbf16>
    %cst_62 = arith.constant dense<0.000000e+00> : vector<8x384xf32>
    %149 = tpu.matmul %148, %12, %cst_62 {dimension_numbers = #tpu.dot_dimension_numbers<[1], [0], [0], [1], [0, 0, 1, 1], [], []>} : vector<8x128xbf16>, vector<128x384xbf16>, vector<8x384xf32> -> vector<8x384xf32>
    %150 = vector.extract_strided_slice %147 {offsets = [0, 0], sizes = [8, 128], strides = [1, 1]} : vector<8x384xf32> to vector<8x128xf32>
    %151 = vector.extract_strided_slice %149 {offsets = [0, 0], sizes = [8, 128], strides = [1, 1]} : vector<8x384xf32> to vector<8x128xf32>
    %152 = arith.addf %150, %151 : vector<8x128xf32>
    %153 = arith.negf %152 : vector<8x128xf32>
    %154 = math.exp %153 : vector<8x128xf32>
    %cst_63 = arith.constant 1.000000e+00 : f32
    %155 = vector.broadcast %cst_63 : f32 to vector<8x128xf32>
    %156 = arith.addf %155, %154 : vector<8x128xf32>
    %157 = arith.divf %155, %156 : vector<8x128xf32>
    %158 = vector.extract_strided_slice %147 {offsets = [0, 128], sizes = [8, 128], strides = [1, 1]} : vector<8x384xf32> to vector<8x128xf32>
    %159 = vector.extract_strided_slice %149 {offsets = [0, 128], sizes = [8, 128], strides = [1, 1]} : vector<8x384xf32> to vector<8x128xf32>
    %160 = arith.addf %158, %159 : vector<8x128xf32>
    %161 = arith.negf %160 : vector<8x128xf32>
    %162 = math.exp %161 : vector<8x128xf32>
    %cst_64 = arith.constant 1.000000e+00 : f32
    %163 = vector.broadcast %cst_64 : f32 to vector<8x128xf32>
    %164 = arith.addf %163, %162 : vector<8x128xf32>
    %165 = arith.divf %163, %164 : vector<8x128xf32>
    %166 = vector.extract_strided_slice %147 {offsets = [0, 256], sizes = [8, 128], strides = [1, 1]} : vector<8x384xf32> to vector<8x128xf32>
    %167 = vector.extract_strided_slice %149 {offsets = [0, 256], sizes = [8, 128], strides = [1, 1]} : vector<8x384xf32> to vector<8x128xf32>
    %168 = vector.broadcast %13 : vector<1x128xf32> to vector<8x128xf32>
    %169 = arith.addf %167, %168 : vector<8x128xf32>
    %170 = arith.mulf %157, %169 : vector<8x128xf32>
    %171 = arith.addf %166, %170 : vector<8x128xf32>
    %172 = math.tanh %171 : vector<8x128xf32>
    %cst_65 = arith.constant 1.000000e+00 : f32
    %173 = vector.broadcast %cst_65 : f32 to vector<8x128xf32>
    %174 = arith.subf %173, %165 : vector<8x128xf32>
    %175 = arith.mulf %174, %172 : vector<8x128xf32>
    %176 = arith.mulf %165, %144 : vector<8x128xf32>
    %177 = arith.addf %175, %176 : vector<8x128xf32>
    %c0_66 = arith.constant 0 : index
    %c0_67 = arith.constant 0 : index
    %c0_68 = arith.constant 0 : index
    %178 = vector.load %arg13[%c0_66, %c0_67, %c0_68] : memref<2x8x128xf32, #tpu.memory_space<vmem>>, vector<1x8x128xf32>
    %179 = vector.shape_cast %178 : vector<1x8x128xf32> to vector<8x128xf32>
    %180 = vector.shape_cast %177 : vector<8x128xf32> to vector<1x8x128xf32>
    tpu.vector_store %arg13[%c0_66, %c0_67, %c0_68], %180 {strides = array<i32>} : memref<2x8x128xf32, #tpu.memory_space<vmem>>, vector<1x8x128xf32>,
    %181 = arith.truncf %177 : vector<8x128xf32> to vector<8x128xbf16>
    %182 = arith.index_cast %c3_i32 : i32 to index
    %c0_69 = arith.constant 0 : index
    %c0_70 = arith.constant 0 : index
    %183 = vector.load %arg15[%182, %c0_69, %c0_70] : memref<8x8x128xbf16, #tpu.memory_space<vmem>>, vector<1x8x128xbf16>
    %184 = vector.shape_cast %183 : vector<1x8x128xbf16> to vector<8x128xbf16>
    %185 = vector.shape_cast %181 : vector<8x128xbf16> to vector<1x8x128xbf16>
    tpu.vector_store %arg15[%182, %c0_69, %c0_70], %185 {strides = array<i32>} : memref<8x8x128xbf16, #tpu.memory_space<vmem>>, vector<1x8x128xbf16>,
    %c4_i32 = arith.constant 4 : i32
    %c0_71 = arith.constant 0 : index
    %c0_72 = arith.constant 0 : index
    %c0_73 = arith.constant 0 : index
    %186 = vector.load %arg13[%c0_71, %c0_72, %c0_73] : memref<2x8x128xf32, #tpu.memory_space<vmem>>, vector<1x8x128xf32>
    %187 = vector.shape_cast %186 : vector<1x8x128xf32> to vector<8x128xf32>
    %188 = arith.index_cast %c4_i32 : i32 to index
    %c0_74 = arith.constant 0 : index
    %c0_75 = arith.constant 0 : index
    %189 = vector.load %arg14[%188, %c0_74, %c0_75] : memref<8x8x384xf32, #tpu.memory_space<vmem>>, vector<1x8x384xf32>
    %190 = vector.shape_cast %189 : vector<1x8x384xf32> to vector<8x384xf32>
    %191 = arith.truncf %187 : vector<8x128xf32> to vector<8x128xbf16>
    %cst_76 = arith.constant dense<0.000000e+00> : vector<8x384xf32>
    %192 = tpu.matmul %191, %12, %cst_76 {dimension_numbers = #tpu.dot_dimension_numbers<[1], [0], [0], [1], [0, 0, 1, 1], [], []>} : vector<8x128xbf16>, vector<128x384xbf16>, vector<8x384xf32> -> vector<8x384xf32>
    %193 = vector.extract_strided_slice %190 {offsets = [0, 0], sizes = [8, 128], strides = [1, 1]} : vector<8x384xf32> to vector<8x128xf32>
    %194 = vector.extract_strided_slice %192 {offsets = [0, 0], sizes = [8, 128], strides = [1, 1]} : vector<8x384xf32> to vector<8x128xf32>
    %195 = arith.addf %193, %194 : vector<8x128xf32>
    %196 = arith.negf %195 : vector<8x128xf32>
    %197 = math.exp %196 : vector<8x128xf32>
    %cst_77 = arith.constant 1.000000e+00 : f32
    %198 = vector.broadcast %cst_77 : f32 to vector<8x128xf32>
    %199 = arith.addf %198, %197 : vector<8x128xf32>
    %200 = arith.divf %198, %199 : vector<8x128xf32>
    %201 = vector.extract_strided_slice %190 {offsets = [0, 128], sizes = [8, 128], strides = [1, 1]} : vector<8x384xf32> to vector<8x128xf32>
    %202 = vector.extract_strided_slice %192 {offsets = [0, 128], sizes = [8, 128], strides = [1, 1]} : vector<8x384xf32> to vector<8x128xf32>
    %203 = arith.addf %201, %202 : vector<8x128xf32>
    %204 = arith.negf %203 : vector<8x128xf32>
    %205 = math.exp %204 : vector<8x128xf32>
    %cst_78 = arith.constant 1.000000e+00 : f32
    %206 = vector.broadcast %cst_78 : f32 to vector<8x128xf32>
    %207 = arith.addf %206, %205 : vector<8x128xf32>
    %208 = arith.divf %206, %207 : vector<8x128xf32>
    %209 = vector.extract_strided_slice %190 {offsets = [0, 256], sizes = [8, 128], strides = [1, 1]} : vector<8x384xf32> to vector<8x128xf32>
    %210 = vector.extract_strided_slice %192 {offsets = [0, 256], sizes = [8, 128], strides = [1, 1]} : vector<8x384xf32> to vector<8x128xf32>
    %211 = vector.broadcast %13 : vector<1x128xf32> to vector<8x128xf32>
    %212 = arith.addf %210, %211 : vector<8x128xf32>
    %213 = arith.mulf %200, %212 : vector<8x128xf32>
    %214 = arith.addf %209, %213 : vector<8x128xf32>
    %215 = math.tanh %214 : vector<8x128xf32>
    %cst_79 = arith.constant 1.000000e+00 : f32
    %216 = vector.broadcast %cst_79 : f32 to vector<8x128xf32>
    %217 = arith.subf %216, %208 : vector<8x128xf32>
    %218 = arith.mulf %217, %215 : vector<8x128xf32>
    %219 = arith.mulf %208, %187 : vector<8x128xf32>
    %220 = arith.addf %218, %219 : vector<8x128xf32>
    %c0_80 = arith.constant 0 : index
    %c0_81 = arith.constant 0 : index
    %c0_82 = arith.constant 0 : index
    %221 = vector.load %arg13[%c0_80, %c0_81, %c0_82] : memref<2x8x128xf32, #tpu.memory_space<vmem>>, vector<1x8x128xf32>
    %222 = vector.shape_cast %221 : vector<1x8x128xf32> to vector<8x128xf32>
    %223 = vector.shape_cast %220 : vector<8x128xf32> to vector<1x8x128xf32>
    tpu.vector_store %arg13[%c0_80, %c0_81, %c0_82], %223 {strides = array<i32>} : memref<2x8x128xf32, #tpu.memory_space<vmem>>, vector<1x8x128xf32>,
    %224 = arith.truncf %220 : vector<8x128xf32> to vector<8x128xbf16>
    %225 = arith.index_cast %c4_i32 : i32 to index
    %c0_83 = arith.constant 0 : index
    %c0_84 = arith.constant 0 : index
    %226 = vector.load %arg15[%225, %c0_83, %c0_84] : memref<8x8x128xbf16, #tpu.memory_space<vmem>>, vector<1x8x128xbf16>
    %227 = vector.shape_cast %226 : vector<1x8x128xbf16> to vector<8x128xbf16>
    %228 = vector.shape_cast %224 : vector<8x128xbf16> to vector<1x8x128xbf16>
    tpu.vector_store %arg15[%225, %c0_83, %c0_84], %228 {strides = array<i32>} : memref<8x8x128xbf16, #tpu.memory_space<vmem>>, vector<1x8x128xbf16>,
    %c5_i32 = arith.constant 5 : i32
    %c0_85 = arith.constant 0 : index
    %c0_86 = arith.constant 0 : index
    %c0_87 = arith.constant 0 : index
    %229 = vector.load %arg13[%c0_85, %c0_86, %c0_87] : memref<2x8x128xf32, #tpu.memory_space<vmem>>, vector<1x8x128xf32>
    %230 = vector.shape_cast %229 : vector<1x8x128xf32> to vector<8x128xf32>
    %231 = arith.index_cast %c5_i32 : i32 to index
    %c0_88 = arith.constant 0 : index
    %c0_89 = arith.constant 0 : index
    %232 = vector.load %arg14[%231, %c0_88, %c0_89] : memref<8x8x384xf32, #tpu.memory_space<vmem>>, vector<1x8x384xf32>
    %233 = vector.shape_cast %232 : vector<1x8x384xf32> to vector<8x384xf32>
    %234 = arith.truncf %230 : vector<8x128xf32> to vector<8x128xbf16>
    %cst_90 = arith.constant dense<0.000000e+00> : vector<8x384xf32>
    %235 = tpu.matmul %234, %12, %cst_90 {dimension_numbers = #tpu.dot_dimension_numbers<[1], [0], [0], [1], [0, 0, 1, 1], [], []>} : vector<8x128xbf16>, vector<128x384xbf16>, vector<8x384xf32> -> vector<8x384xf32>
    %236 = vector.extract_strided_slice %233 {offsets = [0, 0], sizes = [8, 128], strides = [1, 1]} : vector<8x384xf32> to vector<8x128xf32>
    %237 = vector.extract_strided_slice %235 {offsets = [0, 0], sizes = [8, 128], strides = [1, 1]} : vector<8x384xf32> to vector<8x128xf32>
    %238 = arith.addf %236, %237 : vector<8x128xf32>
    %239 = arith.negf %238 : vector<8x128xf32>
    %240 = math.exp %239 : vector<8x128xf32>
    %cst_91 = arith.constant 1.000000e+00 : f32
    %241 = vector.broadcast %cst_91 : f32 to vector<8x128xf32>
    %242 = arith.addf %241, %240 : vector<8x128xf32>
    %243 = arith.divf %241, %242 : vector<8x128xf32>
    %244 = vector.extract_strided_slice %233 {offsets = [0, 128], sizes = [8, 128], strides = [1, 1]} : vector<8x384xf32> to vector<8x128xf32>
    %245 = vector.extract_strided_slice %235 {offsets = [0, 128], sizes = [8, 128], strides = [1, 1]} : vector<8x384xf32> to vector<8x128xf32>
    %246 = arith.addf %244, %245 : vector<8x128xf32>
    %247 = arith.negf %246 : vector<8x128xf32>
    %248 = math.exp %247 : vector<8x128xf32>
    %cst_92 = arith.constant 1.000000e+00 : f32
    %249 = vector.broadcast %cst_92 : f32 to vector<8x128xf32>
    %250 = arith.addf %249, %248 : vector<8x128xf32>
    %251 = arith.divf %249, %250 : vector<8x128xf32>
    %252 = vector.extract_strided_slice %233 {offsets = [0, 256], sizes = [8, 128], strides = [1, 1]} : vector<8x384xf32> to vector<8x128xf32>
    %253 = vector.extract_strided_slice %235 {offsets = [0, 256], sizes = [8, 128], strides = [1, 1]} : vector<8x384xf32> to vector<8x128xf32>
    %254 = vector.broadcast %13 : vector<1x128xf32> to vector<8x128xf32>
    %255 = arith.addf %253, %254 : vector<8x128xf32>
    %256 = arith.mulf %243, %255 : vector<8x128xf32>
    %257 = arith.addf %252, %256 : vector<8x128xf32>
    %258 = math.tanh %257 : vector<8x128xf32>
    %cst_93 = arith.constant 1.000000e+00 : f32
    %259 = vector.broadcast %cst_93 : f32 to vector<8x128xf32>
    %260 = arith.subf %259, %251 : vector<8x128xf32>
    %261 = arith.mulf %260, %258 : vector<8x128xf32>
    %262 = arith.mulf %251, %230 : vector<8x128xf32>
    %263 = arith.addf %261, %262 : vector<8x128xf32>
    %c0_94 = arith.constant 0 : index
    %c0_95 = arith.constant 0 : index
    %c0_96 = arith.constant 0 : index
    %264 = vector.load %arg13[%c0_94, %c0_95, %c0_96] : memref<2x8x128xf32, #tpu.memory_space<vmem>>, vector<1x8x128xf32>
    %265 = vector.shape_cast %264 : vector<1x8x128xf32> to vector<8x128xf32>
    %266 = vector.shape_cast %263 : vector<8x128xf32> to vector<1x8x128xf32>
    tpu.vector_store %arg13[%c0_94, %c0_95, %c0_96], %266 {strides = array<i32>} : memref<2x8x128xf32, #tpu.memory_space<vmem>>, vector<1x8x128xf32>,
    %267 = arith.truncf %263 : vector<8x128xf32> to vector<8x128xbf16>
    %268 = arith.index_cast %c5_i32 : i32 to index
    %c0_97 = arith.constant 0 : index
    %c0_98 = arith.constant 0 : index
    %269 = vector.load %arg15[%268, %c0_97, %c0_98] : memref<8x8x128xbf16, #tpu.memory_space<vmem>>, vector<1x8x128xbf16>
    %270 = vector.shape_cast %269 : vector<1x8x128xbf16> to vector<8x128xbf16>
    %271 = vector.shape_cast %267 : vector<8x128xbf16> to vector<1x8x128xbf16>
    tpu.vector_store %arg15[%268, %c0_97, %c0_98], %271 {strides = array<i32>} : memref<8x8x128xbf16, #tpu.memory_space<vmem>>, vector<1x8x128xbf16>,
    %c6_i32 = arith.constant 6 : i32
    %c0_99 = arith.constant 0 : index
    %c0_100 = arith.constant 0 : index
    %c0_101 = arith.constant 0 : index
    %272 = vector.load %arg13[%c0_99, %c0_100, %c0_101] : memref<2x8x128xf32, #tpu.memory_space<vmem>>, vector<1x8x128xf32>
    %273 = vector.shape_cast %272 : vector<1x8x128xf32> to vector<8x128xf32>
    %274 = arith.index_cast %c6_i32 : i32 to index
    %c0_102 = arith.constant 0 : index
    %c0_103 = arith.constant 0 : index
    %275 = vector.load %arg14[%274, %c0_102, %c0_103] : memref<8x8x384xf32, #tpu.memory_space<vmem>>, vector<1x8x384xf32>
    %276 = vector.shape_cast %275 : vector<1x8x384xf32> to vector<8x384xf32>
    %277 = arith.truncf %273 : vector<8x128xf32> to vector<8x128xbf16>
    %cst_104 = arith.constant dense<0.000000e+00> : vector<8x384xf32>
    %278 = tpu.matmul %277, %12, %cst_104 {dimension_numbers = #tpu.dot_dimension_numbers<[1], [0], [0], [1], [0, 0, 1, 1], [], []>} : vector<8x128xbf16>, vector<128x384xbf16>, vector<8x384xf32> -> vector<8x384xf32>
    %279 = vector.extract_strided_slice %276 {offsets = [0, 0], sizes = [8, 128], strides = [1, 1]} : vector<8x384xf32> to vector<8x128xf32>
    %280 = vector.extract_strided_slice %278 {offsets = [0, 0], sizes = [8, 128], strides = [1, 1]} : vector<8x384xf32> to vector<8x128xf32>
    %281 = arith.addf %279, %280 : vector<8x128xf32>
    %282 = arith.negf %281 : vector<8x128xf32>
    %283 = math.exp %282 : vector<8x128xf32>
    %cst_105 = arith.constant 1.000000e+00 : f32
    %284 = vector.broadcast %cst_105 : f32 to vector<8x128xf32>
    %285 = arith.addf %284, %283 : vector<8x128xf32>
    %286 = arith.divf %284, %285 : vector<8x128xf32>
    %287 = vector.extract_strided_slice %276 {offsets = [0, 128], sizes = [8, 128], strides = [1, 1]} : vector<8x384xf32> to vector<8x128xf32>
    %288 = vector.extract_strided_slice %278 {offsets = [0, 128], sizes = [8, 128], strides = [1, 1]} : vector<8x384xf32> to vector<8x128xf32>
    %289 = arith.addf %287, %288 : vector<8x128xf32>
    %290 = arith.negf %289 : vector<8x128xf32>
    %291 = math.exp %290 : vector<8x128xf32>
    %cst_106 = arith.constant 1.000000e+00 : f32
    %292 = vector.broadcast %cst_106 : f32 to vector<8x128xf32>
    %293 = arith.addf %292, %291 : vector<8x128xf32>
    %294 = arith.divf %292, %293 : vector<8x128xf32>
    %295 = vector.extract_strided_slice %276 {offsets = [0, 256], sizes = [8, 128], strides = [1, 1]} : vector<8x384xf32> to vector<8x128xf32>
    %296 = vector.extract_strided_slice %278 {offsets = [0, 256], sizes = [8, 128], strides = [1, 1]} : vector<8x384xf32> to vector<8x128xf32>
    %297 = vector.broadcast %13 : vector<1x128xf32> to vector<8x128xf32>
    %298 = arith.addf %296, %297 : vector<8x128xf32>
    %299 = arith.mulf %286, %298 : vector<8x128xf32>
    %300 = arith.addf %295, %299 : vector<8x128xf32>
    %301 = math.tanh %300 : vector<8x128xf32>
    %cst_107 = arith.constant 1.000000e+00 : f32
    %302 = vector.broadcast %cst_107 : f32 to vector<8x128xf32>
    %303 = arith.subf %302, %294 : vector<8x128xf32>
    %304 = arith.mulf %303, %301 : vector<8x128xf32>
    %305 = arith.mulf %294, %273 : vector<8x128xf32>
    %306 = arith.addf %304, %305 : vector<8x128xf32>
    %c0_108 = arith.constant 0 : index
    %c0_109 = arith.constant 0 : index
    %c0_110 = arith.constant 0 : index
    %307 = vector.load %arg13[%c0_108, %c0_109, %c0_110] : memref<2x8x128xf32, #tpu.memory_space<vmem>>, vector<1x8x128xf32>
    %308 = vector.shape_cast %307 : vector<1x8x128xf32> to vector<8x128xf32>
    %309 = vector.shape_cast %306 : vector<8x128xf32> to vector<1x8x128xf32>
    tpu.vector_store %arg13[%c0_108, %c0_109, %c0_110], %309 {strides = array<i32>} : memref<2x8x128xf32, #tpu.memory_space<vmem>>, vector<1x8x128xf32>,
    %310 = arith.truncf %306 : vector<8x128xf32> to vector<8x128xbf16>
    %311 = arith.index_cast %c6_i32 : i32 to index
    %c0_111 = arith.constant 0 : index
    %c0_112 = arith.constant 0 : index
    %312 = vector.load %arg15[%311, %c0_111, %c0_112] : memref<8x8x128xbf16, #tpu.memory_space<vmem>>, vector<1x8x128xbf16>
    %313 = vector.shape_cast %312 : vector<1x8x128xbf16> to vector<8x128xbf16>
    %314 = vector.shape_cast %310 : vector<8x128xbf16> to vector<1x8x128xbf16>
    tpu.vector_store %arg15[%311, %c0_111, %c0_112], %314 {strides = array<i32>} : memref<8x8x128xbf16, #tpu.memory_space<vmem>>, vector<1x8x128xbf16>,
    %c7_i32 = arith.constant 7 : i32
    %c0_113 = arith.constant 0 : index
    %c0_114 = arith.constant 0 : index
    %c0_115 = arith.constant 0 : index
    %315 = vector.load %arg13[%c0_113, %c0_114, %c0_115] : memref<2x8x128xf32, #tpu.memory_space<vmem>>, vector<1x8x128xf32>
    %316 = vector.shape_cast %315 : vector<1x8x128xf32> to vector<8x128xf32>
    %317 = arith.index_cast %c7_i32 : i32 to index
    %c0_116 = arith.constant 0 : index
    %c0_117 = arith.constant 0 : index
    %318 = vector.load %arg14[%317, %c0_116, %c0_117] : memref<8x8x384xf32, #tpu.memory_space<vmem>>, vector<1x8x384xf32>
    %319 = vector.shape_cast %318 : vector<1x8x384xf32> to vector<8x384xf32>
    %320 = arith.truncf %316 : vector<8x128xf32> to vector<8x128xbf16>
    %cst_118 = arith.constant dense<0.000000e+00> : vector<8x384xf32>
    %321 = tpu.matmul %320, %12, %cst_118 {dimension_numbers = #tpu.dot_dimension_numbers<[1], [0], [0], [1], [0, 0, 1, 1], [], []>} : vector<8x128xbf16>, vector<128x384xbf16>, vector<8x384xf32> -> vector<8x384xf32>
    %322 = vector.extract_strided_slice %319 {offsets = [0, 0], sizes = [8, 128], strides = [1, 1]} : vector<8x384xf32> to vector<8x128xf32>
    %323 = vector.extract_strided_slice %321 {offsets = [0, 0], sizes = [8, 128], strides = [1, 1]} : vector<8x384xf32> to vector<8x128xf32>
    %324 = arith.addf %322, %323 : vector<8x128xf32>
    %325 = arith.negf %324 : vector<8x128xf32>
    %326 = math.exp %325 : vector<8x128xf32>
    %cst_119 = arith.constant 1.000000e+00 : f32
    %327 = vector.broadcast %cst_119 : f32 to vector<8x128xf32>
    %328 = arith.addf %327, %326 : vector<8x128xf32>
    %329 = arith.divf %327, %328 : vector<8x128xf32>
    %330 = vector.extract_strided_slice %319 {offsets = [0, 128], sizes = [8, 128], strides = [1, 1]} : vector<8x384xf32> to vector<8x128xf32>
    %331 = vector.extract_strided_slice %321 {offsets = [0, 128], sizes = [8, 128], strides = [1, 1]} : vector<8x384xf32> to vector<8x128xf32>
    %332 = arith.addf %330, %331 : vector<8x128xf32>
    %333 = arith.negf %332 : vector<8x128xf32>
    %334 = math.exp %333 : vector<8x128xf32>
    %cst_120 = arith.constant 1.000000e+00 : f32
    %335 = vector.broadcast %cst_120 : f32 to vector<8x128xf32>
    %336 = arith.addf %335, %334 : vector<8x128xf32>
    %337 = arith.divf %335, %336 : vector<8x128xf32>
    %338 = vector.extract_strided_slice %319 {offsets = [0, 256], sizes = [8, 128], strides = [1, 1]} : vector<8x384xf32> to vector<8x128xf32>
    %339 = vector.extract_strided_slice %321 {offsets = [0, 256], sizes = [8, 128], strides = [1, 1]} : vector<8x384xf32> to vector<8x128xf32>
    %340 = vector.broadcast %13 : vector<1x128xf32> to vector<8x128xf32>
    %341 = arith.addf %339, %340 : vector<8x128xf32>
    %342 = arith.mulf %329, %341 : vector<8x128xf32>
    %343 = arith.addf %338, %342 : vector<8x128xf32>
    %344 = math.tanh %343 : vector<8x128xf32>
    %cst_121 = arith.constant 1.000000e+00 : f32
    %345 = vector.broadcast %cst_121 : f32 to vector<8x128xf32>
    %346 = arith.subf %345, %337 : vector<8x128xf32>
    %347 = arith.mulf %346, %344 : vector<8x128xf32>
    %348 = arith.mulf %337, %316 : vector<8x128xf32>
    %349 = arith.addf %347, %348 : vector<8x128xf32>
    %c0_122 = arith.constant 0 : index
    %c0_123 = arith.constant 0 : index
    %c0_124 = arith.constant 0 : index
    %350 = vector.load %arg13[%c0_122, %c0_123, %c0_124] : memref<2x8x128xf32, #tpu.memory_space<vmem>>, vector<1x8x128xf32>
    %351 = vector.shape_cast %350 : vector<1x8x128xf32> to vector<8x128xf32>
    %352 = vector.shape_cast %349 : vector<8x128xf32> to vector<1x8x128xf32>
    tpu.vector_store %arg13[%c0_122, %c0_123, %c0_124], %352 {strides = array<i32>} : memref<2x8x128xf32, #tpu.memory_space<vmem>>, vector<1x8x128xf32>,
    %353 = arith.truncf %349 : vector<8x128xf32> to vector<8x128xbf16>
    %354 = arith.index_cast %c7_i32 : i32 to index
    %c0_125 = arith.constant 0 : index
    %c0_126 = arith.constant 0 : index
    %355 = vector.load %arg15[%354, %c0_125, %c0_126] : memref<8x8x128xbf16, #tpu.memory_space<vmem>>, vector<1x8x128xbf16>
    %356 = vector.shape_cast %355 : vector<1x8x128xbf16> to vector<8x128xbf16>
    %357 = vector.shape_cast %353 : vector<8x128xbf16> to vector<1x8x128xbf16>
    tpu.vector_store %arg15[%354, %c0_125, %c0_126], %357 {strides = array<i32>} : memref<8x8x128xbf16, #tpu.memory_space<vmem>>, vector<1x8x128xbf16>,
    %c8_i32 = arith.constant 8 : i32
    %c0_127 = arith.constant 0 : index
    %c0_128 = arith.constant 0 : index
    %c0_129 = arith.constant 0 : index
    %358 = vector.load %arg15[%c0_127, %c0_128, %c0_129] : memref<8x8x128xbf16, #tpu.memory_space<vmem>>, vector<8x8x128xbf16>
    %359 = vector.shape_cast %358 : vector<8x8x128xbf16> to vector<64x128xbf16>
    %c0_130 = arith.constant 0 : index
    %c0_131 = arith.constant 0 : index
    %360 = vector.load %arg6[%c0_130, %c0_131] : memref<128x384xbf16, #tpu.memory_space<vmem>>, vector<128x384xbf16>
    %cst_132 = arith.constant dense<0.000000e+00> : vector<64x384xf32>
    %361 = tpu.matmul %359, %360, %cst_132 {dimension_numbers = #tpu.dot_dimension_numbers<[1], [0], [0], [1], [0, 0, 1, 1], [], []>} : vector<64x128xbf16>, vector<128x384xbf16>, vector<64x384xf32> -> vector<64x384xf32>
    %c0_133 = arith.constant 0 : index
    %c0_134 = arith.constant 0 : index
    %362 = vector.load %arg8[%c0_133, %c0_134] : memref<1x384xf32, #tpu.memory_space<vmem>>, vector<1x384xf32>
    %363 = vector.broadcast %362 : vector<1x384xf32> to vector<64x384xf32>
    %364 = arith.addf %361, %363 : vector<64x384xf32>
    %365 = vector.shape_cast %364 : vector<64x384xf32> to vector<8x8x384xf32>
    %c0_135 = arith.constant 0 : index
    %c0_136 = arith.constant 0 : index
    %c0_137 = arith.constant 0 : index
    %366 = vector.load %arg14[%c0_135, %c0_136, %c0_137] : memref<8x8x384xf32, #tpu.memory_space<vmem>>, vector<8x8x384xf32>
    tpu.vector_store %arg14[%c0_135, %c0_136, %c0_137], %365 {strides = array<i32>} : memref<8x8x384xf32, #tpu.memory_space<vmem>>, vector<8x8x384xf32>,
    %c0_138 = arith.constant 0 : index
    %c0_139 = arith.constant 0 : index
    %367 = vector.load %arg7[%c0_138, %c0_139] : memref<128x384xbf16, #tpu.memory_space<vmem>>, vector<128x384xbf16>
    %c0_140 = arith.constant 0 : index
    %c0_141 = arith.constant 0 : index
    %368 = vector.load %arg9[%c0_140, %c0_141] : memref<1x128xf32, #tpu.memory_space<vmem>>, vector<1x128xf32>
    %c0_i32_142 = arith.constant 0 : i32
    %c1 = arith.constant 1 : index
    %c0_143 = arith.constant 0 : index
    %c0_144 = arith.constant 0 : index
    %369 = vector.load %arg13[%c1, %c0_143, %c0_144] : memref<2x8x128xf32, #tpu.memory_space<vmem>>, vector<1x8x128xf32>
    %370 = vector.shape_cast %369 : vector<1x8x128xf32> to vector<8x128xf32>
    %371 = arith.index_cast %c0_i32_142 : i32 to index
    %c0_145 = arith.constant 0 : index
    %c0_146 = arith.constant 0 : index
    %372 = vector.load %arg14[%371, %c0_145, %c0_146] : memref<8x8x384xf32, #tpu.memory_space<vmem>>, vector<1x8x384xf32>
    %373 = vector.shape_cast %372 : vector<1x8x384xf32> to vector<8x384xf32>
    %374 = arith.truncf %370 : vector<8x128xf32> to vector<8x128xbf16>
    %cst_147 = arith.constant dense<0.000000e+00> : vector<8x384xf32>
    %375 = tpu.matmul %374, %367, %cst_147 {dimension_numbers = #tpu.dot_dimension_numbers<[1], [0], [0], [1], [0, 0, 1, 1], [], []>} : vector<8x128xbf16>, vector<128x384xbf16>, vector<8x384xf32> -> vector<8x384xf32>
    %376 = vector.extract_strided_slice %373 {offsets = [0, 0], sizes = [8, 128], strides = [1, 1]} : vector<8x384xf32> to vector<8x128xf32>
    %377 = vector.extract_strided_slice %375 {offsets = [0, 0], sizes = [8, 128], strides = [1, 1]} : vector<8x384xf32> to vector<8x128xf32>
    %378 = arith.addf %376, %377 : vector<8x128xf32>
    %379 = arith.negf %378 : vector<8x128xf32>
    %380 = math.exp %379 : vector<8x128xf32>
    %cst_148 = arith.constant 1.000000e+00 : f32
    %381 = vector.broadcast %cst_148 : f32 to vector<8x128xf32>
    %382 = arith.addf %381, %380 : vector<8x128xf32>
    %383 = arith.divf %381, %382 : vector<8x128xf32>
    %384 = vector.extract_strided_slice %373 {offsets = [0, 128], sizes = [8, 128], strides = [1, 1]} : vector<8x384xf32> to vector<8x128xf32>
    %385 = vector.extract_strided_slice %375 {offsets = [0, 128], sizes = [8, 128], strides = [1, 1]} : vector<8x384xf32> to vector<8x128xf32>
    %386 = arith.addf %384, %385 : vector<8x128xf32>
    %387 = arith.negf %386 : vector<8x128xf32>
    %388 = math.exp %387 : vector<8x128xf32>
    %cst_149 = arith.constant 1.000000e+00 : f32
    %389 = vector.broadcast %cst_149 : f32 to vector<8x128xf32>
    %390 = arith.addf %389, %388 : vector<8x128xf32>
    %391 = arith.divf %389, %390 : vector<8x128xf32>
    %392 = vector.extract_strided_slice %373 {offsets = [0, 256], sizes = [8, 128], strides = [1, 1]} : vector<8x384xf32> to vector<8x128xf32>
    %393 = vector.extract_strided_slice %375 {offsets = [0, 256], sizes = [8, 128], strides = [1, 1]} : vector<8x384xf32> to vector<8x128xf32>
    %394 = vector.broadcast %368 : vector<1x128xf32> to vector<8x128xf32>
    %395 = arith.addf %393, %394 : vector<8x128xf32>
    %396 = arith.mulf %383, %395 : vector<8x128xf32>
    %397 = arith.addf %392, %396 : vector<8x128xf32>
    %398 = math.tanh %397 : vector<8x128xf32>
    %cst_150 = arith.constant 1.000000e+00 : f32
    %399 = vector.broadcast %cst_150 : f32 to vector<8x128xf32>
    %400 = arith.subf %399, %391 : vector<8x128xf32>
    %401 = arith.mulf %400, %398 : vector<8x128xf32>
    %402 = arith.mulf %391, %370 : vector<8x128xf32>
    %403 = arith.addf %401, %402 : vector<8x128xf32>
    %c1_151 = arith.constant 1 : index
    %c0_152 = arith.constant 0 : index
    %c0_153 = arith.constant 0 : index
    %404 = vector.load %arg13[%c1_151, %c0_152, %c0_153] : memref<2x8x128xf32, #tpu.memory_space<vmem>>, vector<1x8x128xf32>
    %405 = vector.shape_cast %404 : vector<1x8x128xf32> to vector<8x128xf32>
    %406 = vector.shape_cast %403 : vector<8x128xf32> to vector<1x8x128xf32>
    tpu.vector_store %arg13[%c1_151, %c0_152, %c0_153], %406 {strides = array<i32>} : memref<2x8x128xf32, #tpu.memory_space<vmem>>, vector<1x8x128xf32>,
    %c1_i32_154 = arith.constant 1 : i32
    %c1_155 = arith.constant 1 : index
    %c0_156 = arith.constant 0 : index
    %c0_157 = arith.constant 0 : index
    %407 = vector.load %arg13[%c1_155, %c0_156, %c0_157] : memref<2x8x128xf32, #tpu.memory_space<vmem>>, vector<1x8x128xf32>
    %408 = vector.shape_cast %407 : vector<1x8x128xf32> to vector<8x128xf32>
    %409 = arith.index_cast %c1_i32_154 : i32 to index
    %c0_158 = arith.constant 0 : index
    %c0_159 = arith.constant 0 : index
    %410 = vector.load %arg14[%409, %c0_158, %c0_159] : memref<8x8x384xf32, #tpu.memory_space<vmem>>, vector<1x8x384xf32>
    %411 = vector.shape_cast %410 : vector<1x8x384xf32> to vector<8x384xf32>
    %412 = arith.truncf %408 : vector<8x128xf32> to vector<8x128xbf16>
    %cst_160 = arith.constant dense<0.000000e+00> : vector<8x384xf32>
    %413 = tpu.matmul %412, %367, %cst_160 {dimension_numbers = #tpu.dot_dimension_numbers<[1], [0], [0], [1], [0, 0, 1, 1], [], []>} : vector<8x128xbf16>, vector<128x384xbf16>, vector<8x384xf32> -> vector<8x384xf32>
    %414 = vector.extract_strided_slice %411 {offsets = [0, 0], sizes = [8, 128], strides = [1, 1]} : vector<8x384xf32> to vector<8x128xf32>
    %415 = vector.extract_strided_slice %413 {offsets = [0, 0], sizes = [8, 128], strides = [1, 1]} : vector<8x384xf32> to vector<8x128xf32>
    %416 = arith.addf %414, %415 : vector<8x128xf32>
    %417 = arith.negf %416 : vector<8x128xf32>
    %418 = math.exp %417 : vector<8x128xf32>
    %cst_161 = arith.constant 1.000000e+00 : f32
    %419 = vector.broadcast %cst_161 : f32 to vector<8x128xf32>
    %420 = arith.addf %419, %418 : vector<8x128xf32>
    %421 = arith.divf %419, %420 : vector<8x128xf32>
    %422 = vector.extract_strided_slice %411 {offsets = [0, 128], sizes = [8, 128], strides = [1, 1]} : vector<8x384xf32> to vector<8x128xf32>
    %423 = vector.extract_strided_slice %413 {offsets = [0, 128], sizes = [8, 128], strides = [1, 1]} : vector<8x384xf32> to vector<8x128xf32>
    %424 = arith.addf %422, %423 : vector<8x128xf32>
    %425 = arith.negf %424 : vector<8x128xf32>
    %426 = math.exp %425 : vector<8x128xf32>
    %cst_162 = arith.constant 1.000000e+00 : f32
    %427 = vector.broadcast %cst_162 : f32 to vector<8x128xf32>
    %428 = arith.addf %427, %426 : vector<8x128xf32>
    %429 = arith.divf %427, %428 : vector<8x128xf32>
    %430 = vector.extract_strided_slice %411 {offsets = [0, 256], sizes = [8, 128], strides = [1, 1]} : vector<8x384xf32> to vector<8x128xf32>
    %431 = vector.extract_strided_slice %413 {offsets = [0, 256], sizes = [8, 128], strides = [1, 1]} : vector<8x384xf32> to vector<8x128xf32>
    %432 = vector.broadcast %368 : vector<1x128xf32> to vector<8x128xf32>
    %433 = arith.addf %431, %432 : vector<8x128xf32>
    %434 = arith.mulf %421, %433 : vector<8x128xf32>
    %435 = arith.addf %430, %434 : vector<8x128xf32>
    %436 = math.tanh %435 : vector<8x128xf32>
    %cst_163 = arith.constant 1.000000e+00 : f32
    %437 = vector.broadcast %cst_163 : f32 to vector<8x128xf32>
    %438 = arith.subf %437, %429 : vector<8x128xf32>
    %439 = arith.mulf %438, %436 : vector<8x128xf32>
    %440 = arith.mulf %429, %408 : vector<8x128xf32>
    %441 = arith.addf %439, %440 : vector<8x128xf32>
    %c1_164 = arith.constant 1 : index
    %c0_165 = arith.constant 0 : index
    %c0_166 = arith.constant 0 : index
    %442 = vector.load %arg13[%c1_164, %c0_165, %c0_166] : memref<2x8x128xf32, #tpu.memory_space<vmem>>, vector<1x8x128xf32>
    %443 = vector.shape_cast %442 : vector<1x8x128xf32> to vector<8x128xf32>
    %444 = vector.shape_cast %441 : vector<8x128xf32> to vector<1x8x128xf32>
    tpu.vector_store %arg13[%c1_164, %c0_165, %c0_166], %444 {strides = array<i32>} : memref<2x8x128xf32, #tpu.memory_space<vmem>>, vector<1x8x128xf32>,
    %c2_i32_167 = arith.constant 2 : i32
    %c1_168 = arith.constant 1 : index
    %c0_169 = arith.constant 0 : index
    %c0_170 = arith.constant 0 : index
    %445 = vector.load %arg13[%c1_168, %c0_169, %c0_170] : memref<2x8x128xf32, #tpu.memory_space<vmem>>, vector<1x8x128xf32>
    %446 = vector.shape_cast %445 : vector<1x8x128xf32> to vector<8x128xf32>
    %447 = arith.index_cast %c2_i32_167 : i32 to index
    %c0_171 = arith.constant 0 : index
    %c0_172 = arith.constant 0 : index
    %448 = vector.load %arg14[%447, %c0_171, %c0_172] : memref<8x8x384xf32, #tpu.memory_space<vmem>>, vector<1x8x384xf32>
    %449 = vector.shape_cast %448 : vector<1x8x384xf32> to vector<8x384xf32>
    %450 = arith.truncf %446 : vector<8x128xf32> to vector<8x128xbf16>
    %cst_173 = arith.constant dense<0.000000e+00> : vector<8x384xf32>
    %451 = tpu.matmul %450, %367, %cst_173 {dimension_numbers = #tpu.dot_dimension_numbers<[1], [0], [0], [1], [0, 0, 1, 1], [], []>} : vector<8x128xbf16>, vector<128x384xbf16>, vector<8x384xf32> -> vector<8x384xf32>
    %452 = vector.extract_strided_slice %449 {offsets = [0, 0], sizes = [8, 128], strides = [1, 1]} : vector<8x384xf32> to vector<8x128xf32>
    %453 = vector.extract_strided_slice %451 {offsets = [0, 0], sizes = [8, 128], strides = [1, 1]} : vector<8x384xf32> to vector<8x128xf32>
    %454 = arith.addf %452, %453 : vector<8x128xf32>
    %455 = arith.negf %454 : vector<8x128xf32>
    %456 = math.exp %455 : vector<8x128xf32>
    %cst_174 = arith.constant 1.000000e+00 : f32
    %457 = vector.broadcast %cst_174 : f32 to vector<8x128xf32>
    %458 = arith.addf %457, %456 : vector<8x128xf32>
    %459 = arith.divf %457, %458 : vector<8x128xf32>
    %460 = vector.extract_strided_slice %449 {offsets = [0, 128], sizes = [8, 128], strides = [1, 1]} : vector<8x384xf32> to vector<8x128xf32>
    %461 = vector.extract_strided_slice %451 {offsets = [0, 128], sizes = [8, 128], strides = [1, 1]} : vector<8x384xf32> to vector<8x128xf32>
    %462 = arith.addf %460, %461 : vector<8x128xf32>
    %463 = arith.negf %462 : vector<8x128xf32>
    %464 = math.exp %463 : vector<8x128xf32>
    %cst_175 = arith.constant 1.000000e+00 : f32
    %465 = vector.broadcast %cst_175 : f32 to vector<8x128xf32>
    %466 = arith.addf %465, %464 : vector<8x128xf32>
    %467 = arith.divf %465, %466 : vector<8x128xf32>
    %468 = vector.extract_strided_slice %449 {offsets = [0, 256], sizes = [8, 128], strides = [1, 1]} : vector<8x384xf32> to vector<8x128xf32>
    %469 = vector.extract_strided_slice %451 {offsets = [0, 256], sizes = [8, 128], strides = [1, 1]} : vector<8x384xf32> to vector<8x128xf32>
    %470 = vector.broadcast %368 : vector<1x128xf32> to vector<8x128xf32>
    %471 = arith.addf %469, %470 : vector<8x128xf32>
    %472 = arith.mulf %459, %471 : vector<8x128xf32>
    %473 = arith.addf %468, %472 : vector<8x128xf32>
    %474 = math.tanh %473 : vector<8x128xf32>
    %cst_176 = arith.constant 1.000000e+00 : f32
    %475 = vector.broadcast %cst_176 : f32 to vector<8x128xf32>
    %476 = arith.subf %475, %467 : vector<8x128xf32>
    %477 = arith.mulf %476, %474 : vector<8x128xf32>
    %478 = arith.mulf %467, %446 : vector<8x128xf32>
    %479 = arith.addf %477, %478 : vector<8x128xf32>
    %c1_177 = arith.constant 1 : index
    %c0_178 = arith.constant 0 : index
    %c0_179 = arith.constant 0 : index
    %480 = vector.load %arg13[%c1_177, %c0_178, %c0_179] : memref<2x8x128xf32, #tpu.memory_space<vmem>>, vector<1x8x128xf32>
    %481 = vector.shape_cast %480 : vector<1x8x128xf32> to vector<8x128xf32>
    %482 = vector.shape_cast %479 : vector<8x128xf32> to vector<1x8x128xf32>
    tpu.vector_store %arg13[%c1_177, %c0_178, %c0_179], %482 {strides = array<i32>} : memref<2x8x128xf32, #tpu.memory_space<vmem>>, vector<1x8x128xf32>,
    %c3_i32_180 = arith.constant 3 : i32
    %c1_181 = arith.constant 1 : index
    %c0_182 = arith.constant 0 : index
    %c0_183 = arith.constant 0 : index
    %483 = vector.load %arg13[%c1_181, %c0_182, %c0_183] : memref<2x8x128xf32, #tpu.memory_space<vmem>>, vector<1x8x128xf32>
    %484 = vector.shape_cast %483 : vector<1x8x128xf32> to vector<8x128xf32>
    %485 = arith.index_cast %c3_i32_180 : i32 to index
    %c0_184 = arith.constant 0 : index
    %c0_185 = arith.constant 0 : index
    %486 = vector.load %arg14[%485, %c0_184, %c0_185] : memref<8x8x384xf32, #tpu.memory_space<vmem>>, vector<1x8x384xf32>
    %487 = vector.shape_cast %486 : vector<1x8x384xf32> to vector<8x384xf32>
    %488 = arith.truncf %484 : vector<8x128xf32> to vector<8x128xbf16>
    %cst_186 = arith.constant dense<0.000000e+00> : vector<8x384xf32>
    %489 = tpu.matmul %488, %367, %cst_186 {dimension_numbers = #tpu.dot_dimension_numbers<[1], [0], [0], [1], [0, 0, 1, 1], [], []>} : vector<8x128xbf16>, vector<128x384xbf16>, vector<8x384xf32> -> vector<8x384xf32>
    %490 = vector.extract_strided_slice %487 {offsets = [0, 0], sizes = [8, 128], strides = [1, 1]} : vector<8x384xf32> to vector<8x128xf32>
    %491 = vector.extract_strided_slice %489 {offsets = [0, 0], sizes = [8, 128], strides = [1, 1]} : vector<8x384xf32> to vector<8x128xf32>
    %492 = arith.addf %490, %491 : vector<8x128xf32>
    %493 = arith.negf %492 : vector<8x128xf32>
    %494 = math.exp %493 : vector<8x128xf32>
    %cst_187 = arith.constant 1.000000e+00 : f32
    %495 = vector.broadcast %cst_187 : f32 to vector<8x128xf32>
    %496 = arith.addf %495, %494 : vector<8x128xf32>
    %497 = arith.divf %495, %496 : vector<8x128xf32>
    %498 = vector.extract_strided_slice %487 {offsets = [0, 128], sizes = [8, 128], strides = [1, 1]} : vector<8x384xf32> to vector<8x128xf32>
    %499 = vector.extract_strided_slice %489 {offsets = [0, 128], sizes = [8, 128], strides = [1, 1]} : vector<8x384xf32> to vector<8x128xf32>
    %500 = arith.addf %498, %499 : vector<8x128xf32>
    %501 = arith.negf %500 : vector<8x128xf32>
    %502 = math.exp %501 : vector<8x128xf32>
    %cst_188 = arith.constant 1.000000e+00 : f32
    %503 = vector.broadcast %cst_188 : f32 to vector<8x128xf32>
    %504 = arith.addf %503, %502 : vector<8x128xf32>
    %505 = arith.divf %503, %504 : vector<8x128xf32>
    %506 = vector.extract_strided_slice %487 {offsets = [0, 256], sizes = [8, 128], strides = [1, 1]} : vector<8x384xf32> to vector<8x128xf32>
    %507 = vector.extract_strided_slice %489 {offsets = [0, 256], sizes = [8, 128], strides = [1, 1]} : vector<8x384xf32> to vector<8x128xf32>
    %508 = vector.broadcast %368 : vector<1x128xf32> to vector<8x128xf32>
    %509 = arith.addf %507, %508 : vector<8x128xf32>
    %510 = arith.mulf %497, %509 : vector<8x128xf32>
    %511 = arith.addf %506, %510 : vector<8x128xf32>
    %512 = math.tanh %511 : vector<8x128xf32>
    %cst_189 = arith.constant 1.000000e+00 : f32
    %513 = vector.broadcast %cst_189 : f32 to vector<8x128xf32>
    %514 = arith.subf %513, %505 : vector<8x128xf32>
    %515 = arith.mulf %514, %512 : vector<8x128xf32>
    %516 = arith.mulf %505, %484 : vector<8x128xf32>
    %517 = arith.addf %515, %516 : vector<8x128xf32>
    %c1_190 = arith.constant 1 : index
    %c0_191 = arith.constant 0 : index
    %c0_192 = arith.constant 0 : index
    %518 = vector.load %arg13[%c1_190, %c0_191, %c0_192] : memref<2x8x128xf32, #tpu.memory_space<vmem>>, vector<1x8x128xf32>
    %519 = vector.shape_cast %518 : vector<1x8x128xf32> to vector<8x128xf32>
    %520 = vector.shape_cast %517 : vector<8x128xf32> to vector<1x8x128xf32>
    tpu.vector_store %arg13[%c1_190, %c0_191, %c0_192], %520 {strides = array<i32>} : memref<2x8x128xf32, #tpu.memory_space<vmem>>, vector<1x8x128xf32>,
    %c4_i32_193 = arith.constant 4 : i32
    %c1_194 = arith.constant 1 : index
    %c0_195 = arith.constant 0 : index
    %c0_196 = arith.constant 0 : index
    %521 = vector.load %arg13[%c1_194, %c0_195, %c0_196] : memref<2x8x128xf32, #tpu.memory_space<vmem>>, vector<1x8x128xf32>
    %522 = vector.shape_cast %521 : vector<1x8x128xf32> to vector<8x128xf32>
    %523 = arith.index_cast %c4_i32_193 : i32 to index
    %c0_197 = arith.constant 0 : index
    %c0_198 = arith.constant 0 : index
    %524 = vector.load %arg14[%523, %c0_197, %c0_198] : memref<8x8x384xf32, #tpu.memory_space<vmem>>, vector<1x8x384xf32>
    %525 = vector.shape_cast %524 : vector<1x8x384xf32> to vector<8x384xf32>
    %526 = arith.truncf %522 : vector<8x128xf32> to vector<8x128xbf16>
    %cst_199 = arith.constant dense<0.000000e+00> : vector<8x384xf32>
    %527 = tpu.matmul %526, %367, %cst_199 {dimension_numbers = #tpu.dot_dimension_numbers<[1], [0], [0], [1], [0, 0, 1, 1], [], []>} : vector<8x128xbf16>, vector<128x384xbf16>, vector<8x384xf32> -> vector<8x384xf32>
    %528 = vector.extract_strided_slice %525 {offsets = [0, 0], sizes = [8, 128], strides = [1, 1]} : vector<8x384xf32> to vector<8x128xf32>
    %529 = vector.extract_strided_slice %527 {offsets = [0, 0], sizes = [8, 128], strides = [1, 1]} : vector<8x384xf32> to vector<8x128xf32>
    %530 = arith.addf %528, %529 : vector<8x128xf32>
    %531 = arith.negf %530 : vector<8x128xf32>
    %532 = math.exp %531 : vector<8x128xf32>
    %cst_200 = arith.constant 1.000000e+00 : f32
    %533 = vector.broadcast %cst_200 : f32 to vector<8x128xf32>
    %534 = arith.addf %533, %532 : vector<8x128xf32>
    %535 = arith.divf %533, %534 : vector<8x128xf32>
    %536 = vector.extract_strided_slice %525 {offsets = [0, 128], sizes = [8, 128], strides = [1, 1]} : vector<8x384xf32> to vector<8x128xf32>
    %537 = vector.extract_strided_slice %527 {offsets = [0, 128], sizes = [8, 128], strides = [1, 1]} : vector<8x384xf32> to vector<8x128xf32>
    %538 = arith.addf %536, %537 : vector<8x128xf32>
    %539 = arith.negf %538 : vector<8x128xf32>
    %540 = math.exp %539 : vector<8x128xf32>
    %cst_201 = arith.constant 1.000000e+00 : f32
    %541 = vector.broadcast %cst_201 : f32 to vector<8x128xf32>
    %542 = arith.addf %541, %540 : vector<8x128xf32>
    %543 = arith.divf %541, %542 : vector<8x128xf32>
    %544 = vector.extract_strided_slice %525 {offsets = [0, 256], sizes = [8, 128], strides = [1, 1]} : vector<8x384xf32> to vector<8x128xf32>
    %545 = vector.extract_strided_slice %527 {offsets = [0, 256], sizes = [8, 128], strides = [1, 1]} : vector<8x384xf32> to vector<8x128xf32>
    %546 = vector.broadcast %368 : vector<1x128xf32> to vector<8x128xf32>
    %547 = arith.addf %545, %546 : vector<8x128xf32>
    %548 = arith.mulf %535, %547 : vector<8x128xf32>
    %549 = arith.addf %544, %548 : vector<8x128xf32>
    %550 = math.tanh %549 : vector<8x128xf32>
    %cst_202 = arith.constant 1.000000e+00 : f32
    %551 = vector.broadcast %cst_202 : f32 to vector<8x128xf32>
    %552 = arith.subf %551, %543 : vector<8x128xf32>
    %553 = arith.mulf %552, %550 : vector<8x128xf32>
    %554 = arith.mulf %543, %522 : vector<8x128xf32>
    %555 = arith.addf %553, %554 : vector<8x128xf32>
    %c1_203 = arith.constant 1 : index
    %c0_204 = arith.constant 0 : index
    %c0_205 = arith.constant 0 : index
    %556 = vector.load %arg13[%c1_203, %c0_204, %c0_205] : memref<2x8x128xf32, #tpu.memory_space<vmem>>, vector<1x8x128xf32>
    %557 = vector.shape_cast %556 : vector<1x8x128xf32> to vector<8x128xf32>
    %558 = vector.shape_cast %555 : vector<8x128xf32> to vector<1x8x128xf32>
    tpu.vector_store %arg13[%c1_203, %c0_204, %c0_205], %558 {strides = array<i32>} : memref<2x8x128xf32, #tpu.memory_space<vmem>>, vector<1x8x128xf32>,
    %c5_i32_206 = arith.constant 5 : i32
    %c1_207 = arith.constant 1 : index
    %c0_208 = arith.constant 0 : index
    %c0_209 = arith.constant 0 : index
    %559 = vector.load %arg13[%c1_207, %c0_208, %c0_209] : memref<2x8x128xf32, #tpu.memory_space<vmem>>, vector<1x8x128xf32>
    %560 = vector.shape_cast %559 : vector<1x8x128xf32> to vector<8x128xf32>
    %561 = arith.index_cast %c5_i32_206 : i32 to index
    %c0_210 = arith.constant 0 : index
    %c0_211 = arith.constant 0 : index
    %562 = vector.load %arg14[%561, %c0_210, %c0_211] : memref<8x8x384xf32, #tpu.memory_space<vmem>>, vector<1x8x384xf32>
    %563 = vector.shape_cast %562 : vector<1x8x384xf32> to vector<8x384xf32>
    %564 = arith.truncf %560 : vector<8x128xf32> to vector<8x128xbf16>
    %cst_212 = arith.constant dense<0.000000e+00> : vector<8x384xf32>
    %565 = tpu.matmul %564, %367, %cst_212 {dimension_numbers = #tpu.dot_dimension_numbers<[1], [0], [0], [1], [0, 0, 1, 1], [], []>} : vector<8x128xbf16>, vector<128x384xbf16>, vector<8x384xf32> -> vector<8x384xf32>
    %566 = vector.extract_strided_slice %563 {offsets = [0, 0], sizes = [8, 128], strides = [1, 1]} : vector<8x384xf32> to vector<8x128xf32>
    %567 = vector.extract_strided_slice %565 {offsets = [0, 0], sizes = [8, 128], strides = [1, 1]} : vector<8x384xf32> to vector<8x128xf32>
    %568 = arith.addf %566, %567 : vector<8x128xf32>
    %569 = arith.negf %568 : vector<8x128xf32>
    %570 = math.exp %569 : vector<8x128xf32>
    %cst_213 = arith.constant 1.000000e+00 : f32
    %571 = vector.broadcast %cst_213 : f32 to vector<8x128xf32>
    %572 = arith.addf %571, %570 : vector<8x128xf32>
    %573 = arith.divf %571, %572 : vector<8x128xf32>
    %574 = vector.extract_strided_slice %563 {offsets = [0, 128], sizes = [8, 128], strides = [1, 1]} : vector<8x384xf32> to vector<8x128xf32>
    %575 = vector.extract_strided_slice %565 {offsets = [0, 128], sizes = [8, 128], strides = [1, 1]} : vector<8x384xf32> to vector<8x128xf32>
    %576 = arith.addf %574, %575 : vector<8x128xf32>
    %577 = arith.negf %576 : vector<8x128xf32>
    %578 = math.exp %577 : vector<8x128xf32>
    %cst_214 = arith.constant 1.000000e+00 : f32
    %579 = vector.broadcast %cst_214 : f32 to vector<8x128xf32>
    %580 = arith.addf %579, %578 : vector<8x128xf32>
    %581 = arith.divf %579, %580 : vector<8x128xf32>
    %582 = vector.extract_strided_slice %563 {offsets = [0, 256], sizes = [8, 128], strides = [1, 1]} : vector<8x384xf32> to vector<8x128xf32>
    %583 = vector.extract_strided_slice %565 {offsets = [0, 256], sizes = [8, 128], strides = [1, 1]} : vector<8x384xf32> to vector<8x128xf32>
    %584 = vector.broadcast %368 : vector<1x128xf32> to vector<8x128xf32>
    %585 = arith.addf %583, %584 : vector<8x128xf32>
    %586 = arith.mulf %573, %585 : vector<8x128xf32>
    %587 = arith.addf %582, %586 : vector<8x128xf32>
    %588 = math.tanh %587 : vector<8x128xf32>
    %cst_215 = arith.constant 1.000000e+00 : f32
    %589 = vector.broadcast %cst_215 : f32 to vector<8x128xf32>
    %590 = arith.subf %589, %581 : vector<8x128xf32>
    %591 = arith.mulf %590, %588 : vector<8x128xf32>
    %592 = arith.mulf %581, %560 : vector<8x128xf32>
    %593 = arith.addf %591, %592 : vector<8x128xf32>
    %c1_216 = arith.constant 1 : index
    %c0_217 = arith.constant 0 : index
    %c0_218 = arith.constant 0 : index
    %594 = vector.load %arg13[%c1_216, %c0_217, %c0_218] : memref<2x8x128xf32, #tpu.memory_space<vmem>>, vector<1x8x128xf32>
    %595 = vector.shape_cast %594 : vector<1x8x128xf32> to vector<8x128xf32>
    %596 = vector.shape_cast %593 : vector<8x128xf32> to vector<1x8x128xf32>
    tpu.vector_store %arg13[%c1_216, %c0_217, %c0_218], %596 {strides = array<i32>} : memref<2x8x128xf32, #tpu.memory_space<vmem>>, vector<1x8x128xf32>,
    %c6_i32_219 = arith.constant 6 : i32
    %c1_220 = arith.constant 1 : index
    %c0_221 = arith.constant 0 : index
    %c0_222 = arith.constant 0 : index
    %597 = vector.load %arg13[%c1_220, %c0_221, %c0_222] : memref<2x8x128xf32, #tpu.memory_space<vmem>>, vector<1x8x128xf32>
    %598 = vector.shape_cast %597 : vector<1x8x128xf32> to vector<8x128xf32>
    %599 = arith.index_cast %c6_i32_219 : i32 to index
    %c0_223 = arith.constant 0 : index
    %c0_224 = arith.constant 0 : index
    %600 = vector.load %arg14[%599, %c0_223, %c0_224] : memref<8x8x384xf32, #tpu.memory_space<vmem>>, vector<1x8x384xf32>
    %601 = vector.shape_cast %600 : vector<1x8x384xf32> to vector<8x384xf32>
    %602 = arith.truncf %598 : vector<8x128xf32> to vector<8x128xbf16>
    %cst_225 = arith.constant dense<0.000000e+00> : vector<8x384xf32>
    %603 = tpu.matmul %602, %367, %cst_225 {dimension_numbers = #tpu.dot_dimension_numbers<[1], [0], [0], [1], [0, 0, 1, 1], [], []>} : vector<8x128xbf16>, vector<128x384xbf16>, vector<8x384xf32> -> vector<8x384xf32>
    %604 = vector.extract_strided_slice %601 {offsets = [0, 0], sizes = [8, 128], strides = [1, 1]} : vector<8x384xf32> to vector<8x128xf32>
    %605 = vector.extract_strided_slice %603 {offsets = [0, 0], sizes = [8, 128], strides = [1, 1]} : vector<8x384xf32> to vector<8x128xf32>
    %606 = arith.addf %604, %605 : vector<8x128xf32>
    %607 = arith.negf %606 : vector<8x128xf32>
    %608 = math.exp %607 : vector<8x128xf32>
    %cst_226 = arith.constant 1.000000e+00 : f32
    %609 = vector.broadcast %cst_226 : f32 to vector<8x128xf32>
    %610 = arith.addf %609, %608 : vector<8x128xf32>
    %611 = arith.divf %609, %610 : vector<8x128xf32>
    %612 = vector.extract_strided_slice %601 {offsets = [0, 128], sizes = [8, 128], strides = [1, 1]} : vector<8x384xf32> to vector<8x128xf32>
    %613 = vector.extract_strided_slice %603 {offsets = [0, 128], sizes = [8, 128], strides = [1, 1]} : vector<8x384xf32> to vector<8x128xf32>
    %614 = arith.addf %612, %613 : vector<8x128xf32>
    %615 = arith.negf %614 : vector<8x128xf32>
    %616 = math.exp %615 : vector<8x128xf32>
    %cst_227 = arith.constant 1.000000e+00 : f32
    %617 = vector.broadcast %cst_227 : f32 to vector<8x128xf32>
    %618 = arith.addf %617, %616 : vector<8x128xf32>
    %619 = arith.divf %617, %618 : vector<8x128xf32>
    %620 = vector.extract_strided_slice %601 {offsets = [0, 256], sizes = [8, 128], strides = [1, 1]} : vector<8x384xf32> to vector<8x128xf32>
    %621 = vector.extract_strided_slice %603 {offsets = [0, 256], sizes = [8, 128], strides = [1, 1]} : vector<8x384xf32> to vector<8x128xf32>
    %622 = vector.broadcast %368 : vector<1x128xf32> to vector<8x128xf32>
    %623 = arith.addf %621, %622 : vector<8x128xf32>
    %624 = arith.mulf %611, %623 : vector<8x128xf32>
    %625 = arith.addf %620, %624 : vector<8x128xf32>
    %626 = math.tanh %625 : vector<8x128xf32>
    %cst_228 = arith.constant 1.000000e+00 : f32
    %627 = vector.broadcast %cst_228 : f32 to vector<8x128xf32>
    %628 = arith.subf %627, %619 : vector<8x128xf32>
    %629 = arith.mulf %628, %626 : vector<8x128xf32>
    %630 = arith.mulf %619, %598 : vector<8x128xf32>
    %631 = arith.addf %629, %630 : vector<8x128xf32>
    %c1_229 = arith.constant 1 : index
    %c0_230 = arith.constant 0 : index
    %c0_231 = arith.constant 0 : index
    %632 = vector.load %arg13[%c1_229, %c0_230, %c0_231] : memref<2x8x128xf32, #tpu.memory_space<vmem>>, vector<1x8x128xf32>
    %633 = vector.shape_cast %632 : vector<1x8x128xf32> to vector<8x128xf32>
    %634 = vector.shape_cast %631 : vector<8x128xf32> to vector<1x8x128xf32>
    tpu.vector_store %arg13[%c1_229, %c0_230, %c0_231], %634 {strides = array<i32>} : memref<2x8x128xf32, #tpu.memory_space<vmem>>, vector<1x8x128xf32>,
    %c7_i32_232 = arith.constant 7 : i32
    %c1_233 = arith.constant 1 : index
    %c0_234 = arith.constant 0 : index
    %c0_235 = arith.constant 0 : index
    %635 = vector.load %arg13[%c1_233, %c0_234, %c0_235] : memref<2x8x128xf32, #tpu.memory_space<vmem>>, vector<1x8x128xf32>
    %636 = vector.shape_cast %635 : vector<1x8x128xf32> to vector<8x128xf32>
    %637 = arith.index_cast %c7_i32_232 : i32 to index
    %c0_236 = arith.constant 0 : index
    %c0_237 = arith.constant 0 : index
    %638 = vector.load %arg14[%637, %c0_236, %c0_237] : memref<8x8x384xf32, #tpu.memory_space<vmem>>, vector<1x8x384xf32>
    %639 = vector.shape_cast %638 : vector<1x8x384xf32> to vector<8x384xf32>
    %640 = arith.truncf %636 : vector<8x128xf32> to vector<8x128xbf16>
    %cst_238 = arith.constant dense<0.000000e+00> : vector<8x384xf32>
    %641 = tpu.matmul %640, %367, %cst_238 {dimension_numbers = #tpu.dot_dimension_numbers<[1], [0], [0], [1], [0, 0, 1, 1], [], []>} : vector<8x128xbf16>, vector<128x384xbf16>, vector<8x384xf32> -> vector<8x384xf32>
    %642 = vector.extract_strided_slice %639 {offsets = [0, 0], sizes = [8, 128], strides = [1, 1]} : vector<8x384xf32> to vector<8x128xf32>
    %643 = vector.extract_strided_slice %641 {offsets = [0, 0], sizes = [8, 128], strides = [1, 1]} : vector<8x384xf32> to vector<8x128xf32>
    %644 = arith.addf %642, %643 : vector<8x128xf32>
    %645 = arith.negf %644 : vector<8x128xf32>
    %646 = math.exp %645 : vector<8x128xf32>
    %cst_239 = arith.constant 1.000000e+00 : f32
    %647 = vector.broadcast %cst_239 : f32 to vector<8x128xf32>
    %648 = arith.addf %647, %646 : vector<8x128xf32>
    %649 = arith.divf %647, %648 : vector<8x128xf32>
    %650 = vector.extract_strided_slice %639 {offsets = [0, 128], sizes = [8, 128], strides = [1, 1]} : vector<8x384xf32> to vector<8x128xf32>
    %651 = vector.extract_strided_slice %641 {offsets = [0, 128], sizes = [8, 128], strides = [1, 1]} : vector<8x384xf32> to vector<8x128xf32>
    %652 = arith.addf %650, %651 : vector<8x128xf32>
    %653 = arith.negf %652 : vector<8x128xf32>
    %654 = math.exp %653 : vector<8x128xf32>
    %cst_240 = arith.constant 1.000000e+00 : f32
    %655 = vector.broadcast %cst_240 : f32 to vector<8x128xf32>
    %656 = arith.addf %655, %654 : vector<8x128xf32>
    %657 = arith.divf %655, %656 : vector<8x128xf32>
    %658 = vector.extract_strided_slice %639 {offsets = [0, 256], sizes = [8, 128], strides = [1, 1]} : vector<8x384xf32> to vector<8x128xf32>
    %659 = vector.extract_strided_slice %641 {offsets = [0, 256], sizes = [8, 128], strides = [1, 1]} : vector<8x384xf32> to vector<8x128xf32>
    %660 = vector.broadcast %368 : vector<1x128xf32> to vector<8x128xf32>
    %661 = arith.addf %659, %660 : vector<8x128xf32>
    %662 = arith.mulf %649, %661 : vector<8x128xf32>
    %663 = arith.addf %658, %662 : vector<8x128xf32>
    %664 = math.tanh %663 : vector<8x128xf32>
    %cst_241 = arith.constant 1.000000e+00 : f32
    %665 = vector.broadcast %cst_241 : f32 to vector<8x128xf32>
    %666 = arith.subf %665, %657 : vector<8x128xf32>
    %667 = arith.mulf %666, %664 : vector<8x128xf32>
    %668 = arith.mulf %657, %636 : vector<8x128xf32>
    %669 = arith.addf %667, %668 : vector<8x128xf32>
    %c1_242 = arith.constant 1 : index
    %c0_243 = arith.constant 0 : index
    %c0_244 = arith.constant 0 : index
    %670 = vector.load %arg13[%c1_242, %c0_243, %c0_244] : memref<2x8x128xf32, #tpu.memory_space<vmem>>, vector<1x8x128xf32>
    %671 = vector.shape_cast %670 : vector<1x8x128xf32> to vector<8x128xf32>
    %672 = vector.shape_cast %669 : vector<8x128xf32> to vector<1x8x128xf32>
    tpu.vector_store %arg13[%c1_242, %c0_243, %c0_244], %672 {strides = array<i32>} : memref<2x8x128xf32, #tpu.memory_space<vmem>>, vector<1x8x128xf32>,
    %c8_i32_245 = arith.constant 8 : i32
    %c0_i32_246 = arith.constant 0 : i32
    %673 = arith.cmpi eq, %arg0, %c0_i32_246 : i32
    %674 = arith.extui %673 : i1 to i32
    %c0_i32_247 = arith.constant 0 : i32
    %675 = arith.cmpi ne, %674, %c0_i32_247 : i32
    scf.if %675 {
      %c1_248 = arith.constant 1 : index
      %c0_249 = arith.constant 0 : index
      %c0_250 = arith.constant 0 : index
      %676 = vector.load %arg13[%c1_248, %c0_249, %c0_250] : memref<2x8x128xf32, #tpu.memory_space<vmem>>, vector<1x8x128xf32>
      %677 = vector.shape_cast %676 : vector<1x8x128xf32> to vector<8x128xf32>
      %678 = arith.truncf %677 : vector<8x128xf32> to vector<8x128xbf16>
      %c0_251 = arith.constant 0 : index
      %c0_252 = arith.constant 0 : index
      %679 = vector.load %arg10[%c0_251, %c0_252] : memref<128x128xbf16, #tpu.memory_space<vmem>>, vector<128x128xbf16>
      %cst_253 = arith.constant dense<0.000000e+00> : vector<8x128xf32>
      %680 = tpu.matmul %678, %679, %cst_253 {dimension_numbers = #tpu.dot_dimension_numbers<[1], [0], [0], [1], [0, 0, 1, 1], [], []>} : vector<8x128xbf16>, vector<128x128xbf16>, vector<8x128xf32> -> vector<8x128xf32>
      %c0_254 = arith.constant 0 : index
      %c0_255 = arith.constant 0 : index
      %681 = vector.load %arg11[%c0_254, %c0_255] : memref<1x128xf32, #tpu.memory_space<vmem>>, vector<1x128xf32>
      %682 = vector.broadcast %681 : vector<1x128xf32> to vector<8x128xf32>
      %683 = arith.addf %680, %682 : vector<8x128xf32>
      %c0_256 = arith.constant 0 : index
      %c0_257 = arith.constant 0 : index
      %684 = vector.load %arg12[%c0_256, %c0_257] : memref<8x128xf32, #tpu.memory_space<vmem>>, vector<8x128xf32>
      tpu.vector_store %arg12[%c0_256, %c0_257], %683 {strides = array<i32>} : memref<8x128xf32, #tpu.memory_space<vmem>>, vector<8x128xf32>,
    } else {
    }
    return
  }
  func.func @transform_0(%arg0: i32) -> (i32, i32, i32) {
    %c0_i32 = arith.constant 0 : i32
    %c0_i32_0 = arith.constant 0 : i32
    %c0_i32_1 = arith.constant 0 : i32
    return %arg0, %c0_i32, %c0_i32_0 : i32, i32, i32
  }
  func.func @transform_1(%arg0: i32) -> (i32, i32) {
    %c0_i32 = arith.constant 0 : i32
    %c0_i32_0 = arith.constant 0 : i32
    %c0_i32_1 = arith.constant 0 : i32
    return %c0_i32, %c0_i32_0 : i32, i32
  }
  func.func @transform_2(%arg0: i32) -> (i32, i32) {
    %c0_i32 = arith.constant 0 : i32
    %c0_i32_0 = arith.constant 0 : i32
    %c0_i32_1 = arith.constant 0 : i32
    return %c0_i32, %c0_i32_0 : i32, i32
  }
  func.func @transform_3(%arg0: i32) -> (i32, i32) {
    %c0_i32 = arith.constant 0 : i32
    %c0_i32_0 = arith.constant 0 : i32
    %c0_i32_1 = arith.constant 0 : i32
    return %c0_i32, %c0_i32_0 : i32, i32
  }
  func.func @transform_4(%arg0: i32) -> (i32, i32) {
    %c0_i32 = arith.constant 0 : i32
    %c0_i32_0 = arith.constant 0 : i32
    %c0_i32_1 = arith.constant 0 : i32
    return %c0_i32, %c0_i32_0 : i32, i32
  }
  func.func @transform_5(%arg0: i32) -> (i32, i32) {
    %c0_i32 = arith.constant 0 : i32
    %c0_i32_0 = arith.constant 0 : i32
    %c0_i32_1 = arith.constant 0 : i32
    return %c0_i32, %c0_i32_0 : i32, i32
  }
  func.func @transform_6(%arg0: i32) -> (i32, i32) {
    %c0_i32 = arith.constant 0 : i32
    %c0_i32_0 = arith.constant 0 : i32
    %c0_i32_1 = arith.constant 0 : i32
    return %c0_i32, %c0_i32_0 : i32, i32
  }
  func.func @transform_7(%arg0: i32) -> (i32, i32) {
    %c0_i32 = arith.constant 0 : i32
    %c0_i32_0 = arith.constant 0 : i32
    %c0_i32_1 = arith.constant 0 : i32
    return %c0_i32, %c0_i32_0 : i32, i32
  }
  func.func @transform_8(%arg0: i32) -> (i32, i32) {
    %c0_i32 = arith.constant 0 : i32
    %c0_i32_0 = arith.constant 0 : i32
    %c0_i32_1 = arith.constant 0 : i32
    return %c0_i32, %c0_i32_0 : i32, i32
  }
  func.func @transform_9(%arg0: i32) -> (i32, i32) {
    %c0_i32 = arith.constant 0 : i32
    %c0_i32_0 = arith.constant 0 : i32
    %c0_i32_1 = arith.constant 0 : i32
    return %c0_i32, %c0_i32_0 : i32, i32
  }
  func.func @transform_10(%arg0: i32) -> (i32, i32) {
    %c0_i32 = arith.constant 0 : i32
    %c0_i32_0 = arith.constant 0 : i32
    %c0_i32_1 = arith.constant 0 : i32
    return %c0_i32, %c0_i32_0 : i32, i32
  }
  func.func @transform_11(%arg0: i32) -> (i32, i32) {
    %c0_i32 = arith.constant 0 : i32
    %c0_i32_0 = arith.constant 0 : i32
    %c0_i32_1 = arith.constant 0 : i32
    return %c0_i32, %c0_i32_0 : i32, i32
  }
}

</mosaic_0001>

<llo_original>
// kernel: gru_forward.1
$region0: #{gru_forward.1}
  #allocation0 [shape = 'u32[]', space=smem, size = 0x4, offset = 0x4, fixed_abs, tag = 'smem constant byte address 0x4 - core index']
  #allocation1 [shape = 'u32[72,128]{1,0:T(1,128)}', space=vmem, size = 0x9000, scoped, tag = 'internal scratch']
  #allocation2 [shape = 'f32[2,8,128]{2,1,0:T(8,128)}', space=vmem, size = 0x2000, scoped, tag = 'scratch operand']
  #allocation3 [shape = 'f32[8,8,384]{2,1,0:T(8,128)}', space=vmem, size = 0x18000, scoped, tag = 'scratch operand']
  #allocation4 [shape = 'bf16[8,8,128]{2,1,0:T(8,128)(2,1)}', space=vmem, size = 0x4000, scoped, tag = 'scratch operand']
  %s0 = inlined_call_operand.vmem [shape: bf16[8,8,128], index: 0, kind: input, shape index: {}]
  %s1 = inlined_call_operand.vmem [shape: bf16[128,384], index: 1, kind: input, shape index: {}]
  %s2 = inlined_call_operand.vmem [shape: bf16[128,384], index: 2, kind: input, shape index: {}]
  %s3 = inlined_call_operand.vmem [shape: f32[1,384], index: 3, kind: input, shape index: {}]
  %s4 = inlined_call_operand.vmem [shape: f32[1,128], index: 4, kind: input, shape index: {}]
  %s5 = inlined_call_operand.hbm [shape: bf16[128,384], index: 5, kind: input, shape index: {}]
  %s6 = inlined_call_operand.hbm [shape: bf16[128,384], index: 6, kind: input, shape index: {}]
  %s7 = inlined_call_operand.vmem [shape: f32[1,384], index: 7, kind: input, shape index: {}]
  %s8 = inlined_call_operand.vmem [shape: f32[1,128], index: 8, kind: input, shape index: {}]
  %s9 = inlined_call_operand.hbm [shape: bf16[128,128], index: 9, kind: input, shape index: {}]
  %s10 = inlined_call_operand.vmem [shape: f32[1,128], index: 10, kind: input, shape index: {}]
  %s11 = inlined_call_operand.vmem [shape: f32[8,128], index: 11, kind: output, shape index: {}]
  %s12 = sld [smem:[#allocation0]]
  $region74: #{gru_forward.1} parent=0
    _
  %s14 = ssub.s32 1, %s12
  %s15 = scalar_select 0, %s14, %s12
  $region1: #{gru_forward.1} parent=0
    #allocation5 [shape = 'u8[98304]{0}', space=vmem, size = 0x18000, scoped, tag = 'input window, operand 5, single buffered']
    #allocation6 [shape = 's32[1]{0}', space=sflag, size = 0x4, scoped, tag = 'scoped memory for gru_forward.1']
    #allocation7 [shape = 'u8[98304]{0}', space=vmem, size = 0x18000, scoped, tag = 'input window, operand 6, single buffered']
    #allocation8 [shape = 's32[1]{0}', space=sflag, size = 0x4, scoped, tag = 'scoped memory for gru_forward.1']
    #allocation9 [shape = 'u8[32768]{0}', space=vmem, size = 0x8000, scoped, tag = 'input window, operand 9, single buffered']
    %16 = vsyncpa [#allocation6], 0
    %17 = vsyncpa [#allocation8], 0
    // Predicated region
    $region2: #{gru_forward.1} parent=1 // pred_check
      _
    $region3: #{gru_forward.1} parent=1 // pred_check_branch
      %19 = sbr.rel (0) target = $region5
    $region4: #{gru_forward.1} parent=1 // pred_region
      _
    $region5: #{gru_forward.1} parent=1 // pred_fallthru
      _
    // Predicated region
    $region6: #{gru_forward.1} parent=1 // pred_check
      _
    $region7: #{gru_forward.1} parent=1 // pred_check_branch
      %21 = sbr.rel (0) target = $region9
    $region8: #{gru_forward.1} parent=1 // pred_region
      _
    $region9: #{gru_forward.1} parent=1 // pred_fallthru
      _
    // Predicated region
    $region10: #{gru_forward.1} parent=1 // pred_check
      _
    $region11: #{gru_forward.1} parent=1 // pred_check_branch
      %23 = sbr.rel (0) target = $region13
    $region12: #{gru_forward.1} parent=1 // pred_region
      _
    $region13: #{gru_forward.1} parent=1 // pred_fallthru
      _
    // Predicated region
    $region14: #{gru_forward.1} parent=1 // pred_check
      _
    $region15: #{gru_forward.1} parent=1 // pred_check_branch
      %25 = sbr.rel (0) target = $region17
    $region16: #{gru_forward.1} parent=1 // pred_region
      _
    $region17: #{gru_forward.1} parent=1 // pred_fallthru
      _
    // Predicated region
    $region18: #{gru_forward.1} parent=1 // pred_check
      _
    $region19: #{gru_forward.1} parent=1 // pred_check_branch
      %27 = sbr.rel (0) target = $region21
    $region20: #{gru_forward.1} parent=1 // pred_region
      _
    $region21: #{gru_forward.1} parent=1 // pred_fallthru
      _
    // Predicated region
    $region22: #{gru_forward.1} parent=1 // pred_check
      _
    $region23: #{gru_forward.1} parent=1 // pred_check_branch
      %29 = sbr.rel (0) target = $region25
    $region24: #{gru_forward.1} parent=1 // pred_region
      %31 = vsyncadd [#allocation6], 0
      %s32 = sshll.u32 %s5, 4
      %s33 = int_to_ptr.hbm [resolvable:$true] %s32
      %s34 = sshll.u32 [#allocation5], 4
      %s35 = int_to_ptr.vmem [resolvable:$true] %s34
      %40 = dma.hbm_to_vmem [thread:$0]  %s33, 3072, %s35, [#allocation6], 192, 192, 12
    $region25: #{gru_forward.1} parent=1 // pred_fallthru
      _
    // Predicated region
    $region26: #{gru_forward.1} parent=1 // pred_check
      _
    $region27: #{gru_forward.1} parent=1 // pred_check_branch
      %42 = sbr.rel (0) target = $region29
    $region28: #{gru_forward.1} parent=1 // pred_region
      %44 = vsyncadd [#allocation8], 0
      %s45 = sshll.u32 %s6, 4
      %s46 = int_to_ptr.hbm [resolvable:$true] %s45
      %s47 = sshll.u32 [#allocation7], 4
      %s48 = int_to_ptr.vmem [resolvable:$true] %s47
      %53 = dma.hbm_to_vmem [thread:$0]  %s46, 3072, %s48, [#allocation8], 192, 192, 12
    $region29: #{gru_forward.1} parent=1 // pred_fallthru
      _
    // Predicated region
    $region30: #{gru_forward.1} parent=1 // pred_check
      _
    $region31: #{gru_forward.1} parent=1 // pred_check_branch
      %55 = sbr.rel (0) target = $region33
    $region32: #{gru_forward.1} parent=1 // pred_region
      _
    $region33: #{gru_forward.1} parent=1 // pred_fallthru
      _
    // Predicated region
    $region34: #{gru_forward.1} parent=1 // pred_check
      _
    $region35: #{gru_forward.1} parent=1 // pred_check_branch
      %57 = sbr.rel (0) target = $region37
    $region36: #{gru_forward.1} parent=1 // pred_region
      _
    $region37: #{gru_forward.1} parent=1 // pred_fallthru
      _
    // Predicated region
    $region38: #{gru_forward.1} parent=1 // pred_check
      _
    $region39: #{gru_forward.1} parent=1 // pred_check_branch
      %59 = sbr.rel (0) target = $region41
    $region40: #{gru_forward.1} parent=1 // pred_region
      %61 = vsyncadd [#allocation8], 0
      %s62 = sshll.u32 %s9, 4
      %s63 = int_to_ptr.hbm [resolvable:$true] %s62
      %s64 = sshll.u32 [#allocation9], 4
      %s65 = int_to_ptr.vmem [resolvable:$true] %s64
      %70 = dma.hbm_to_vmem [thread:$0]  %s63, 1024, %s65, [#allocation8], 64, 64, 4
    $region41: #{gru_forward.1} parent=1 // pred_fallthru
      _
    // Predicated region
    $region42: #{gru_forward.1} parent=1 // pred_check
      _
    $region43: #{gru_forward.1} parent=1 // pred_check_branch
      %72 = sbr.rel (0) target = $region45
    $region44: #{gru_forward.1} parent=1 // pred_region
      _
    $region45: #{gru_forward.1} parent=1 // pred_fallthru
      _
    // Predicated region
    $region46: #{gru_forward.1} parent=1 // pred_check
      _
    $region47: #{gru_forward.1} parent=1 // pred_check_branch
      %74 = sbr.rel (0) target = $region49
    $region48: #{gru_forward.1} parent=1 // pred_region
      %76 = dma.done [#allocation6], 3072
    $region49: #{gru_forward.1} parent=1 // pred_fallthru
      _
    // Predicated region
    $region50: #{gru_forward.1} parent=1 // pred_check
      _
    $region51: #{gru_forward.1} parent=1 // pred_check_branch
      %78 = sbr.rel (0) target = $region53
    $region52: #{gru_forward.1} parent=1 // pred_region
      %80 = dma.done [#allocation8], 3072
    $region53: #{gru_forward.1} parent=1 // pred_fallthru
      _
    // Predicated region
    $region54: #{gru_forward.1} parent=1 // pred_check
      _
    $region55: #{gru_forward.1} parent=1 // pred_check_branch
      %82 = sbr.rel (0) target = $region57
    $region56: #{gru_forward.1} parent=1 // pred_region
      %84 = dma.done [#allocation8], 1024
    $region57: #{gru_forward.1} parent=1 // pred_fallthru
      _
    %p85 = scmp.eq.s32.totalorder 0, 0
    // Predicated region
    $region58: #{gru_forward.1} parent=1 // pred_check
      %p86 = pneg %p85
    $region59: #{gru_forward.1} parent=1 // pred_check_branch
      %88 = sbr.rel (%p86) target = $region61
    $region60: #{gru_forward.1} parent=1 // pred_region
      %89 = vst [vmem:[#allocation2] sm:$0xff] 0.0
      %90 = vst [vmem:[#allocation2 + $0x8] sm:$0xff] 0.0
    $region61: #{gru_forward.1} parent=1 // pred_fallthru
      _
    %v91 = vld [vmem:[%s0] sm:$0xf]
    %v92 = vld [vmem:[%s0 + $0x4] sm:$0xf]
    %v93 = vld [vmem:[%s0 + $0x8] sm:$0xf]
    %v94 = vld [vmem:[%s0 + $0xc] sm:$0xf]
    %v95 = vld [vmem:[%s0 + $0x10] sm:$0xf]
    %v96 = vld [vmem:[%s0 + $0x14] sm:$0xf]
    %v97 = vld [vmem:[%s0 + $0x18] sm:$0xf]
    %v98 = vld [vmem:[%s0 + $0x1c] sm:$0xf]
    %v99 = vld [vmem:[%s1] sm:$0xff]
    %v100 = vld [vmem:[%s1 + $0x8] sm:$0xf]
    %v101 = vld [vmem:[%s1 + $0xc] sm:$0xff]
    %v102 = vld [vmem:[%s1 + $0x14] sm:$0xf]
    %v103 = vld [vmem:[%s1 + $0x18] sm:$0xff]
    %v104 = vld [vmem:[%s1 + $0x20] sm:$0xf]
    %v105 = vld [vmem:[%s1 + $0x24] sm:$0xff]
    %v106 = vld [vmem:[%s1 + $0x2c] sm:$0xf]
    %v107 = vld [vmem:[%s1 + $0x30] sm:$0xff]
    %v108 = vld [vmem:[%s1 + $0x38] sm:$0xf]
    %v109 = vld [vmem:[%s1 + $0x3c] sm:$0xff]
    %v110 = vld [vmem:[%s1 + $0x44] sm:$0xf]
    %v111 = vld [vmem:[%s1 + $0x48] sm:$0xff]
    %v112 = vld [vmem:[%s1 + $0x50] sm:$0xf]
    %v113 = vld [vmem:[%s1 + $0x54] sm:$0xff]
    %v114 = vld [vmem:[%s1 + $0x5c] sm:$0xf]
    %v115 = vld [vmem:[%s1 + $0x60] sm:$0xff]
    %v116 = vld [vmem:[%s1 + $0x68] sm:$0xf]
    %v117 = vld [vmem:[%s1 + $0x6c] sm:$0xff]
    %v118 = vld [vmem:[%s1 + $0x74] sm:$0xf]
    %v119 = vld [vmem:[%s1 + $0x78] sm:$0xff]
    %v120 = vld [vmem:[%s1 + $0x80] sm:$0xf]
    %v121 = vld [vmem:[%s1 + $0x84] sm:$0xff]
    %v122 = vld [vmem:[%s1 + $0x8c] sm:$0xf]
    %v123 = vld [vmem:[%s1 + $0x90] sm:$0xff]
    %v124 = vld [vmem:[%s1 + $0x98] sm:$0xf]
    %v125 = vld [vmem:[%s1 + $0x9c] sm:$0xff]
    %v126 = vld [vmem:[%s1 + $0xa4] sm:$0xf]
    %v127 = vld [vmem:[%s1 + $0xa8] sm:$0xff]
    %v128 = vld [vmem:[%s1 + $0xb0] sm:$0xf]
    %v129 = vld [vmem:[%s1 + $0xb4] sm:$0xff]
    %v130 = vld [vmem:[%s1 + $0xbc] sm:$0xf]
    %v131 = vld [vmem:[%s3] sm:$0x7]
    %v133 = vperm.slane %v131, 0
    %v134 = vperm.slane %v131, 1
    %v135 = vperm.slane %v131, 2
    %v147 = vunpack.c.l.b16 %v91
    %v148 = vunpack.c.l.b16 %v92
    %v149 = vunpack.c.l.b16 %v93
    %v150 = vunpack.c.l.b16 %v94
    %v151 = vunpack.c.l.b16 %v95
    %v152 = vunpack.c.l.b16 %v96
    %v153 = vunpack.c.l.b16 %v97
    %v154 = vunpack.c.l.b16 %v98
    %v155 = vpack.c.b16 %v148, %v147
    %v156 = vpack.c.b16 %v150, %v149
    %v157 = vpack.c.b16 %v152, %v151
    %v158 = vpack.c.b16 %v154, %v153
    %v195 = vunpack.c.l.b16 %v99
    %v196 = vunpack.c.h.b16 %v99
    %v197 = vunpack.c.l.b16 %v100
    %v198 = vunpack.c.l.b16 %v101
    %v199 = vunpack.c.h.b16 %v101
    %v200 = vunpack.c.l.b16 %v102
    %v201 = vunpack.c.l.b16 %v103
    %v202 = vunpack.c.h.b16 %v103
    %v203 = vunpack.c.l.b16 %v104
    %v204 = vunpack.c.l.b16 %v105
    %v205 = vunpack.c.h.b16 %v105
    %v206 = vunpack.c.l.b16 %v106
    %v207 = vunpack.c.l.b16 %v107
    %v208 = vunpack.c.h.b16 %v107
    %v209 = vunpack.c.l.b16 %v108
    %v210 = vunpack.c.l.b16 %v109
    %v211 = vunpack.c.h.b16 %v109
    %v212 = vunpack.c.l.b16 %v110
    %v213 = vunpack.c.l.b16 %v111
    %v214 = vunpack.c.h.b16 %v111
    %v215 = vunpack.c.l.b16 %v112
    %v216 = vunpack.c.l.b16 %v113
    %v217 = vunpack.c.h.b16 %v113
    %v218 = vunpack.c.l.b16 %v114
    %v219 = vunpack.c.l.b16 %v115
    %v220 = vunpack.c.h.b16 %v115
    %v221 = vunpack.c.l.b16 %v116
    %v222 = vunpack.c.l.b16 %v117
    %v223 = vunpack.c.h.b16 %v117
    %v224 = vunpack.c.l.b16 %v118
    %v225 = vunpack.c.l.b16 %v119
    %v226 = vunpack.c.h.b16 %v119
    %v227 = vunpack.c.l.b16 %v120
    %v228 = vunpack.c.l.b16 %v121
    %v229 = vunpack.c.h.b16 %v121
    %v230 = vunpack.c.l.b16 %v122
    %v231 = vunpack.c.l.b16 %v123
    %v232 = vunpack.c.h.b16 %v123
    %v233 = vunpack.c.l.b16 %v124
    %v234 = vunpack.c.l.b16 %v125
    %v235 = vunpack.c.h.b16 %v125
    %v236 = vunpack.c.l.b16 %v126
    %v237 = vunpack.c.l.b16 %v127
    %v238 = vunpack.c.h.b16 %v127
    %v239 = vunpack.c.l.b16 %v128
    %v240 = vunpack.c.l.b16 %v129
    %v241 = vunpack.c.h.b16 %v129
    %v242 = vunpack.c.l.b16 %v130
    %v243 = vpack.c.b16 %v198, %v195
    %v244 = vpack.c.b16 %v199, %v196
    %v245 = vpack.c.b16 %v200, %v197
    %v246 = vpack.c.b16 %v204, %v201
    %v247 = vpack.c.b16 %v205, %v202
    %v248 = vpack.c.b16 %v206, %v203
    %v249 = vpack.c.b16 %v210, %v207
    %v250 = vpack.c.b16 %v211, %v208
    %v251 = vpack.c.b16 %v212, %v209
    %v252 = vpack.c.b16 %v216, %v213
    %v253 = vpack.c.b16 %v217, %v214
    %v254 = vpack.c.b16 %v218, %v215
    %v255 = vpack.c.b16 %v222, %v219
    %v256 = vpack.c.b16 %v223, %v220
    %v257 = vpack.c.b16 %v224, %v221
    %v258 = vpack.c.b16 %v228, %v225
    %v259 = vpack.c.b16 %v229, %v226
    %v260 = vpack.c.b16 %v230, %v227
    %v261 = vpack.c.b16 %v234, %v231
    %v262 = vpack.c.b16 %v235, %v232
    %v263 = vpack.c.b16 %v236, %v233
    %v264 = vpack.c.b16 %v240, %v237
    %v265 = vpack.c.b16 %v241, %v238
    %v266 = vpack.c.b16 %v242, %v239
    %291 = vmatpush.bf16.msra.mxu0 %v264
    %292 = vmatpush.bf16.msra.mxu0 %v261
    %293 = vmatpush.bf16.msra.mxu0 %v258
    %294 = vmatpush.bf16.msra.mxu0 %v255
    %295 = vmatpush.bf16.msra.mxu0 %v252
    %296 = vmatpush.bf16.msra.mxu0 %v249
    %297 = vmatpush.bf16.msra.mxu0 %v246
    %298 = vmatpush.bf16.msra.mxu0 %v243
    %299 = vmatmul.bf16.gmra.mxu0 %v155
    %v300 = vpop.f32.mrf.mxu0
    %v301 = vadd.f32 %v133, %v300
    %v302 = vpop.f32.mrf.mxu0
    %v303 = vadd.f32 %v133, %v302
    %304 = vmatmul.bf16.gmra.mxu0 %v156
    %v305 = vpop.f32.mrf.mxu0
    %v306 = vadd.f32 %v133, %v305
    %v307 = vpop.f32.mrf.mxu0
    %v308 = vadd.f32 %v133, %v307
    %309 = vmatmul.bf16.gmra.mxu0 %v157
    %v310 = vpop.f32.mrf.mxu0
    %v311 = vadd.f32 %v133, %v310
    %v312 = vpop.f32.mrf.mxu0
    %v313 = vadd.f32 %v133, %v312
    %314 = vmatmul.bf16.gmra.mxu0 %v158
    %v315 = vpop.f32.mrf.mxu0
    %v316 = vadd.f32 %v133, %v315
    %v317 = vpop.f32.mrf.mxu0
    %v318 = vadd.f32 %v133, %v317
    %319 = vdwg.mxu0
    %320 = vmatpush.bf16.msra.mxu0 %v265
    %321 = vmatpush.bf16.msra.mxu0 %v262
    %322 = vmatpush.bf16.msra.mxu0 %v259
    %323 = vmatpush.bf16.msra.mxu0 %v256
    %324 = vmatpush.bf16.msra.mxu0 %v253
    %325 = vmatpush.bf16.msra.mxu0 %v250
    %326 = vmatpush.bf16.msra.mxu0 %v247
    %327 = vmatpush.bf16.msra.mxu0 %v244
    %328 = vmatmul.bf16.gmra.mxu0 %v155
    %v329 = vpop.f32.mrf.mxu0
    %v330 = vadd.f32 %v134, %v329
    %v331 = vpop.f32.mrf.mxu0
    %v332 = vadd.f32 %v134, %v331
    %333 = vmatmul.bf16.gmra.mxu0 %v156
    %v334 = vpop.f32.mrf.mxu0
    %v335 = vadd.f32 %v134, %v334
    %v336 = vpop.f32.mrf.mxu0
    %v337 = vadd.f32 %v134, %v336
    %338 = vmatmul.bf16.gmra.mxu0 %v157
    %v339 = vpop.f32.mrf.mxu0
    %v340 = vadd.f32 %v134, %v339
    %v341 = vpop.f32.mrf.mxu0
    %v342 = vadd.f32 %v134, %v341
    %343 = vmatmul.bf16.gmra.mxu0 %v158
    %v344 = vpop.f32.mrf.mxu0
    %v345 = vadd.f32 %v134, %v344
    %v346 = vpop.f32.mrf.mxu0
    %v347 = vadd.f32 %v134, %v346
    %348 = vdwg.mxu0
    %349 = vmatpush.bf16.msra.mxu0 %v266
    %350 = vmatpush.bf16.msra.mxu0 %v263
    %351 = vmatpush.bf16.msra.mxu0 %v260
    %352 = vmatpush.bf16.msra.mxu0 %v257
    %353 = vmatpush.bf16.msra.mxu0 %v254
    %354 = vmatpush.bf16.msra.mxu0 %v251
    %355 = vmatpush.bf16.msra.mxu0 %v248
    %356 = vmatpush.bf16.msra.mxu0 %v245
    %357 = vmatmul.bf16.gmra.mxu0 %v155
    %v358 = vpop.f32.mrf.mxu0
    %v359 = vadd.f32 %v135, %v358
    %v360 = vpop.f32.mrf.mxu0
    %v361 = vadd.f32 %v135, %v360
    %362 = vmatmul.bf16.gmra.mxu0 %v156
    %v363 = vpop.f32.mrf.mxu0
    %v364 = vadd.f32 %v135, %v363
    %v365 = vpop.f32.mrf.mxu0
    %v366 = vadd.f32 %v135, %v365
    %367 = vmatmul.bf16.gmra.mxu0 %v157
    %v368 = vpop.f32.mrf.mxu0
    %v369 = vadd.f32 %v135, %v368
    %v370 = vpop.f32.mrf.mxu0
    %v371 = vadd.f32 %v135, %v370
    %372 = vmatmul.bf16.gmra.mxu0 %v158
    %v373 = vpop.f32.mrf.mxu0
    %v374 = vadd.f32 %v135, %v373
    %v375 = vpop.f32.mrf.mxu0
    %v376 = vadd.f32 %v135, %v375
    %377 = vdwg.mxu0
    %378 = vst [vmem:[#allocation3] sm:$0xff] %v301
    %379 = vst [vmem:[#allocation3 + $0x8] sm:$0xff] %v330
    %380 = vst [vmem:[#allocation3 + $0x10] sm:$0xff] %v359
    %381 = vst [vmem:[#allocation3 + $0x18] sm:$0xff] %v303
    %382 = vst [vmem:[#allocation3 + $0x20] sm:$0xff] %v332
    %383 = vst [vmem:[#allocation3 + $0x28] sm:$0xff] %v361
    %384 = vst [vmem:[#allocation3 + $0x30] sm:$0xff] %v306
    %385 = vst [vmem:[#allocation3 + $0x38] sm:$0xff] %v335
    %386 = vst [vmem:[#allocation3 + $0x40] sm:$0xff] %v364
    %387 = vst [vmem:[#allocation3 + $0x48] sm:$0xff] %v308
    %388 = vst [vmem:[#allocation3 + $0x50] sm:$0xff] %v337
    %389 = vst [vmem:[#allocation3 + $0x58] sm:$0xff] %v366
    %390 = vst [vmem:[#allocation3 + $0x60] sm:$0xff] %v311
    %391 = vst [vmem:[#allocation3 + $0x68] sm:$0xff] %v340
    %392 = vst [vmem:[#allocation3 + $0x70] sm:$0xff] %v369
    %393 = vst [vmem:[#allocation3 + $0x78] sm:$0xff] %v313
    %394 = vst [vmem:[#allocation3 + $0x80] sm:$0xff] %v342
    %395 = vst [vmem:[#allocation3 + $0x88] sm:$0xff] %v371
    %396 = vst [vmem:[#allocation3 + $0x90] sm:$0xff] %v316
    %397 = vst [vmem:[#allocation3 + $0x98] sm:$0xff] %v345
    %398 = vst [vmem:[#allocation3 + $0xa0] sm:$0xff] %v374
    %399 = vst [vmem:[#allocation3 + $0xa8] sm:$0xff] %v318
    %400 = vst [vmem:[#allocation3 + $0xb0] sm:$0xff] %v347
    %401 = vst [vmem:[#allocation3 + $0xb8] sm:$0xff] %v376
    %v402 = vld [vmem:[%s2] sm:$0xff]
    %v403 = vld [vmem:[%s2 + $0x8] sm:$0xf]
    %v404 = vld [vmem:[%s2 + $0xc] sm:$0xff]
    %v405 = vld [vmem:[%s2 + $0x14] sm:$0xf]
    %v406 = vld [vmem:[%s2 + $0x18] sm:$0xff]
    %v407 = vld [vmem:[%s2 + $0x20] sm:$0xf]
    %v408 = vld [vmem:[%s2 + $0x24] sm:$0xff]
    %v409 = vld [vmem:[%s2 + $0x2c] sm:$0xf]
    %v410 = vld [vmem:[%s2 + $0x30] sm:$0xff]
    %v411 = vld [vmem:[%s2 + $0x38] sm:$0xf]
    %v412 = vld [vmem:[%s2 + $0x3c] sm:$0xff]
    %v413 = vld [vmem:[%s2 + $0x44] sm:$0xf]
    %v414 = vld [vmem:[%s2 + $0x48] sm:$0xff]
    %v415 = vld [vmem:[%s2 + $0x50] sm:$0xf]
    %v416 = vld [vmem:[%s2 + $0x54] sm:$0xff]
    %v417 = vld [vmem:[%s2 + $0x5c] sm:$0xf]
    %v418 = vld [vmem:[%s2 + $0x60] sm:$0xff]
    %v419 = vld [vmem:[%s2 + $0x68] sm:$0xf]
    %v420 = vld [vmem:[%s2 + $0x6c] sm:$0xff]
    %v421 = vld [vmem:[%s2 + $0x74] sm:$0xf]
    %v422 = vld [vmem:[%s2 + $0x78] sm:$0xff]
    %v423 = vld [vmem:[%s2 + $0x80] sm:$0xf]
    %v424 = vld [vmem:[%s2 + $0x84] sm:$0xff]
    %v425 = vld [vmem:[%s2 + $0x8c] sm:$0xf]
    %v426 = vld [vmem:[%s2 + $0x90] sm:$0xff]
    %v427 = vld [vmem:[%s2 + $0x98] sm:$0xf]
    %v428 = vld [vmem:[%s2 + $0x9c] sm:$0xff]
    %v429 = vld [vmem:[%s2 + $0xa4] sm:$0xf]
    %v430 = vld [vmem:[%s2 + $0xa8] sm:$0xff]
    %v431 = vld [vmem:[%s2 + $0xb0] sm:$0xf]
    %v432 = vld [vmem:[%s2 + $0xb4] sm:$0xff]
    %v433 = vld [vmem:[%s2 + $0xbc] sm:$0xf]
    %v434 = vld [vmem:[%s4] sm:$0x1]
    %v435 = vld [vmem:[#allocation2] sm:$0xff]
    %v436 = vld [vmem:[#allocation3] sm:$0xff]
    %v437 = vld [vmem:[#allocation3 + $0x8] sm:$0xff]
    %v438 = vld [vmem:[#allocation3 + $0x10] sm:$0xff]
    %v439 = vpack.c.bf16 %v435, %v435
    %v472 = vunpack.c.l.b16 %v402
    %v473 = vunpack.c.h.b16 %v402
    %v474 = vunpack.c.l.b16 %v403
    %v475 = vunpack.c.l.b16 %v404
    %v476 = vunpack.c.h.b16 %v404
    %v477 = vunpack.c.l.b16 %v405
    %v478 = vunpack.c.l.b16 %v406
    %v479 = vunpack.c.h.b16 %v406
    %v480 = vunpack.c.l.b16 %v407
    %v481 = vunpack.c.l.b16 %v408
    %v482 = vunpack.c.h.b16 %v408
    %v483 = vunpack.c.l.b16 %v409
    %v484 = vunpack.c.l.b16 %v410
    %v485 = vunpack.c.h.b16 %v410
    %v486 = vunpack.c.l.b16 %v411
    %v487 = vunpack.c.l.b16 %v412
    %v488 = vunpack.c.h.b16 %v412
    %v489 = vunpack.c.l.b16 %v413
    %v490 = vunpack.c.l.b16 %v414
    %v491 = vunpack.c.h.b16 %v414
    %v492 = vunpack.c.l.b16 %v415
    %v493 = vunpack.c.l.b16 %v416
    %v494 = vunpack.c.h.b16 %v416
    %v495 = vunpack.c.l.b16 %v417
    %v496 = vunpack.c.l.b16 %v418
    %v497 = vunpack.c.h.b16 %v418
    %v498 = vunpack.c.l.b16 %v419
    %v499 = vunpack.c.l.b16 %v420
    %v500 = vunpack.c.h.b16 %v420
    %v501 = vunpack.c.l.b16 %v421
    %v502 = vunpack.c.l.b16 %v422
    %v503 = vunpack.c.h.b16 %v422
    %v504 = vunpack.c.l.b16 %v423
    %v505 = vunpack.c.l.b16 %v424
    %v506 = vunpack.c.h.b16 %v424
    %v507 = vunpack.c.l.b16 %v425
    %v508 = vunpack.c.l.b16 %v426
    %v509 = vunpack.c.h.b16 %v426
    %v510 = vunpack.c.l.b16 %v427
    %v511 = vunpack.c.l.b16 %v428
    %v512 = vunpack.c.h.b16 %v428
    %v513 = vunpack.c.l.b16 %v429
    %v514 = vunpack.c.l.b16 %v430
    %v515 = vunpack.c.h.b16 %v430
    %v516 = vunpack.c.l.b16 %v431
    %v517 = vunpack.c.l.b16 %v432
    %v518 = vunpack.c.h.b16 %v432
    %v519 = vunpack.c.l.b16 %v433
    %v520 = vpack.c.b16 %v475, %v472
    %v521 = vpack.c.b16 %v476, %v473
    %v522 = vpack.c.b16 %v477, %v474
    %v523 = vpack.c.b16 %v481, %v478
    %v524 = vpack.c.b16 %v482, %v479
    %v525 = vpack.c.b16 %v483, %v480
    %v526 = vpack.c.b16 %v487, %v484
    %v527 = vpack.c.b16 %v488, %v485
    %v528 = vpack.c.b16 %v489, %v486
    %v529 = vpack.c.b16 %v493, %v490
    %v530 = vpack.c.b16 %v494, %v491
    %v531 = vpack.c.b16 %v495, %v492
    %v532 = vpack.c.b16 %v499, %v496
    %v533 = vpack.c.b16 %v500, %v497
    %v534 = vpack.c.b16 %v501, %v498
    %v535 = vpack.c.b16 %v505, %v502
    %v536 = vpack.c.b16 %v506, %v503
    %v537 = vpack.c.b16 %v507, %v504
    %v538 = vpack.c.b16 %v511, %v508
    %v539 = vpack.c.b16 %v512, %v509
    %v540 = vpack.c.b16 %v513, %v510
    %v541 = vpack.c.b16 %v517, %v514
    %v542 = vpack.c.b16 %v518, %v515
    %v543 = vpack.c.b16 %v519, %v516
    %568 = vmatpush.bf16.msra.mxu0 %v541
    %569 = vmatpush.bf16.msra.mxu0 %v538
    %570 = vmatpush.bf16.msra.mxu0 %v535
    %571 = vmatpush.bf16.msra.mxu0 %v532
    %572 = vmatpush.bf16.msra.mxu0 %v529
    %573 = vmatpush.bf16.msra.mxu0 %v526
    %574 = vmatpush.bf16.msra.mxu0 %v523
    %575 = vmatpush.bf16.msra.mxu0 %v520
    %576 = vmatmul.bf16.gmra.mxu0 %v439
    %v577 = vpop.f32.mrf.mxu0
    %v578 = vadd.f32 0.0, %v577
    %v579 = vpop.f32.mrf.mxu0
    %580 = vdwg.mxu0
    %581 = vmatpush.bf16.msra.mxu0 %v542
    %582 = vmatpush.bf16.msra.mxu0 %v539
    %583 = vmatpush.bf16.msra.mxu0 %v536
    %584 = vmatpush.bf16.msra.mxu0 %v533
    %585 = vmatpush.bf16.msra.mxu0 %v530
    %586 = vmatpush.bf16.msra.mxu0 %v527
    %587 = vmatpush.bf16.msra.mxu0 %v524
    %588 = vmatpush.bf16.msra.mxu0 %v521
    %589 = vmatmul.bf16.gmra.mxu0 %v439
    %v590 = vpop.f32.mrf.mxu0
    %v591 = vadd.f32 0.0, %v590
    %v592 = vpop.f32.mrf.mxu0
    %593 = vdwg.mxu0
    %594 = vmatpush.bf16.msra.mxu0 %v543
    %595 = vmatpush.bf16.msra.mxu0 %v540
    %596 = vmatpush.bf16.msra.mxu0 %v537
    %597 = vmatpush.bf16.msra.mxu0 %v534
    %598 = vmatpush.bf16.msra.mxu0 %v531
    %599 = vmatpush.bf16.msra.mxu0 %v528
    %600 = vmatpush.bf16.msra.mxu0 %v525
    %601 = vmatpush.bf16.msra.mxu0 %v522
    %602 = vmatmul.bf16.gmra.mxu0 %v439
    %v603 = vpop.f32.mrf.mxu0
    %v604 = vadd.f32 0.0, %v603
    %v605 = vpop.f32.mrf.mxu0
    %606 = vdwg.mxu0
    %v607 = vadd.f32 %v436, %v578
    %v608 = vxor.u32 %v607, 2147483648
    %v609 = vmul.f32 %v608, 1.442695
    %v610 = vpow.pop %v609
    %v611 = vadd.f32 %v610, 1.0
    %v612 = vrcp.pop %v611
    %v613 = vmul.f32 %v611, %v612
    %v614 = vsub.f32 1.0, %v613
    %v615 = vmul.f32 %v612, %v614
    %v616 = vadd.f32 %v612, %v615
    %vm617 = vweird.f32 %v611
    %vm618 = vweird.f32 %v612
    %vm619 = vmor %vm617, %vm618
    %v620 = vsel %vm619, %v612, %v616
    %v621 = vand.u32 2147483647, %v611
    %vm622 = vcmp.eq.f32.partialorder %v621, 8.507059e+37
    %v623 = vand.u32 %v611, 2147483648
    %v624 = vor.u32 1.1754944e-38, %v623
    %v625 = vsel %vm622, %v624, %v620
    %v626 = vmul.f32 1.0, %v625
    %v627 = vadd.f32 %v437, %v591
    %v628 = vxor.u32 %v627, 2147483648
    %v629 = vmul.f32 %v628, 1.442695
    %v630 = vpow.pop %v629
    %v631 = vadd.f32 %v630, 1.0
    %v632 = vrcp.pop %v631
    %v633 = vmul.f32 %v631, %v632
    %v634 = vsub.f32 1.0, %v633
    %v635 = vmul.f32 %v632, %v634
    %v636 = vadd.f32 %v632, %v635
    %vm637 = vweird.f32 %v631
    %vm638 = vweird.f32 %v632
    %vm639 = vmor %vm637, %vm638
    %v640 = vsel %vm639, %v632, %v636
    %v641 = vand.u32 2147483647, %v631
    %vm642 = vcmp.eq.f32.partialorder %v641, 8.507059e+37
    %v643 = vand.u32 %v631, 2147483648
    %v644 = vor.u32 1.1754944e-38, %v643
    %v645 = vsel %vm642, %v644, %v640
    %v646 = vmul.f32 1.0, %v645
    %v648 = vperm.slane %v434, 0
    %v650 = vadd.f32 %v604, %v648
    %v651 = vmul.f32 %v626, %v650
    %v652 = vadd.f32 %v438, %v651
    %v653 = vtanh.pop %v652
    %v654 = vsub.f32 1.0, %v646
    %v655 = vmul.f32 %v654, %v653
    %v656 = vmul.f32 %v646, %v435
    %v657 = vadd.f32 %v655, %v656
    %658 = vst [vmem:[#allocation2] sm:$0xff] %v657
    %v659 = vpack.c.bf16 %v657, %v657
    %660 = vst [vmem:[#allocation4] sm:$0xf] %v659
    %v661 = vld [vmem:[#allocation2] sm:$0xff]
    %s662 = scalar_lea.vmem [#allocation3], 24
    %v663 = vld [vmem:[%s662] sm:$0xff]
    %v664 = vld [vmem:[%s662 + $0x8] sm:$0xff]
    %v665 = vld [vmem:[%s662 + $0x10] sm:$0xff]
    %v666 = vpack.c.bf16 %v661, %v661
    %667 = vmatpush.bf16.msra.mxu0 %v541
    %668 = vmatpush.bf16.msra.mxu0 %v538
    %669 = vmatpush.bf16.msra.mxu0 %v535
    %670 = vmatpush.bf16.msra.mxu0 %v532
    %671 = vmatpush.bf16.msra.mxu0 %v529
    %672 = vmatpush.bf16.msra.mxu0 %v526
    %673 = vmatpush.bf16.msra.mxu0 %v523
    %674 = vmatpush.bf16.msra.mxu0 %v520
    %675 = vmatmul.bf16.gmra.mxu0 %v666
    %v676 = vpop.f32.mrf.mxu0
    %v677 = vadd.f32 0.0, %v676
    %v678 = vpop.f32.mrf.mxu0
    %679 = vdwg.mxu0
    %680 = vmatpush.bf16.msra.mxu0 %v542
    %681 = vmatpush.bf16.msra.mxu0 %v539
    %682 = vmatpush.bf16.msra.mxu0 %v536
    %683 = vmatpush.bf16.msra.mxu0 %v533
    %684 = vmatpush.bf16.msra.mxu0 %v530
    %685 = vmatpush.bf16.msra.mxu0 %v527
    %686 = vmatpush.bf16.msra.mxu0 %v524
    %687 = vmatpush.bf16.msra.mxu0 %v521
    %688 = vmatmul.bf16.gmra.mxu0 %v666
    %v689 = vpop.f32.mrf.mxu0
    %v690 = vadd.f32 0.0, %v689
    %v691 = vpop.f32.mrf.mxu0
    %692 = vdwg.mxu0
    %693 = vmatpush.bf16.msra.mxu0 %v543
    %694 = vmatpush.bf16.msra.mxu0 %v540
    %695 = vmatpush.bf16.msra.mxu0 %v537
    %696 = vmatpush.bf16.msra.mxu0 %v534
    %697 = vmatpush.bf16.msra.mxu0 %v531
    %698 = vmatpush.bf16.msra.mxu0 %v528
    %699 = vmatpush.bf16.msra.mxu0 %v525
    %700 = vmatpush.bf16.msra.mxu0 %v522
    %701 = vmatmul.bf16.gmra.mxu0 %v666
    %v702 = vpop.f32.mrf.mxu0
    %v703 = vadd.f32 0.0, %v702
    %v704 = vpop.f32.mrf.mxu0
    %705 = vdwg.mxu0
    %v706 = vadd.f32 %v663, %v677
    %v707 = vxor.u32 %v706, 2147483648
    %v708 = vmul.f32 %v707, 1.442695
    %v709 = vpow.pop %v708
    %v710 = vadd.f32 %v709, 1.0
    %v711 = vrcp.pop %v710
    %v712 = vmul.f32 %v710, %v711
    %v713 = vsub.f32 1.0, %v712
    %v714 = vmul.f32 %v711, %v713
    %v715 = vadd.f32 %v711, %v714
    %vm716 = vweird.f32 %v710
    %vm717 = vweird.f32 %v711
    %vm718 = vmor %vm716, %vm717
    %v719 = vsel %vm718, %v711, %v715
    %v720 = vand.u32 2147483647, %v710
    %vm721 = vcmp.eq.f32.partialorder %v720, 8.507059e+37
    %v722 = vand.u32 %v710, 2147483648
    %v723 = vor.u32 1.1754944e-38, %v722
    %v724 = vsel %vm721, %v723, %v719
    %v725 = vmul.f32 1.0, %v724
    %v726 = vadd.f32 %v664, %v690
    %v727 = vxor.u32 %v726, 2147483648
    %v728 = vmul.f32 %v727, 1.442695
    %v729 = vpow.pop %v728
    %v730 = vadd.f32 %v729, 1.0
    %v731 = vrcp.pop %v730
    %v732 = vmul.f32 %v730, %v731
    %v733 = vsub.f32 1.0, %v732
    %v734 = vmul.f32 %v731, %v733
    %v735 = vadd.f32 %v731, %v734
    %vm736 = vweird.f32 %v730
    %vm737 = vweird.f32 %v731
    %vm738 = vmor %vm736, %vm737
    %v739 = vsel %vm738, %v731, %v735
    %v740 = vand.u32 2147483647, %v730
    %vm741 = vcmp.eq.f32.partialorder %v740, 8.507059e+37
    %v742 = vand.u32 %v730, 2147483648
    %v743 = vor.u32 1.1754944e-38, %v742
    %v744 = vsel %vm741, %v743, %v739
    %v745 = vmul.f32 1.0, %v744
    %v746 = vadd.f32 %v703, %v648
    %v747 = vmul.f32 %v725, %v746
    %v748 = vadd.f32 %v665, %v747
    %v749 = vtanh.pop %v748
    %v750 = vsub.f32 1.0, %v745
    %v751 = vmul.f32 %v750, %v749
    %v752 = vmul.f32 %v745, %v661
    %v753 = vadd.f32 %v751, %v752
    %754 = vst [vmem:[#allocation2] sm:$0xff] %v753
    %v755 = vpack.c.bf16 %v753, %v753
    %s756 = scalar_lea.vmem [#allocation4], 4
    %757 = vst [vmem:[%s756] sm:$0xf] %v755
    %v758 = vld [vmem:[#allocation2] sm:$0xff]
    %s759 = scalar_lea.vmem [#allocation3], 48
    %v760 = vld [vmem:[%s759] sm:$0xff]
    %v761 = vld [vmem:[%s759 + $0x8] sm:$0xff]
    %v762 = vld [vmem:[%s759 + $0x10] sm:$0xff]
    %v763 = vpack.c.bf16 %v758, %v758
    %764 = vmatpush.bf16.msra.mxu0 %v541
    %765 = vmatpush.bf16.msra.mxu0 %v538
    %766 = vmatpush.bf16.msra.mxu0 %v535
    %767 = vmatpush.bf16.msra.mxu0 %v532
    %768 = vmatpush.bf16.msra.mxu0 %v529
    %769 = vmatpush.bf16.msra.mxu0 %v526
    %770 = vmatpush.bf16.msra.mxu0 %v523
    %771 = vmatpush.bf16.msra.mxu0 %v520
    %772 = vmatmul.bf16.gmra.mxu0 %v763
    %v773 = vpop.f32.mrf.mxu0
    %v774 = vadd.f32 0.0, %v773
    %v775 = vpop.f32.mrf.mxu0
    %776 = vdwg.mxu0
    %777 = vmatpush.bf16.msra.mxu0 %v542
    %778 = vmatpush.bf16.msra.mxu0 %v539
    %779 = vmatpush.bf16.msra.mxu0 %v536
    %780 = vmatpush.bf16.msra.mxu0 %v533
    %781 = vmatpush.bf16.msra.mxu0 %v530
    %782 = vmatpush.bf16.msra.mxu0 %v527
    %783 = vmatpush.bf16.msra.mxu0 %v524
    %784 = vmatpush.bf16.msra.mxu0 %v521
    %785 = vmatmul.bf16.gmra.mxu0 %v763
    %v786 = vpop.f32.mrf.mxu0
    %v787 = vadd.f32 0.0, %v786
    %v788 = vpop.f32.mrf.mxu0
    %789 = vdwg.mxu0
    %790 = vmatpush.bf16.msra.mxu0 %v543
    %791 = vmatpush.bf16.msra.mxu0 %v540
    %792 = vmatpush.bf16.msra.mxu0 %v537
    %793 = vmatpush.bf16.msra.mxu0 %v534
    %794 = vmatpush.bf16.msra.mxu0 %v531
    %795 = vmatpush.bf16.msra.mxu0 %v528
    %796 = vmatpush.bf16.msra.mxu0 %v525
    %797 = vmatpush.bf16.msra.mxu0 %v522
    %798 = vmatmul.bf16.gmra.mxu0 %v763
    %v799 = vpop.f32.mrf.mxu0
    %v800 = vadd.f32 0.0, %v799
    %v801 = vpop.f32.mrf.mxu0
    %802 = vdwg.mxu0
    %v803 = vadd.f32 %v760, %v774
    %v804 = vxor.u32 %v803, 2147483648
    %v805 = vmul.f32 %v804, 1.442695
    %v806 = vpow.pop %v805
    %v807 = vadd.f32 %v806, 1.0
    %v808 = vrcp.pop %v807
    %v809 = vmul.f32 %v807, %v808
    %v810 = vsub.f32 1.0, %v809
    %v811 = vmul.f32 %v808, %v810
    %v812 = vadd.f32 %v808, %v811
    %vm813 = vweird.f32 %v807
    %vm814 = vweird.f32 %v808
    %vm815 = vmor %vm813, %vm814
    %v816 = vsel %vm815, %v808, %v812
    %v817 = vand.u32 2147483647, %v807
    %vm818 = vcmp.eq.f32.partialorder %v817, 8.507059e+37
    %v819 = vand.u32 %v807, 2147483648
    %v820 = vor.u32 1.1754944e-38, %v819
    %v821 = vsel %vm818, %v820, %v816
    %v822 = vmul.f32 1.0, %v821
    %v823 = vadd.f32 %v761, %v787
    %v824 = vxor.u32 %v823, 2147483648
    %v825 = vmul.f32 %v824, 1.442695
    %v826 = vpow.pop %v825
    %v827 = vadd.f32 %v826, 1.0
    %v828 = vrcp.pop %v827
    %v829 = vmul.f32 %v827, %v828
    %v830 = vsub.f32 1.0, %v829
    %v831 = vmul.f32 %v828, %v830
    %v832 = vadd.f32 %v828, %v831
    %vm833 = vweird.f32 %v827
    %vm834 = vweird.f32 %v828
    %vm835 = vmor %vm833, %vm834
    %v836 = vsel %vm835, %v828, %v832
    %v837 = vand.u32 2147483647, %v827
    %vm838 = vcmp.eq.f32.partialorder %v837, 8.507059e+37
    %v839 = vand.u32 %v827, 2147483648
    %v840 = vor.u32 1.1754944e-38, %v839
    %v841 = vsel %vm838, %v840, %v836
    %v842 = vmul.f32 1.0, %v841
    %v843 = vadd.f32 %v800, %v648
    %v844 = vmul.f32 %v822, %v843
    %v845 = vadd.f32 %v762, %v844
    %v846 = vtanh.pop %v845
    %v847 = vsub.f32 1.0, %v842
    %v848 = vmul.f32 %v847, %v846
    %v849 = vmul.f32 %v842, %v758
    %v850 = vadd.f32 %v848, %v849
    %851 = vst [vmem:[#allocation2] sm:$0xff] %v850
    %v852 = vpack.c.bf16 %v850, %v850
    %s853 = scalar_lea.vmem [#allocation4], 8
    %854 = vst [vmem:[%s853] sm:$0xf] %v852
    %v855 = vld [vmem:[#allocation2] sm:$0xff]
    %s856 = scalar_lea.vmem [#allocation3], 72
    %v857 = vld [vmem:[%s856] sm:$0xff]
    %v858 = vld [vmem:[%s856 + $0x8] sm:$0xff]
    %v859 = vld [vmem:[%s856 + $0x10] sm:$0xff]
    %v860 = vpack.c.bf16 %v855, %v855
    %861 = vmatpush.bf16.msra.mxu0 %v541
    %862 = vmatpush.bf16.msra.mxu0 %v538
    %863 = vmatpush.bf16.msra.mxu0 %v535
    %864 = vmatpush.bf16.msra.mxu0 %v532
    %865 = vmatpush.bf16.msra.mxu0 %v529
    %866 = vmatpush.bf16.msra.mxu0 %v526
    %867 = vmatpush.bf16.msra.mxu0 %v523
    %868 = vmatpush.bf16.msra.mxu0 %v520
    %869 = vmatmul.bf16.gmra.mxu0 %v860
    %v870 = vpop.f32.mrf.mxu0
    %v871 = vadd.f32 0.0, %v870
    %v872 = vpop.f32.mrf.mxu0
    %873 = vdwg.mxu0
    %874 = vmatpush.bf16.msra.mxu0 %v542
    %875 = vmatpush.bf16.msra.mxu0 %v539
    %876 = vmatpush.bf16.msra.mxu0 %v536
    %877 = vmatpush.bf16.msra.mxu0 %v533
    %878 = vmatpush.bf16.msra.mxu0 %v530
    %879 = vmatpush.bf16.msra.mxu0 %v527
    %880 = vmatpush.bf16.msra.mxu0 %v524
    %881 = vmatpush.bf16.msra.mxu0 %v521
    %882 = vmatmul.bf16.gmra.mxu0 %v860
    %v883 = vpop.f32.mrf.mxu0
    %v884 = vadd.f32 0.0, %v883
    %v885 = vpop.f32.mrf.mxu0
    %886 = vdwg.mxu0
    %887 = vmatpush.bf16.msra.mxu0 %v543
    %888 = vmatpush.bf16.msra.mxu0 %v540
    %889 = vmatpush.bf16.msra.mxu0 %v537
    %890 = vmatpush.bf16.msra.mxu0 %v534
    %891 = vmatpush.bf16.msra.mxu0 %v531
    %892 = vmatpush.bf16.msra.mxu0 %v528
    %893 = vmatpush.bf16.msra.mxu0 %v525
    %894 = vmatpush.bf16.msra.mxu0 %v522
    %895 = vmatmul.bf16.gmra.mxu0 %v860
    %v896 = vpop.f32.mrf.mxu0
    %v897 = vadd.f32 0.0, %v896
    %v898 = vpop.f32.mrf.mxu0
    %899 = vdwg.mxu0
    %v900 = vadd.f32 %v857, %v871
    %v901 = vxor.u32 %v900, 2147483648
    %v902 = vmul.f32 %v901, 1.442695
    %v903 = vpow.pop %v902
    %v904 = vadd.f32 %v903, 1.0
    %v905 = vrcp.pop %v904
    %v906 = vmul.f32 %v904, %v905
    %v907 = vsub.f32 1.0, %v906
    %v908 = vmul.f32 %v905, %v907
    %v909 = vadd.f32 %v905, %v908
    %vm910 = vweird.f32 %v904
    %vm911 = vweird.f32 %v905
    %vm912 = vmor %vm910, %vm911
    %v913 = vsel %vm912, %v905, %v909
    %v914 = vand.u32 2147483647, %v904
    %vm915 = vcmp.eq.f32.partialorder %v914, 8.507059e+37
    %v916 = vand.u32 %v904, 2147483648
    %v917 = vor.u32 1.1754944e-38, %v916
    %v918 = vsel %vm915, %v917, %v913
    %v919 = vmul.f32 1.0, %v918
    %v920 = vadd.f32 %v858, %v884
    %v921 = vxor.u32 %v920, 2147483648
    %v922 = vmul.f32 %v921, 1.442695
    %v923 = vpow.pop %v922
    %v924 = vadd.f32 %v923, 1.0
    %v925 = vrcp.pop %v924
    %v926 = vmul.f32 %v924, %v925
    %v927 = vsub.f32 1.0, %v926
    %v928 = vmul.f32 %v925, %v927
    %v929 = vadd.f32 %v925, %v928
    %vm930 = vweird.f32 %v924
    %vm931 = vweird.f32 %v925
    %vm932 = vmor %vm930, %vm931
    %v933 = vsel %vm932, %v925, %v929
    %v934 = vand.u32 2147483647, %v924
    %vm935 = vcmp.eq.f32.partialorder %v934, 8.507059e+37
    %v936 = vand.u32 %v924, 2147483648
    %v937 = vor.u32 1.1754944e-38, %v936
    %v938 = vsel %vm935, %v937, %v933
    %v939 = vmul.f32 1.0, %v938
    %v940 = vadd.f32 %v897, %v648
    %v941 = vmul.f32 %v919, %v940
    %v942 = vadd.f32 %v859, %v941
    %v943 = vtanh.pop %v942
    %v944 = vsub.f32 1.0, %v939
    %v945 = vmul.f32 %v944, %v943
    %v946 = vmul.f32 %v939, %v855
    %v947 = vadd.f32 %v945, %v946
    %948 = vst [vmem:[#allocation2] sm:$0xff] %v947
    %v949 = vpack.c.bf16 %v947, %v947
    %s950 = scalar_lea.vmem [#allocation4], 12
    %951 = vst [vmem:[%s950] sm:$0xf] %v949
    %v952 = vld [vmem:[#allocation2] sm:$0xff]
    %s953 = scalar_lea.vmem [#allocation3], 96
    %v954 = vld [vmem:[%s953] sm:$0xff]
    %v955 = vld [vmem:[%s953 + $0x8] sm:$0xff]
    %v956 = vld [vmem:[%s953 + $0x10] sm:$0xff]
    %v957 = vpack.c.bf16 %v952, %v952
    %958 = vmatpush.bf16.msra.mxu0 %v541
    %959 = vmatpush.bf16.msra.mxu0 %v538
    %960 = vmatpush.bf16.msra.mxu0 %v535
    %961 = vmatpush.bf16.msra.mxu0 %v532
    %962 = vmatpush.bf16.msra.mxu0 %v529
    %963 = vmatpush.bf16.msra.mxu0 %v526
    %964 = vmatpush.bf16.msra.mxu0 %v523
    %965 = vmatpush.bf16.msra.mxu0 %v520
    %966 = vmatmul.bf16.gmra.mxu0 %v957
    %v967 = vpop.f32.mrf.mxu0
    %v968 = vadd.f32 0.0, %v967
    %v969 = vpop.f32.mrf.mxu0
    %970 = vdwg.mxu0
    %971 = vmatpush.bf16.msra.mxu0 %v542
    %972 = vmatpush.bf16.msra.mxu0 %v539
    %973 = vmatpush.bf16.msra.mxu0 %v536
    %974 = vmatpush.bf16.msra.mxu0 %v533
    %975 = vmatpush.bf16.msra.mxu0 %v530
    %976 = vmatpush.bf16.msra.mxu0 %v527
    %977 = vmatpush.bf16.msra.mxu0 %v524
    %978 = vmatpush.bf16.msra.mxu0 %v521
    %979 = vmatmul.bf16.gmra.mxu0 %v957
    %v980 = vpop.f32.mrf.mxu0
    %v981 = vadd.f32 0.0, %v980
    %v982 = vpop.f32.mrf.mxu0
    %983 = vdwg.mxu0
    %984 = vmatpush.bf16.msra.mxu0 %v543
    %985 = vmatpush.bf16.msra.mxu0 %v540
    %986 = vmatpush.bf16.msra.mxu0 %v537
    %987 = vmatpush.bf16.msra.mxu0 %v534
    %988 = vmatpush.bf16.msra.mxu0 %v531
    %989 = vmatpush.bf16.msra.mxu0 %v528
    %990 = vmatpush.bf16.msra.mxu0 %v525
    %991 = vmatpush.bf16.msra.mxu0 %v522
    %992 = vmatmul.bf16.gmra.mxu0 %v957
    %v993 = vpop.f32.mrf.mxu0
    %v994 = vadd.f32 0.0, %v993
    %v995 = vpop.f32.mrf.mxu0
    %996 = vdwg.mxu0
    %v997 = vadd.f32 %v954, %v968
    %v998 = vxor.u32 %v997, 2147483648
    %v999 = vmul.f32 %v998, 1.442695
    %v1000 = vpow.pop %v999
    %v1001 = vadd.f32 %v1000, 1.0
    %v1002 = vrcp.pop %v1001
    %v1003 = vmul.f32 %v1001, %v1002
    %v1004 = vsub.f32 1.0, %v1003
    %v1005 = vmul.f32 %v1002, %v1004
    %v1006 = vadd.f32 %v1002, %v1005
    %vm1007 = vweird.f32 %v1001
    %vm1008 = vweird.f32 %v1002
    %vm1009 = vmor %vm1007, %vm1008
    %v1010 = vsel %vm1009, %v1002, %v1006
    %v1011 = vand.u32 2147483647, %v1001
    %vm1012 = vcmp.eq.f32.partialorder %v1011, 8.507059e+37
    %v1013 = vand.u32 %v1001, 2147483648
    %v1014 = vor.u32 1.1754944e-38, %v1013
    %v1015 = vsel %vm1012, %v1014, %v1010
    %v1016 = vmul.f32 1.0, %v1015
    %v1017 = vadd.f32 %v955, %v981
    %v1018 = vxor.u32 %v1017, 2147483648
    %v1019 = vmul.f32 %v1018, 1.442695
    %v1020 = vpow.pop %v1019
    %v1021 = vadd.f32 %v1020, 1.0
    %v1022 = vrcp.pop %v1021
    %v1023 = vmul.f32 %v1021, %v1022
    %v1024 = vsub.f32 1.0, %v1023
    %v1025 = vmul.f32 %v1022, %v1024
    %v1026 = vadd.f32 %v1022, %v1025
    %vm1027 = vweird.f32 %v1021
    %vm1028 = vweird.f32 %v1022
    %vm1029 = vmor %vm1027, %vm1028
    %v1030 = vsel %vm1029, %v1022, %v1026
    %v1031 = vand.u32 2147483647, %v1021
    %vm1032 = vcmp.eq.f32.partialorder %v1031, 8.507059e+37
    %v1033 = vand.u32 %v1021, 2147483648
    %v1034 = vor.u32 1.1754944e-38, %v1033
    %v1035 = vsel %vm1032, %v1034, %v1030
    %v1036 = vmul.f32 1.0, %v1035
    %v1037 = vadd.f32 %v994, %v648
    %v1038 = vmul.f32 %v1016, %v1037
    %v1039 = vadd.f32 %v956, %v1038
    %v1040 = vtanh.pop %v1039
    %v1041 = vsub.f32 1.0, %v1036
    %v1042 = vmul.f32 %v1041, %v1040
    %v1043 = vmul.f32 %v1036, %v952
    %v1044 = vadd.f32 %v1042, %v1043
    %1045 = vst [vmem:[#allocation2] sm:$0xff] %v1044
    %v1046 = vpack.c.bf16 %v1044, %v1044
    %s1047 = scalar_lea.vmem [#allocation4], 16
    %1048 = vst [vmem:[%s1047] sm:$0xf] %v1046
    %v1049 = vld [vmem:[#allocation2] sm:$0xff]
    %s1050 = scalar_lea.vmem [#allocation3], 120
    %v1051 = vld [vmem:[%s1050] sm:$0xff]
    %v1052 = vld [vmem:[%s1050 + $0x8] sm:$0xff]
    %v1053 = vld [vmem:[%s1050 + $0x10] sm:$0xff]
    %v1054 = vpack.c.bf16 %v1049, %v1049
    %1055 = vmatpush.bf16.msra.mxu0 %v541
    %1056 = vmatpush.bf16.msra.mxu0 %v538
    %1057 = vmatpush.bf16.msra.mxu0 %v535
    %1058 = vmatpush.bf16.msra.mxu0 %v532
    %1059 = vmatpush.bf16.msra.mxu0 %v529
    %1060 = vmatpush.bf16.msra.mxu0 %v526
    %1061 = vmatpush.bf16.msra.mxu0 %v523
    %1062 = vmatpush.bf16.msra.mxu0 %v520
    %1063 = vmatmul.bf16.gmra.mxu0 %v1054
    %v1064 = vpop.f32.mrf.mxu0
    %v1065 = vadd.f32 0.0, %v1064
    %v1066 = vpop.f32.mrf.mxu0
    %1067 = vdwg.mxu0
    %1068 = vmatpush.bf16.msra.mxu0 %v542
    %1069 = vmatpush.bf16.msra.mxu0 %v539
    %1070 = vmatpush.bf16.msra.mxu0 %v536
    %1071 = vmatpush.bf16.msra.mxu0 %v533
    %1072 = vmatpush.bf16.msra.mxu0 %v530
    %1073 = vmatpush.bf16.msra.mxu0 %v527
    %1074 = vmatpush.bf16.msra.mxu0 %v524
    %1075 = vmatpush.bf16.msra.mxu0 %v521
    %1076 = vmatmul.bf16.gmra.mxu0 %v1054
    %v1077 = vpop.f32.mrf.mxu0
    %v1078 = vadd.f32 0.0, %v1077
    %v1079 = vpop.f32.mrf.mxu0
    %1080 = vdwg.mxu0
    %1081 = vmatpush.bf16.msra.mxu0 %v543
    %1082 = vmatpush.bf16.msra.mxu0 %v540
    %1083 = vmatpush.bf16.msra.mxu0 %v537
    %1084 = vmatpush.bf16.msra.mxu0 %v534
    %1085 = vmatpush.bf16.msra.mxu0 %v531
    %1086 = vmatpush.bf16.msra.mxu0 %v528
    %1087 = vmatpush.bf16.msra.mxu0 %v525
    %1088 = vmatpush.bf16.msra.mxu0 %v522
    %1089 = vmatmul.bf16.gmra.mxu0 %v1054
    %v1090 = vpop.f32.mrf.mxu0
    %v1091 = vadd.f32 0.0, %v1090
    %v1092 = vpop.f32.mrf.mxu0
    %1093 = vdwg.mxu0
    %v1094 = vadd.f32 %v1051, %v1065
    %v1095 = vxor.u32 %v1094, 2147483648
    %v1096 = vmul.f32 %v1095, 1.442695
    %v1097 = vpow.pop %v1096
    %v1098 = vadd.f32 %v1097, 1.0
    %v1099 = vrcp.pop %v1098
    %v1100 = vmul.f32 %v1098, %v1099
    %v1101 = vsub.f32 1.0, %v1100
    %v1102 = vmul.f32 %v1099, %v1101
    %v1103 = vadd.f32 %v1099, %v1102
    %vm1104 = vweird.f32 %v1098
    %vm1105 = vweird.f32 %v1099
    %vm1106 = vmor %vm1104, %vm1105
    %v1107 = vsel %vm1106, %v1099, %v1103
    %v1108 = vand.u32 2147483647, %v1098
    %vm1109 = vcmp.eq.f32.partialorder %v1108, 8.507059e+37
    %v1110 = vand.u32 %v1098, 2147483648
    %v1111 = vor.u32 1.1754944e-38, %v1110
    %v1112 = vsel %vm1109, %v1111, %v1107
    %v1113 = vmul.f32 1.0, %v1112
    %v1114 = vadd.f32 %v1052, %v1078
    %v1115 = vxor.u32 %v1114, 2147483648
    %v1116 = vmul.f32 %v1115, 1.442695
    %v1117 = vpow.pop %v1116
    %v1118 = vadd.f32 %v1117, 1.0
    %v1119 = vrcp.pop %v1118
    %v1120 = vmul.f32 %v1118, %v1119
    %v1121 = vsub.f32 1.0, %v1120
    %v1122 = vmul.f32 %v1119, %v1121
    %v1123 = vadd.f32 %v1119, %v1122
    %vm1124 = vweird.f32 %v1118
    %vm1125 = vweird.f32 %v1119
    %vm1126 = vmor %vm1124, %vm1125
    %v1127 = vsel %vm1126, %v1119, %v1123
    %v1128 = vand.u32 2147483647, %v1118
    %vm1129 = vcmp.eq.f32.partialorder %v1128, 8.507059e+37
    %v1130 = vand.u32 %v1118, 2147483648
    %v1131 = vor.u32 1.1754944e-38, %v1130
    %v1132 = vsel %vm1129, %v1131, %v1127
    %v1133 = vmul.f32 1.0, %v1132
    %v1134 = vadd.f32 %v1091, %v648
    %v1135 = vmul.f32 %v1113, %v1134
    %v1136 = vadd.f32 %v1053, %v1135
    %v1137 = vtanh.pop %v1136
    %v1138 = vsub.f32 1.0, %v1133
    %v1139 = vmul.f32 %v1138, %v1137
    %v1140 = vmul.f32 %v1133, %v1049
    %v1141 = vadd.f32 %v1139, %v1140
    %1142 = vst [vmem:[#allocation2] sm:$0xff] %v1141
    %v1143 = vpack.c.bf16 %v1141, %v1141
    %s1144 = scalar_lea.vmem [#allocation4], 20
    %1145 = vst [vmem:[%s1144] sm:$0xf] %v1143
    %v1146 = vld [vmem:[#allocation2] sm:$0xff]
    %s1147 = scalar_lea.vmem [#allocation3], 144
    %v1148 = vld [vmem:[%s1147] sm:$0xff]
    %v1149 = vld [vmem:[%s1147 + $0x8] sm:$0xff]
    %v1150 = vld [vmem:[%s1147 + $0x10] sm:$0xff]
    %v1151 = vpack.c.bf16 %v1146, %v1146
    %1152 = vmatpush.bf16.msra.mxu0 %v541
    %1153 = vmatpush.bf16.msra.mxu0 %v538
    %1154 = vmatpush.bf16.msra.mxu0 %v535
    %1155 = vmatpush.bf16.msra.mxu0 %v532
    %1156 = vmatpush.bf16.msra.mxu0 %v529
    %1157 = vmatpush.bf16.msra.mxu0 %v526
    %1158 = vmatpush.bf16.msra.mxu0 %v523
    %1159 = vmatpush.bf16.msra.mxu0 %v520
    %1160 = vmatmul.bf16.gmra.mxu0 %v1151
    %v1161 = vpop.f32.mrf.mxu0
    %v1162 = vadd.f32 0.0, %v1161
    %v1163 = vpop.f32.mrf.mxu0
    %1164 = vdwg.mxu0
    %1165 = vmatpush.bf16.msra.mxu0 %v542
    %1166 = vmatpush.bf16.msra.mxu0 %v539
    %1167 = vmatpush.bf16.msra.mxu0 %v536
    %1168 = vmatpush.bf16.msra.mxu0 %v533
    %1169 = vmatpush.bf16.msra.mxu0 %v530
    %1170 = vmatpush.bf16.msra.mxu0 %v527
    %1171 = vmatpush.bf16.msra.mxu0 %v524
    %1172 = vmatpush.bf16.msra.mxu0 %v521
    %1173 = vmatmul.bf16.gmra.mxu0 %v1151
    %v1174 = vpop.f32.mrf.mxu0
    %v1175 = vadd.f32 0.0, %v1174
    %v1176 = vpop.f32.mrf.mxu0
    %1177 = vdwg.mxu0
    %1178 = vmatpush.bf16.msra.mxu0 %v543
    %1179 = vmatpush.bf16.msra.mxu0 %v540
    %1180 = vmatpush.bf16.msra.mxu0 %v537
    %1181 = vmatpush.bf16.msra.mxu0 %v534
    %1182 = vmatpush.bf16.msra.mxu0 %v531
    %1183 = vmatpush.bf16.msra.mxu0 %v528
    %1184 = vmatpush.bf16.msra.mxu0 %v525
    %1185 = vmatpush.bf16.msra.mxu0 %v522
    %1186 = vmatmul.bf16.gmra.mxu0 %v1151
    %v1187 = vpop.f32.mrf.mxu0
    %v1188 = vadd.f32 0.0, %v1187
    %v1189 = vpop.f32.mrf.mxu0
    %1190 = vdwg.mxu0
    %v1191 = vadd.f32 %v1148, %v1162
    %v1192 = vxor.u32 %v1191, 2147483648
    %v1193 = vmul.f32 %v1192, 1.442695
    %v1194 = vpow.pop %v1193
    %v1195 = vadd.f32 %v1194, 1.0
    %v1196 = vrcp.pop %v1195
    %v1197 = vmul.f32 %v1195, %v1196
    %v1198 = vsub.f32 1.0, %v1197
    %v1199 = vmul.f32 %v1196, %v1198
    %v1200 = vadd.f32 %v1196, %v1199
    %vm1201 = vweird.f32 %v1195
    %vm1202 = vweird.f32 %v1196
    %vm1203 = vmor %vm1201, %vm1202
    %v1204 = vsel %vm1203, %v1196, %v1200
    %v1205 = vand.u32 2147483647, %v1195
    %vm1206 = vcmp.eq.f32.partialorder %v1205, 8.507059e+37
    %v1207 = vand.u32 %v1195, 2147483648
    %v1208 = vor.u32 1.1754944e-38, %v1207
    %v1209 = vsel %vm1206, %v1208, %v1204
    %v1210 = vmul.f32 1.0, %v1209
    %v1211 = vadd.f32 %v1149, %v1175
    %v1212 = vxor.u32 %v1211, 2147483648
    %v1213 = vmul.f32 %v1212, 1.442695
    %v1214 = vpow.pop %v1213
    %v1215 = vadd.f32 %v1214, 1.0
    %v1216 = vrcp.pop %v1215
    %v1217 = vmul.f32 %v1215, %v1216
    %v1218 = vsub.f32 1.0, %v1217
    %v1219 = vmul.f32 %v1216, %v1218
    %v1220 = vadd.f32 %v1216, %v1219
    %vm1221 = vweird.f32 %v1215
    %vm1222 = vweird.f32 %v1216
    %vm1223 = vmor %vm1221, %vm1222
    %v1224 = vsel %vm1223, %v1216, %v1220
    %v1225 = vand.u32 2147483647, %v1215
    %vm1226 = vcmp.eq.f32.partialorder %v1225, 8.507059e+37
    %v1227 = vand.u32 %v1215, 2147483648
    %v1228 = vor.u32 1.1754944e-38, %v1227
    %v1229 = vsel %vm1226, %v1228, %v1224
    %v1230 = vmul.f32 1.0, %v1229
    %v1231 = vadd.f32 %v1188, %v648
    %v1232 = vmul.f32 %v1210, %v1231
    %v1233 = vadd.f32 %v1150, %v1232
    %v1234 = vtanh.pop %v1233
    %v1235 = vsub.f32 1.0, %v1230
    %v1236 = vmul.f32 %v1235, %v1234
    %v1237 = vmul.f32 %v1230, %v1146
    %v1238 = vadd.f32 %v1236, %v1237
    %1239 = vst [vmem:[#allocation2] sm:$0xff] %v1238
    %v1240 = vpack.c.bf16 %v1238, %v1238
    %s1241 = scalar_lea.vmem [#allocation4], 24
    %1242 = vst [vmem:[%s1241] sm:$0xf] %v1240
    %v1243 = vld [vmem:[#allocation2] sm:$0xff]
    %s1244 = scalar_lea.vmem [#allocation3], 168
    %v1245 = vld [vmem:[%s1244] sm:$0xff]
    %v1246 = vld [vmem:[%s1244 + $0x8] sm:$0xff]
    %v1247 = vld [vmem:[%s1244 + $0x10] sm:$0xff]
    %v1248 = vpack.c.bf16 %v1243, %v1243
    %1249 = vmatpush.bf16.msra.mxu0 %v541
    %1250 = vmatpush.bf16.msra.mxu0 %v538
    %1251 = vmatpush.bf16.msra.mxu0 %v535
    %1252 = vmatpush.bf16.msra.mxu0 %v532
    %1253 = vmatpush.bf16.msra.mxu0 %v529
    %1254 = vmatpush.bf16.msra.mxu0 %v526
    %1255 = vmatpush.bf16.msra.mxu0 %v523
    %1256 = vmatpush.bf16.msra.mxu0 %v520
    %1257 = vmatmul.bf16.gmra.mxu0 %v1248
    %v1258 = vpop.f32.mrf.mxu0
    %v1259 = vadd.f32 0.0, %v1258
    %v1260 = vpop.f32.mrf.mxu0
    %1261 = vdwg.mxu0
    %1262 = vmatpush.bf16.msra.mxu0 %v542
    %1263 = vmatpush.bf16.msra.mxu0 %v539
    %1264 = vmatpush.bf16.msra.mxu0 %v536
    %1265 = vmatpush.bf16.msra.mxu0 %v533
    %1266 = vmatpush.bf16.msra.mxu0 %v530
    %1267 = vmatpush.bf16.msra.mxu0 %v527
    %1268 = vmatpush.bf16.msra.mxu0 %v524
    %1269 = vmatpush.bf16.msra.mxu0 %v521
    %1270 = vmatmul.bf16.gmra.mxu0 %v1248
    %v1271 = vpop.f32.mrf.mxu0
    %v1272 = vadd.f32 0.0, %v1271
    %v1273 = vpop.f32.mrf.mxu0
    %1274 = vdwg.mxu0
    %1275 = vmatpush.bf16.msra.mxu0 %v543
    %1276 = vmatpush.bf16.msra.mxu0 %v540
    %1277 = vmatpush.bf16.msra.mxu0 %v537
    %1278 = vmatpush.bf16.msra.mxu0 %v534
    %1279 = vmatpush.bf16.msra.mxu0 %v531
    %1280 = vmatpush.bf16.msra.mxu0 %v528
    %1281 = vmatpush.bf16.msra.mxu0 %v525
    %1282 = vmatpush.bf16.msra.mxu0 %v522
    %1283 = vmatmul.bf16.gmra.mxu0 %v1248
    %v1284 = vpop.f32.mrf.mxu0
    %v1285 = vadd.f32 0.0, %v1284
    %v1286 = vpop.f32.mrf.mxu0
    %1287 = vdwg.mxu0
    %v1288 = vadd.f32 %v1245, %v1259
    %v1289 = vxor.u32 %v1288, 2147483648
    %v1290 = vmul.f32 %v1289, 1.442695
    %v1291 = vpow.pop %v1290
    %v1292 = vadd.f32 %v1291, 1.0
    %v1293 = vrcp.pop %v1292
    %v1294 = vmul.f32 %v1292, %v1293
    %v1295 = vsub.f32 1.0, %v1294
    %v1296 = vmul.f32 %v1293, %v1295
    %v1297 = vadd.f32 %v1293, %v1296
    %vm1298 = vweird.f32 %v1292
    %vm1299 = vweird.f32 %v1293
    %vm1300 = vmor %vm1298, %vm1299
    %v1301 = vsel %vm1300, %v1293, %v1297
    %v1302 = vand.u32 2147483647, %v1292
    %vm1303 = vcmp.eq.f32.partialorder %v1302, 8.507059e+37
    %v1304 = vand.u32 %v1292, 2147483648
    %v1305 = vor.u32 1.1754944e-38, %v1304
    %v1306 = vsel %vm1303, %v1305, %v1301
    %v1307 = vmul.f32 1.0, %v1306
    %v1308 = vadd.f32 %v1246, %v1272
    %v1309 = vxor.u32 %v1308, 2147483648
    %v1310 = vmul.f32 %v1309, 1.442695
    %v1311 = vpow.pop %v1310
    %v1312 = vadd.f32 %v1311, 1.0
    %v1313 = vrcp.pop %v1312
    %v1314 = vmul.f32 %v1312, %v1313
    %v1315 = vsub.f32 1.0, %v1314
    %v1316 = vmul.f32 %v1313, %v1315
    %v1317 = vadd.f32 %v1313, %v1316
    %vm1318 = vweird.f32 %v1312
    %vm1319 = vweird.f32 %v1313
    %vm1320 = vmor %vm1318, %vm1319
    %v1321 = vsel %vm1320, %v1313, %v1317
    %v1322 = vand.u32 2147483647, %v1312
    %vm1323 = vcmp.eq.f32.partialorder %v1322, 8.507059e+37
    %v1324 = vand.u32 %v1312, 2147483648
    %v1325 = vor.u32 1.1754944e-38, %v1324
    %v1326 = vsel %vm1323, %v1325, %v1321
    %v1327 = vmul.f32 1.0, %v1326
    %v1328 = vadd.f32 %v1285, %v648
    %v1329 = vmul.f32 %v1307, %v1328
    %v1330 = vadd.f32 %v1247, %v1329
    %v1331 = vtanh.pop %v1330
    %v1332 = vsub.f32 1.0, %v1327
    %v1333 = vmul.f32 %v1332, %v1331
    %v1334 = vmul.f32 %v1327, %v1243
    %v1335 = vadd.f32 %v1333, %v1334
    %1336 = vst [vmem:[#allocation2] sm:$0xff] %v1335
    %v1337 = vpack.c.bf16 %v1335, %v1335
    %s1338 = scalar_lea.vmem [#allocation4], 28
    %1339 = vst [vmem:[%s1338] sm:$0xf] %v1337
    %v1340 = vld [vmem:[#allocation4] sm:$0xf]
    %v1341 = vld [vmem:[#allocation4 + $0x4] sm:$0xf]
    %v1342 = vld [vmem:[#allocation4 + $0x8] sm:$0xf]
    %v1343 = vld [vmem:[#allocation4 + $0xc] sm:$0xf]
    %v1344 = vld [vmem:[#allocation4 + $0x10] sm:$0xf]
    %v1345 = vld [vmem:[#allocation4 + $0x14] sm:$0xf]
    %v1346 = vld [vmem:[#allocation4 + $0x18] sm:$0xf]
    %v1347 = vld [vmem:[#allocation4 + $0x1c] sm:$0xf]
    %v1348 = vld [vmem:[#allocation5] sm:$0xff]
    %v1349 = vld [vmem:[#allocation5 + $0x8] sm:$0xf]
    %v1350 = vld [vmem:[#allocation5 + $0xc] sm:$0xff]
    %v1351 = vld [vmem:[#allocation5 + $0x14] sm:$0xf]
    %v1352 = vld [vmem:[#allocation5 + $0x18] sm:$0xff]
    %v1353 = vld [vmem:[#allocation5 + $0x20] sm:$0xf]
    %v1354 = vld [vmem:[#allocation5 + $0x24] sm:$0xff]
    %v1355 = vld [vmem:[#allocation5 + $0x2c] sm:$0xf]
    %v1356 = vld [vmem:[#allocation5 + $0x30] sm:$0xff]
    %v1357 = vld [vmem:[#allocation5 + $0x38] sm:$0xf]
    %v1358 = vld [vmem:[#allocation5 + $0x3c] sm:$0xff]
    %v1359 = vld [vmem:[#allocation5 + $0x44] sm:$0xf]
    %v1360 = vld [vmem:[#allocation5 + $0x48] sm:$0xff]
    %v1361 = vld [vmem:[#allocation5 + $0x50] sm:$0xf]
    %v1362 = vld [vmem:[#allocation5 + $0x54] sm:$0xff]
    %v1363 = vld [vmem:[#allocation5 + $0x5c] sm:$0xf]
    %v1364 = vld [vmem:[#allocation5 + $0x60] sm:$0xff]
    %v1365 = vld [vmem:[#allocation5 + $0x68] sm:$0xf]
    %v1366 = vld [vmem:[#allocation5 + $0x6c] sm:$0xff]
    %v1367 = vld [vmem:[#allocation5 + $0x74] sm:$0xf]
    %v1368 = vld [vmem:[#allocation5 + $0x78] sm:$0xff]
    %v1369 = vld [vmem:[#allocation5 + $0x80] sm:$0xf]
    %v1370 = vld [vmem:[#allocation5 + $0x84] sm:$0xff]
    %v1371 = vld [vmem:[#allocation5 + $0x8c] sm:$0xf]
    %v1372 = vld [vmem:[#allocation5 + $0x90] sm:$0xff]
    %v1373 = vld [vmem:[#allocation5 + $0x98] sm:$0xf]
    %v1374 = vld [vmem:[#allocation5 + $0x9c] sm:$0xff]
    %v1375 = vld [vmem:[#allocation5 + $0xa4] sm:$0xf]
    %v1376 = vld [vmem:[#allocation5 + $0xa8] sm:$0xff]
    %v1377 = vld [vmem:[#allocation5 + $0xb0] sm:$0xf]
    %v1378 = vld [vmem:[#allocation5 + $0xb4] sm:$0xff]
    %v1379 = vld [vmem:[#allocation5 + $0xbc] sm:$0xf]
    %v1380 = vld [vmem:[%s7] sm:$0x7]
    %v1382 = vperm.slane %v1380, 0
    %v1383 = vperm.slane %v1380, 1
    %v1384 = vperm.slane %v1380, 2
    %v1396 = vunpack.c.l.b16 %v1340
    %v1397 = vunpack.c.l.b16 %v1341
    %v1398 = vunpack.c.l.b16 %v1342
    %v1399 = vunpack.c.l.b16 %v1343
    %v1400 = vunpack.c.l.b16 %v1344
    %v1401 = vunpack.c.l.b16 %v1345
    %v1402 = vunpack.c.l.b16 %v1346
    %v1403 = vunpack.c.l.b16 %v1347
    %v1404 = vpack.c.b16 %v1397, %v1396
    %v1405 = vpack.c.b16 %v1399, %v1398
    %v1406 = vpack.c.b16 %v1401, %v1400
    %v1407 = vpack.c.b16 %v1403, %v1402
    %v1444 = vunpack.c.l.b16 %v1348
    %v1445 = vunpack.c.h.b16 %v1348
    %v1446 = vunpack.c.l.b16 %v1349
    %v1447 = vunpack.c.l.b16 %v1350
    %v1448 = vunpack.c.h.b16 %v1350
    %v1449 = vunpack.c.l.b16 %v1351
    %v1450 = vunpack.c.l.b16 %v1352
    %v1451 = vunpack.c.h.b16 %v1352
    %v1452 = vunpack.c.l.b16 %v1353
    %v1453 = vunpack.c.l.b16 %v1354
    %v1454 = vunpack.c.h.b16 %v1354
    %v1455 = vunpack.c.l.b16 %v1355
    %v1456 = vunpack.c.l.b16 %v1356
    %v1457 = vunpack.c.h.b16 %v1356
    %v1458 = vunpack.c.l.b16 %v1357
    %v1459 = vunpack.c.l.b16 %v1358
    %v1460 = vunpack.c.h.b16 %v1358
    %v1461 = vunpack.c.l.b16 %v1359
    %v1462 = vunpack.c.l.b16 %v1360
    %v1463 = vunpack.c.h.b16 %v1360
    %v1464 = vunpack.c.l.b16 %v1361
    %v1465 = vunpack.c.l.b16 %v1362
    %v1466 = vunpack.c.h.b16 %v1362
    %v1467 = vunpack.c.l.b16 %v1363
    %v1468 = vunpack.c.l.b16 %v1364
    %v1469 = vunpack.c.h.b16 %v1364
    %v1470 = vunpack.c.l.b16 %v1365
    %v1471 = vunpack.c.l.b16 %v1366
    %v1472 = vunpack.c.h.b16 %v1366
    %v1473 = vunpack.c.l.b16 %v1367
    %v1474 = vunpack.c.l.b16 %v1368
    %v1475 = vunpack.c.h.b16 %v1368
    %v1476 = vunpack.c.l.b16 %v1369
    %v1477 = vunpack.c.l.b16 %v1370
    %v1478 = vunpack.c.h.b16 %v1370
    %v1479 = vunpack.c.l.b16 %v1371
    %v1480 = vunpack.c.l.b16 %v1372
    %v1481 = vunpack.c.h.b16 %v1372
    %v1482 = vunpack.c.l.b16 %v1373
    %v1483 = vunpack.c.l.b16 %v1374
    %v1484 = vunpack.c.h.b16 %v1374
    %v1485 = vunpack.c.l.b16 %v1375
    %v1486 = vunpack.c.l.b16 %v1376
    %v1487 = vunpack.c.h.b16 %v1376
    %v1488 = vunpack.c.l.b16 %v1377
    %v1489 = vunpack.c.l.b16 %v1378
    %v1490 = vunpack.c.h.b16 %v1378
    %v1491 = vunpack.c.l.b16 %v1379
    %v1492 = vpack.c.b16 %v1447, %v1444
    %v1493 = vpack.c.b16 %v1448, %v1445
    %v1494 = vpack.c.b16 %v1449, %v1446
    %v1495 = vpack.c.b16 %v1453, %v1450
    %v1496 = vpack.c.b16 %v1454, %v1451
    %v1497 = vpack.c.b16 %v1455, %v1452
    %v1498 = vpack.c.b16 %v1459, %v1456
    %v1499 = vpack.c.b16 %v1460, %v1457
    %v1500 = vpack.c.b16 %v1461, %v1458
    %v1501 = vpack.c.b16 %v1465, %v1462
    %v1502 = vpack.c.b16 %v1466, %v1463
    %v1503 = vpack.c.b16 %v1467, %v1464
    %v1504 = vpack.c.b16 %v1471, %v1468
    %v1505 = vpack.c.b16 %v1472, %v1469
    %v1506 = vpack.c.b16 %v1473, %v1470
    %v1507 = vpack.c.b16 %v1477, %v1474
    %v1508 = vpack.c.b16 %v1478, %v1475
    %v1509 = vpack.c.b16 %v1479, %v1476
    %v1510 = vpack.c.b16 %v1483, %v1480
    %v1511 = vpack.c.b16 %v1484, %v1481
    %v1512 = vpack.c.b16 %v1485, %v1482
    %v1513 = vpack.c.b16 %v1489, %v1486
    %v1514 = vpack.c.b16 %v1490, %v1487
    %v1515 = vpack.c.b16 %v1491, %v1488
    %1540 = vmatpush.bf16.msra.mxu0 %v1513
    %1541 = vmatpush.bf16.msra.mxu0 %v1510
    %1542 = vmatpush.bf16.msra.mxu0 %v1507
    %1543 = vmatpush.bf16.msra.mxu0 %v1504
    %1544 = vmatpush.bf16.msra.mxu0 %v1501
    %1545 = vmatpush.bf16.msra.mxu0 %v1498
    %1546 = vmatpush.bf16.msra.mxu0 %v1495
    %1547 = vmatpush.bf16.msra.mxu0 %v1492
    %1548 = vmatmul.bf16.gmra.mxu0 %v1404
    %v1549 = vpop.f32.mrf.mxu0
    %v1550 = vadd.f32 %v1382, %v1549
    %v1551 = vpop.f32.mrf.mxu0
    %v1552 = vadd.f32 %v1382, %v1551
    %1553 = vmatmul.bf16.gmra.mxu0 %v1405
    %v1554 = vpop.f32.mrf.mxu0
    %v1555 = vadd.f32 %v1382, %v1554
    %v1556 = vpop.f32.mrf.mxu0
    %v1557 = vadd.f32 %v1382, %v1556
    %1558 = vmatmul.bf16.gmra.mxu0 %v1406
    %v1559 = vpop.f32.mrf.mxu0
    %v1560 = vadd.f32 %v1382, %v1559
    %v1561 = vpop.f32.mrf.mxu0
    %v1562 = vadd.f32 %v1382, %v1561
    %1563 = vmatmul.bf16.gmra.mxu0 %v1407
    %v1564 = vpop.f32.mrf.mxu0
    %v1565 = vadd.f32 %v1382, %v1564
    %v1566 = vpop.f32.mrf.mxu0
    %v1567 = vadd.f32 %v1382, %v1566
    %1568 = vdwg.mxu0
    %1569 = vmatpush.bf16.msra.mxu0 %v1514
    %1570 = vmatpush.bf16.msra.mxu0 %v1511
    %1571 = vmatpush.bf16.msra.mxu0 %v1508
    %1572 = vmatpush.bf16.msra.mxu0 %v1505
    %1573 = vmatpush.bf16.msra.mxu0 %v1502
    %1574 = vmatpush.bf16.msra.mxu0 %v1499
    %1575 = vmatpush.bf16.msra.mxu0 %v1496
    %1576 = vmatpush.bf16.msra.mxu0 %v1493
    %1577 = vmatmul.bf16.gmra.mxu0 %v1404
    %v1578 = vpop.f32.mrf.mxu0
    %v1579 = vadd.f32 %v1383, %v1578
    %v1580 = vpop.f32.mrf.mxu0
    %v1581 = vadd.f32 %v1383, %v1580
    %1582 = vmatmul.bf16.gmra.mxu0 %v1405
    %v1583 = vpop.f32.mrf.mxu0
    %v1584 = vadd.f32 %v1383, %v1583
    %v1585 = vpop.f32.mrf.mxu0
    %v1586 = vadd.f32 %v1383, %v1585
    %1587 = vmatmul.bf16.gmra.mxu0 %v1406
    %v1588 = vpop.f32.mrf.mxu0
    %v1589 = vadd.f32 %v1383, %v1588
    %v1590 = vpop.f32.mrf.mxu0
    %v1591 = vadd.f32 %v1383, %v1590
    %1592 = vmatmul.bf16.gmra.mxu0 %v1407
    %v1593 = vpop.f32.mrf.mxu0
    %v1594 = vadd.f32 %v1383, %v1593
    %v1595 = vpop.f32.mrf.mxu0
    %v1596 = vadd.f32 %v1383, %v1595
    %1597 = vdwg.mxu0
    %1598 = vmatpush.bf16.msra.mxu0 %v1515
    %1599 = vmatpush.bf16.msra.mxu0 %v1512
    %1600 = vmatpush.bf16.msra.mxu0 %v1509
    %1601 = vmatpush.bf16.msra.mxu0 %v1506
    %1602 = vmatpush.bf16.msra.mxu0 %v1503
    %1603 = vmatpush.bf16.msra.mxu0 %v1500
    %1604 = vmatpush.bf16.msra.mxu0 %v1497
    %1605 = vmatpush.bf16.msra.mxu0 %v1494
    %1606 = vmatmul.bf16.gmra.mxu0 %v1404
    %v1607 = vpop.f32.mrf.mxu0
    %v1608 = vadd.f32 %v1384, %v1607
    %v1609 = vpop.f32.mrf.mxu0
    %v1610 = vadd.f32 %v1384, %v1609
    %1611 = vmatmul.bf16.gmra.mxu0 %v1405
    %v1612 = vpop.f32.mrf.mxu0
    %v1613 = vadd.f32 %v1384, %v1612
    %v1614 = vpop.f32.mrf.mxu0
    %v1615 = vadd.f32 %v1384, %v1614
    %1616 = vmatmul.bf16.gmra.mxu0 %v1406
    %v1617 = vpop.f32.mrf.mxu0
    %v1618 = vadd.f32 %v1384, %v1617
    %v1619 = vpop.f32.mrf.mxu0
    %v1620 = vadd.f32 %v1384, %v1619
    %1621 = vmatmul.bf16.gmra.mxu0 %v1407
    %v1622 = vpop.f32.mrf.mxu0
    %v1623 = vadd.f32 %v1384, %v1622
    %v1624 = vpop.f32.mrf.mxu0
    %v1625 = vadd.f32 %v1384, %v1624
    %1626 = vdwg.mxu0
    %1627 = vst [vmem:[#allocation3] sm:$0xff] %v1550
    %1628 = vst [vmem:[#allocation3 + $0x8] sm:$0xff] %v1579
    %1629 = vst [vmem:[#allocation3 + $0x10] sm:$0xff] %v1608
    %1630 = vst [vmem:[#allocation3 + $0x18] sm:$0xff] %v1552
    %1631 = vst [vmem:[#allocation3 + $0x20] sm:$0xff] %v1581
    %1632 = vst [vmem:[#allocation3 + $0x28] sm:$0xff] %v1610
    %1633 = vst [vmem:[#allocation3 + $0x30] sm:$0xff] %v1555
    %1634 = vst [vmem:[#allocation3 + $0x38] sm:$0xff] %v1584
    %1635 = vst [vmem:[#allocation3 + $0x40] sm:$0xff] %v1613
    %1636 = vst [vmem:[#allocation3 + $0x48] sm:$0xff] %v1557
    %1637 = vst [vmem:[#allocation3 + $0x50] sm:$0xff] %v1586
    %1638 = vst [vmem:[#allocation3 + $0x58] sm:$0xff] %v1615
    %1639 = vst [vmem:[#allocation3 + $0x60] sm:$0xff] %v1560
    %1640 = vst [vmem:[#allocation3 + $0x68] sm:$0xff] %v1589
    %1641 = vst [vmem:[#allocation3 + $0x70] sm:$0xff] %v1618
    %1642 = vst [vmem:[#allocation3 + $0x78] sm:$0xff] %v1562
    %1643 = vst [vmem:[#allocation3 + $0x80] sm:$0xff] %v1591
    %1644 = vst [vmem:[#allocation3 + $0x88] sm:$0xff] %v1620
    %1645 = vst [vmem:[#allocation3 + $0x90] sm:$0xff] %v1565
    %1646 = vst [vmem:[#allocation3 + $0x98] sm:$0xff] %v1594
    %1647 = vst [vmem:[#allocation3 + $0xa0] sm:$0xff] %v1623
    %1648 = vst [vmem:[#allocation3 + $0xa8] sm:$0xff] %v1567
    %1649 = vst [vmem:[#allocation3 + $0xb0] sm:$0xff] %v1596
    %1650 = vst [vmem:[#allocation3 + $0xb8] sm:$0xff] %v1625
    %v1651 = vld [vmem:[#allocation7] sm:$0xff]
    %v1652 = vld [vmem:[#allocation7 + $0x8] sm:$0xf]
    %v1653 = vld [vmem:[#allocation7 + $0xc] sm:$0xff]
    %v1654 = vld [vmem:[#allocation7 + $0x14] sm:$0xf]
    %v1655 = vld [vmem:[#allocation7 + $0x18] sm:$0xff]
    %v1656 = vld [vmem:[#allocation7 + $0x20] sm:$0xf]
    %v1657 = vld [vmem:[#allocation7 + $0x24] sm:$0xff]
    %v1658 = vld [vmem:[#allocation7 + $0x2c] sm:$0xf]
    %v1659 = vld [vmem:[#allocation7 + $0x30] sm:$0xff]
    %v1660 = vld [vmem:[#allocation7 + $0x38] sm:$0xf]
    %v1661 = vld [vmem:[#allocation7 + $0x3c] sm:$0xff]
    %v1662 = vld [vmem:[#allocation7 + $0x44] sm:$0xf]
    %v1663 = vld [vmem:[#allocation7 + $0x48] sm:$0xff]
    %v1664 = vld [vmem:[#allocation7 + $0x50] sm:$0xf]
    %v1665 = vld [vmem:[#allocation7 + $0x54] sm:$0xff]
    %v1666 = vld [vmem:[#allocation7 + $0x5c] sm:$0xf]
    %v1667 = vld [vmem:[#allocation7 + $0x60] sm:$0xff]
    %v1668 = vld [vmem:[#allocation7 + $0x68] sm:$0xf]
    %v1669 = vld [vmem:[#allocation7 + $0x6c] sm:$0xff]
    %v1670 = vld [vmem:[#allocation7 + $0x74] sm:$0xf]
    %v1671 = vld [vmem:[#allocation7 + $0x78] sm:$0xff]
    %v1672 = vld [vmem:[#allocation7 + $0x80] sm:$0xf]
    %v1673 = vld [vmem:[#allocation7 + $0x84] sm:$0xff]
    %v1674 = vld [vmem:[#allocation7 + $0x8c] sm:$0xf]
    %v1675 = vld [vmem:[#allocation7 + $0x90] sm:$0xff]
    %v1676 = vld [vmem:[#allocation7 + $0x98] sm:$0xf]
    %v1677 = vld [vmem:[#allocation7 + $0x9c] sm:$0xff]
    %v1678 = vld [vmem:[#allocation7 + $0xa4] sm:$0xf]
    %v1679 = vld [vmem:[#allocation7 + $0xa8] sm:$0xff]
    %v1680 = vld [vmem:[#allocation7 + $0xb0] sm:$0xf]
    %v1681 = vld [vmem:[#allocation7 + $0xb4] sm:$0xff]
    %v1682 = vld [vmem:[#allocation7 + $0xbc] sm:$0xf]
    %v1683 = vld [vmem:[%s8] sm:$0x1]
    %s1684 = scalar_lea.vmem [#allocation2], 8
    %v1685 = vld [vmem:[%s1684] sm:$0xff]
    %v1686 = vld [vmem:[#allocation3] sm:$0xff]
    %v1687 = vld [vmem:[#allocation3 + $0x8] sm:$0xff]
    %v1688 = vld [vmem:[#allocation3 + $0x10] sm:$0xff]
    %v1689 = vpack.c.bf16 %v1685, %v1685
    %v1722 = vunpack.c.l.b16 %v1651
    %v1723 = vunpack.c.h.b16 %v1651
    %v1724 = vunpack.c.l.b16 %v1652
    %v1725 = vunpack.c.l.b16 %v1653
    %v1726 = vunpack.c.h.b16 %v1653
    %v1727 = vunpack.c.l.b16 %v1654
    %v1728 = vunpack.c.l.b16 %v1655
    %v1729 = vunpack.c.h.b16 %v1655
    %v1730 = vunpack.c.l.b16 %v1656
    %v1731 = vunpack.c.l.b16 %v1657
    %v1732 = vunpack.c.h.b16 %v1657
    %v1733 = vunpack.c.l.b16 %v1658
    %v1734 = vunpack.c.l.b16 %v1659
    %v1735 = vunpack.c.h.b16 %v1659
    %v1736 = vunpack.c.l.b16 %v1660
    %v1737 = vunpack.c.l.b16 %v1661
    %v1738 = vunpack.c.h.b16 %v1661
    %v1739 = vunpack.c.l.b16 %v1662
    %v1740 = vunpack.c.l.b16 %v1663
    %v1741 = vunpack.c.h.b16 %v1663
    %v1742 = vunpack.c.l.b16 %v1664
    %v1743 = vunpack.c.l.b16 %v1665
    %v1744 = vunpack.c.h.b16 %v1665
    %v1745 = vunpack.c.l.b16 %v1666
    %v1746 = vunpack.c.l.b16 %v1667
    %v1747 = vunpack.c.h.b16 %v1667
    %v1748 = vunpack.c.l.b16 %v1668
    %v1749 = vunpack.c.l.b16 %v1669
    %v1750 = vunpack.c.h.b16 %v1669
    %v1751 = vunpack.c.l.b16 %v1670
    %v1752 = vunpack.c.l.b16 %v1671
    %v1753 = vunpack.c.h.b16 %v1671
    %v1754 = vunpack.c.l.b16 %v1672
    %v1755 = vunpack.c.l.b16 %v1673
    %v1756 = vunpack.c.h.b16 %v1673
    %v1757 = vunpack.c.l.b16 %v1674
    %v1758 = vunpack.c.l.b16 %v1675
    %v1759 = vunpack.c.h.b16 %v1675
    %v1760 = vunpack.c.l.b16 %v1676
    %v1761 = vunpack.c.l.b16 %v1677
    %v1762 = vunpack.c.h.b16 %v1677
    %v1763 = vunpack.c.l.b16 %v1678
    %v1764 = vunpack.c.l.b16 %v1679
    %v1765 = vunpack.c.h.b16 %v1679
    %v1766 = vunpack.c.l.b16 %v1680
    %v1767 = vunpack.c.l.b16 %v1681
    %v1768 = vunpack.c.h.b16 %v1681
    %v1769 = vunpack.c.l.b16 %v1682
    %v1770 = vpack.c.b16 %v1725, %v1722
    %v1771 = vpack.c.b16 %v1726, %v1723
    %v1772 = vpack.c.b16 %v1727, %v1724
    %v1773 = vpack.c.b16 %v1731, %v1728
    %v1774 = vpack.c.b16 %v1732, %v1729
    %v1775 = vpack.c.b16 %v1733, %v1730
    %v1776 = vpack.c.b16 %v1737, %v1734
    %v1777 = vpack.c.b16 %v1738, %v1735
    %v1778 = vpack.c.b16 %v1739, %v1736
    %v1779 = vpack.c.b16 %v1743, %v1740
    %v1780 = vpack.c.b16 %v1744, %v1741
    %v1781 = vpack.c.b16 %v1745, %v1742
    %v1782 = vpack.c.b16 %v1749, %v1746
    %v1783 = vpack.c.b16 %v1750, %v1747
    %v1784 = vpack.c.b16 %v1751, %v1748
    %v1785 = vpack.c.b16 %v1755, %v1752
    %v1786 = vpack.c.b16 %v1756, %v1753
    %v1787 = vpack.c.b16 %v1757, %v1754
    %v1788 = vpack.c.b16 %v1761, %v1758
    %v1789 = vpack.c.b16 %v1762, %v1759
    %v1790 = vpack.c.b16 %v1763, %v1760
    %v1791 = vpack.c.b16 %v1767, %v1764
    %v1792 = vpack.c.b16 %v1768, %v1765
    %v1793 = vpack.c.b16 %v1769, %v1766
    %1818 = vmatpush.bf16.msra.mxu0 %v1791
    %1819 = vmatpush.bf16.msra.mxu0 %v1788
    %1820 = vmatpush.bf16.msra.mxu0 %v1785
    %1821 = vmatpush.bf16.msra.mxu0 %v1782
    %1822 = vmatpush.bf16.msra.mxu0 %v1779
    %1823 = vmatpush.bf16.msra.mxu0 %v1776
    %1824 = vmatpush.bf16.msra.mxu0 %v1773
    %1825 = vmatpush.bf16.msra.mxu0 %v1770
    %1826 = vmatmul.bf16.gmra.mxu0 %v1689
    %v1827 = vpop.f32.mrf.mxu0
    %v1828 = vadd.f32 0.0, %v1827
    %v1829 = vpop.f32.mrf.mxu0
    %1830 = vdwg.mxu0
    %1831 = vmatpush.bf16.msra.mxu0 %v1792
    %1832 = vmatpush.bf16.msra.mxu0 %v1789
    %1833 = vmatpush.bf16.msra.mxu0 %v1786
    %1834 = vmatpush.bf16.msra.mxu0 %v1783
    %1835 = vmatpush.bf16.msra.mxu0 %v1780
    %1836 = vmatpush.bf16.msra.mxu0 %v1777
    %1837 = vmatpush.bf16.msra.mxu0 %v1774
    %1838 = vmatpush.bf16.msra.mxu0 %v1771
    %1839 = vmatmul.bf16.gmra.mxu0 %v1689
    %v1840 = vpop.f32.mrf.mxu0
    %v1841 = vadd.f32 0.0, %v1840
    %v1842 = vpop.f32.mrf.mxu0
    %1843 = vdwg.mxu0
    %1844 = vmatpush.bf16.msra.mxu0 %v1793
    %1845 = vmatpush.bf16.msra.mxu0 %v1790
    %1846 = vmatpush.bf16.msra.mxu0 %v1787
    %1847 = vmatpush.bf16.msra.mxu0 %v1784
    %1848 = vmatpush.bf16.msra.mxu0 %v1781
    %1849 = vmatpush.bf16.msra.mxu0 %v1778
    %1850 = vmatpush.bf16.msra.mxu0 %v1775
    %1851 = vmatpush.bf16.msra.mxu0 %v1772
    %1852 = vmatmul.bf16.gmra.mxu0 %v1689
    %v1853 = vpop.f32.mrf.mxu0
    %v1854 = vadd.f32 0.0, %v1853
    %v1855 = vpop.f32.mrf.mxu0
    %1856 = vdwg.mxu0
    %v1857 = vadd.f32 %v1686, %v1828
    %v1858 = vxor.u32 %v1857, 2147483648
    %v1859 = vmul.f32 %v1858, 1.442695
    %v1860 = vpow.pop %v1859
    %v1861 = vadd.f32 %v1860, 1.0
    %v1862 = vrcp.pop %v1861
    %v1863 = vmul.f32 %v1861, %v1862
    %v1864 = vsub.f32 1.0, %v1863
    %v1865 = vmul.f32 %v1862, %v1864
    %v1866 = vadd.f32 %v1862, %v1865
    %vm1867 = vweird.f32 %v1861
    %vm1868 = vweird.f32 %v1862
    %vm1869 = vmor %vm1867, %vm1868
    %v1870 = vsel %vm1869, %v1862, %v1866
    %v1871 = vand.u32 2147483647, %v1861
    %vm1872 = vcmp.eq.f32.partialorder %v1871, 8.507059e+37
    %v1873 = vand.u32 %v1861, 2147483648
    %v1874 = vor.u32 1.1754944e-38, %v1873
    %v1875 = vsel %vm1872, %v1874, %v1870
    %v1876 = vmul.f32 1.0, %v1875
    %v1877 = vadd.f32 %v1687, %v1841
    %v1878 = vxor.u32 %v1877, 2147483648
    %v1879 = vmul.f32 %v1878, 1.442695
    %v1880 = vpow.pop %v1879
    %v1881 = vadd.f32 %v1880, 1.0
    %v1882 = vrcp.pop %v1881
    %v1883 = vmul.f32 %v1881, %v1882
    %v1884 = vsub.f32 1.0, %v1883
    %v1885 = vmul.f32 %v1882, %v1884
    %v1886 = vadd.f32 %v1882, %v1885
    %vm1887 = vweird.f32 %v1881
    %vm1888 = vweird.f32 %v1882
    %vm1889 = vmor %vm1887, %vm1888
    %v1890 = vsel %vm1889, %v1882, %v1886
    %v1891 = vand.u32 2147483647, %v1881
    %vm1892 = vcmp.eq.f32.partialorder %v1891, 8.507059e+37
    %v1893 = vand.u32 %v1881, 2147483648
    %v1894 = vor.u32 1.1754944e-38, %v1893
    %v1895 = vsel %vm1892, %v1894, %v1890
    %v1896 = vmul.f32 1.0, %v1895
    %v1898 = vperm.slane %v1683, 0
    %v1900 = vadd.f32 %v1854, %v1898
    %v1901 = vmul.f32 %v1876, %v1900
    %v1902 = vadd.f32 %v1688, %v1901
    %v1903 = vtanh.pop %v1902
    %v1904 = vsub.f32 1.0, %v1896
    %v1905 = vmul.f32 %v1904, %v1903
    %v1906 = vmul.f32 %v1896, %v1685
    %v1907 = vadd.f32 %v1905, %v1906
    %1908 = vst [vmem:[%s1684] sm:$0xff] %v1907
    %v1909 = vld [vmem:[%s1684] sm:$0xff]
    %v1910 = vld [vmem:[%s662] sm:$0xff]
    %v1911 = vld [vmem:[%s662 + $0x8] sm:$0xff]
    %v1912 = vld [vmem:[%s662 + $0x10] sm:$0xff]
    %v1913 = vpack.c.bf16 %v1909, %v1909
    %1914 = vmatpush.bf16.msra.mxu0 %v1791
    %1915 = vmatpush.bf16.msra.mxu0 %v1788
    %1916 = vmatpush.bf16.msra.mxu0 %v1785
    %1917 = vmatpush.bf16.msra.mxu0 %v1782
    %1918 = vmatpush.bf16.msra.mxu0 %v1779
    %1919 = vmatpush.bf16.msra.mxu0 %v1776
    %1920 = vmatpush.bf16.msra.mxu0 %v1773
    %1921 = vmatpush.bf16.msra.mxu0 %v1770
    %1922 = vmatmul.bf16.gmra.mxu0 %v1913
    %v1923 = vpop.f32.mrf.mxu0
    %v1924 = vadd.f32 0.0, %v1923
    %v1925 = vpop.f32.mrf.mxu0
    %1926 = vdwg.mxu0
    %1927 = vmatpush.bf16.msra.mxu0 %v1792
    %1928 = vmatpush.bf16.msra.mxu0 %v1789
    %1929 = vmatpush.bf16.msra.mxu0 %v1786
    %1930 = vmatpush.bf16.msra.mxu0 %v1783
    %1931 = vmatpush.bf16.msra.mxu0 %v1780
    %1932 = vmatpush.bf16.msra.mxu0 %v1777
    %1933 = vmatpush.bf16.msra.mxu0 %v1774
    %1934 = vmatpush.bf16.msra.mxu0 %v1771
    %1935 = vmatmul.bf16.gmra.mxu0 %v1913
    %v1936 = vpop.f32.mrf.mxu0
    %v1937 = vadd.f32 0.0, %v1936
    %v1938 = vpop.f32.mrf.mxu0
    %1939 = vdwg.mxu0
    %1940 = vmatpush.bf16.msra.mxu0 %v1793
    %1941 = vmatpush.bf16.msra.mxu0 %v1790
    %1942 = vmatpush.bf16.msra.mxu0 %v1787
    %1943 = vmatpush.bf16.msra.mxu0 %v1784
    %1944 = vmatpush.bf16.msra.mxu0 %v1781
    %1945 = vmatpush.bf16.msra.mxu0 %v1778
    %1946 = vmatpush.bf16.msra.mxu0 %v1775
    %1947 = vmatpush.bf16.msra.mxu0 %v1772
    %1948 = vmatmul.bf16.gmra.mxu0 %v1913
    %v1949 = vpop.f32.mrf.mxu0
    %v1950 = vadd.f32 0.0, %v1949
    %v1951 = vpop.f32.mrf.mxu0
    %1952 = vdwg.mxu0
    %v1953 = vadd.f32 %v1910, %v1924
    %v1954 = vxor.u32 %v1953, 2147483648
    %v1955 = vmul.f32 %v1954, 1.442695
    %v1956 = vpow.pop %v1955
    %v1957 = vadd.f32 %v1956, 1.0
    %v1958 = vrcp.pop %v1957
    %v1959 = vmul.f32 %v1957, %v1958
    %v1960 = vsub.f32 1.0, %v1959
    %v1961 = vmul.f32 %v1958, %v1960
    %v1962 = vadd.f32 %v1958, %v1961
    %vm1963 = vweird.f32 %v1957
    %vm1964 = vweird.f32 %v1958
    %vm1965 = vmor %vm1963, %vm1964
    %v1966 = vsel %vm1965, %v1958, %v1962
    %v1967 = vand.u32 2147483647, %v1957
    %vm1968 = vcmp.eq.f32.partialorder %v1967, 8.507059e+37
    %v1969 = vand.u32 %v1957, 2147483648
    %v1970 = vor.u32 1.1754944e-38, %v1969
    %v1971 = vsel %vm1968, %v1970, %v1966
    %v1972 = vmul.f32 1.0, %v1971
    %v1973 = vadd.f32 %v1911, %v1937
    %v1974 = vxor.u32 %v1973, 2147483648
    %v1975 = vmul.f32 %v1974, 1.442695
    %v1976 = vpow.pop %v1975
    %v1977 = vadd.f32 %v1976, 1.0
    %v1978 = vrcp.pop %v1977
    %v1979 = vmul.f32 %v1977, %v1978
    %v1980 = vsub.f32 1.0, %v1979
    %v1981 = vmul.f32 %v1978, %v1980
    %v1982 = vadd.f32 %v1978, %v1981
    %vm1983 = vweird.f32 %v1977
    %vm1984 = vweird.f32 %v1978
    %vm1985 = vmor %vm1983, %vm1984
    %v1986 = vsel %vm1985, %v1978, %v1982
    %v1987 = vand.u32 2147483647, %v1977
    %vm1988 = vcmp.eq.f32.partialorder %v1987, 8.507059e+37
    %v1989 = vand.u32 %v1977, 2147483648
    %v1990 = vor.u32 1.1754944e-38, %v1989
    %v1991 = vsel %vm1988, %v1990, %v1986
    %v1992 = vmul.f32 1.0, %v1991
    %v1993 = vadd.f32 %v1950, %v1898
    %v1994 = vmul.f32 %v1972, %v1993
    %v1995 = vadd.f32 %v1912, %v1994
    %v1996 = vtanh.pop %v1995
    %v1997 = vsub.f32 1.0, %v1992
    %v1998 = vmul.f32 %v1997, %v1996
    %v1999 = vmul.f32 %v1992, %v1909
    %v2000 = vadd.f32 %v1998, %v1999
    %2001 = vst [vmem:[%s1684] sm:$0xff] %v2000
    %v2002 = vld [vmem:[%s1684] sm:$0xff]
    %v2003 = vld [vmem:[%s759] sm:$0xff]
    %v2004 = vld [vmem:[%s759 + $0x8] sm:$0xff]
    %v2005 = vld [vmem:[%s759 + $0x10] sm:$0xff]
    %v2006 = vpack.c.bf16 %v2002, %v2002
    %2007 = vmatpush.bf16.msra.mxu0 %v1791
    %2008 = vmatpush.bf16.msra.mxu0 %v1788
    %2009 = vmatpush.bf16.msra.mxu0 %v1785
    %2010 = vmatpush.bf16.msra.mxu0 %v1782
    %2011 = vmatpush.bf16.msra.mxu0 %v1779
    %2012 = vmatpush.bf16.msra.mxu0 %v1776
    %2013 = vmatpush.bf16.msra.mxu0 %v1773
    %2014 = vmatpush.bf16.msra.mxu0 %v1770
    %2015 = vmatmul.bf16.gmra.mxu0 %v2006
    %v2016 = vpop.f32.mrf.mxu0
    %v2017 = vadd.f32 0.0, %v2016
    %v2018 = vpop.f32.mrf.mxu0
    %2019 = vdwg.mxu0
    %2020 = vmatpush.bf16.msra.mxu0 %v1792
    %2021 = vmatpush.bf16.msra.mxu0 %v1789
    %2022 = vmatpush.bf16.msra.mxu0 %v1786
    %2023 = vmatpush.bf16.msra.mxu0 %v1783
    %2024 = vmatpush.bf16.msra.mxu0 %v1780
    %2025 = vmatpush.bf16.msra.mxu0 %v1777
    %2026 = vmatpush.bf16.msra.mxu0 %v1774
    %2027 = vmatpush.bf16.msra.mxu0 %v1771
    %2028 = vmatmul.bf16.gmra.mxu0 %v2006
    %v2029 = vpop.f32.mrf.mxu0
    %v2030 = vadd.f32 0.0, %v2029
    %v2031 = vpop.f32.mrf.mxu0
    %2032 = vdwg.mxu0
    %2033 = vmatpush.bf16.msra.mxu0 %v1793
    %2034 = vmatpush.bf16.msra.mxu0 %v1790
    %2035 = vmatpush.bf16.msra.mxu0 %v1787
    %2036 = vmatpush.bf16.msra.mxu0 %v1784
    %2037 = vmatpush.bf16.msra.mxu0 %v1781
    %2038 = vmatpush.bf16.msra.mxu0 %v1778
    %2039 = vmatpush.bf16.msra.mxu0 %v1775
    %2040 = vmatpush.bf16.msra.mxu0 %v1772
    %2041 = vmatmul.bf16.gmra.mxu0 %v2006
    %v2042 = vpop.f32.mrf.mxu0
    %v2043 = vadd.f32 0.0, %v2042
    %v2044 = vpop.f32.mrf.mxu0
    %2045 = vdwg.mxu0
    %v2046 = vadd.f32 %v2003, %v2017
    %v2047 = vxor.u32 %v2046, 2147483648
    %v2048 = vmul.f32 %v2047, 1.442695
    %v2049 = vpow.pop %v2048
    %v2050 = vadd.f32 %v2049, 1.0
    %v2051 = vrcp.pop %v2050
    %v2052 = vmul.f32 %v2050, %v2051
    %v2053 = vsub.f32 1.0, %v2052
    %v2054 = vmul.f32 %v2051, %v2053
    %v2055 = vadd.f32 %v2051, %v2054
    %vm2056 = vweird.f32 %v2050
    %vm2057 = vweird.f32 %v2051
    %vm2058 = vmor %vm2056, %vm2057
    %v2059 = vsel %vm2058, %v2051, %v2055
    %v2060 = vand.u32 2147483647, %v2050
    %vm2061 = vcmp.eq.f32.partialorder %v2060, 8.507059e+37
    %v2062 = vand.u32 %v2050, 2147483648
    %v2063 = vor.u32 1.1754944e-38, %v2062
    %v2064 = vsel %vm2061, %v2063, %v2059
    %v2065 = vmul.f32 1.0, %v2064
    %v2066 = vadd.f32 %v2004, %v2030
    %v2067 = vxor.u32 %v2066, 2147483648
    %v2068 = vmul.f32 %v2067, 1.442695
    %v2069 = vpow.pop %v2068
    %v2070 = vadd.f32 %v2069, 1.0
    %v2071 = vrcp.pop %v2070
    %v2072 = vmul.f32 %v2070, %v2071
    %v2073 = vsub.f32 1.0, %v2072
    %v2074 = vmul.f32 %v2071, %v2073
    %v2075 = vadd.f32 %v2071, %v2074
    %vm2076 = vweird.f32 %v2070
    %vm2077 = vweird.f32 %v2071
    %vm2078 = vmor %vm2076, %vm2077
    %v2079 = vsel %vm2078, %v2071, %v2075
    %v2080 = vand.u32 2147483647, %v2070
    %vm2081 = vcmp.eq.f32.partialorder %v2080, 8.507059e+37
    %v2082 = vand.u32 %v2070, 2147483648
    %v2083 = vor.u32 1.1754944e-38, %v2082
    %v2084 = vsel %vm2081, %v2083, %v2079
    %v2085 = vmul.f32 1.0, %v2084
    %v2086 = vadd.f32 %v2043, %v1898
    %v2087 = vmul.f32 %v2065, %v2086
    %v2088 = vadd.f32 %v2005, %v2087
    %v2089 = vtanh.pop %v2088
    %v2090 = vsub.f32 1.0, %v2085
    %v2091 = vmul.f32 %v2090, %v2089
    %v2092 = vmul.f32 %v2085, %v2002
    %v2093 = vadd.f32 %v2091, %v2092
    %2094 = vst [vmem:[%s1684] sm:$0xff] %v2093
    %v2095 = vld [vmem:[%s1684] sm:$0xff]
    %v2096 = vld [vmem:[%s856] sm:$0xff]
    %v2097 = vld [vmem:[%s856 + $0x8] sm:$0xff]
    %v2098 = vld [vmem:[%s856 + $0x10] sm:$0xff]
    %v2099 = vpack.c.bf16 %v2095, %v2095
    %2100 = vmatpush.bf16.msra.mxu0 %v1791
    %2101 = vmatpush.bf16.msra.mxu0 %v1788
    %2102 = vmatpush.bf16.msra.mxu0 %v1785
    %2103 = vmatpush.bf16.msra.mxu0 %v1782
    %2104 = vmatpush.bf16.msra.mxu0 %v1779
    %2105 = vmatpush.bf16.msra.mxu0 %v1776
    %2106 = vmatpush.bf16.msra.mxu0 %v1773
    %2107 = vmatpush.bf16.msra.mxu0 %v1770
    %2108 = vmatmul.bf16.gmra.mxu0 %v2099
    %v2109 = vpop.f32.mrf.mxu0
    %v2110 = vadd.f32 0.0, %v2109
    %v2111 = vpop.f32.mrf.mxu0
    %2112 = vdwg.mxu0
    %2113 = vmatpush.bf16.msra.mxu0 %v1792
    %2114 = vmatpush.bf16.msra.mxu0 %v1789
    %2115 = vmatpush.bf16.msra.mxu0 %v1786
    %2116 = vmatpush.bf16.msra.mxu0 %v1783
    %2117 = vmatpush.bf16.msra.mxu0 %v1780
    %2118 = vmatpush.bf16.msra.mxu0 %v1777
    %2119 = vmatpush.bf16.msra.mxu0 %v1774
    %2120 = vmatpush.bf16.msra.mxu0 %v1771
    %2121 = vmatmul.bf16.gmra.mxu0 %v2099
    %v2122 = vpop.f32.mrf.mxu0
    %v2123 = vadd.f32 0.0, %v2122
    %v2124 = vpop.f32.mrf.mxu0
    %2125 = vdwg.mxu0
    %2126 = vmatpush.bf16.msra.mxu0 %v1793
    %2127 = vmatpush.bf16.msra.mxu0 %v1790
    %2128 = vmatpush.bf16.msra.mxu0 %v1787
    %2129 = vmatpush.bf16.msra.mxu0 %v1784
    %2130 = vmatpush.bf16.msra.mxu0 %v1781
    %2131 = vmatpush.bf16.msra.mxu0 %v1778
    %2132 = vmatpush.bf16.msra.mxu0 %v1775
    %2133 = vmatpush.bf16.msra.mxu0 %v1772
    %2134 = vmatmul.bf16.gmra.mxu0 %v2099
    %v2135 = vpop.f32.mrf.mxu0
    %v2136 = vadd.f32 0.0, %v2135
    %v2137 = vpop.f32.mrf.mxu0
    %2138 = vdwg.mxu0
    %v2139 = vadd.f32 %v2096, %v2110
    %v2140 = vxor.u32 %v2139, 2147483648
    %v2141 = vmul.f32 %v2140, 1.442695
    %v2142 = vpow.pop %v2141
    %v2143 = vadd.f32 %v2142, 1.0
    %v2144 = vrcp.pop %v2143
    %v2145 = vmul.f32 %v2143, %v2144
    %v2146 = vsub.f32 1.0, %v2145
    %v2147 = vmul.f32 %v2144, %v2146
    %v2148 = vadd.f32 %v2144, %v2147
    %vm2149 = vweird.f32 %v2143
    %vm2150 = vweird.f32 %v2144
    %vm2151 = vmor %vm2149, %vm2150
    %v2152 = vsel %vm2151, %v2144, %v2148
    %v2153 = vand.u32 2147483647, %v2143
    %vm2154 = vcmp.eq.f32.partialorder %v2153, 8.507059e+37
    %v2155 = vand.u32 %v2143, 2147483648
    %v2156 = vor.u32 1.1754944e-38, %v2155
    %v2157 = vsel %vm2154, %v2156, %v2152
    %v2158 = vmul.f32 1.0, %v2157
    %v2159 = vadd.f32 %v2097, %v2123
    %v2160 = vxor.u32 %v2159, 2147483648
    %v2161 = vmul.f32 %v2160, 1.442695
    %v2162 = vpow.pop %v2161
    %v2163 = vadd.f32 %v2162, 1.0
    %v2164 = vrcp.pop %v2163
    %v2165 = vmul.f32 %v2163, %v2164
    %v2166 = vsub.f32 1.0, %v2165
    %v2167 = vmul.f32 %v2164, %v2166
    %v2168 = vadd.f32 %v2164, %v2167
    %vm2169 = vweird.f32 %v2163
    %vm2170 = vweird.f32 %v2164
    %vm2171 = vmor %vm2169, %vm2170
    %v2172 = vsel %vm2171, %v2164, %v2168
    %v2173 = vand.u32 2147483647, %v2163
    %vm2174 = vcmp.eq.f32.partialorder %v2173, 8.507059e+37
    %v2175 = vand.u32 %v2163, 2147483648
    %v2176 = vor.u32 1.1754944e-38, %v2175
    %v2177 = vsel %vm2174, %v2176, %v2172
    %v2178 = vmul.f32 1.0, %v2177
    %v2179 = vadd.f32 %v2136, %v1898
    %v2180 = vmul.f32 %v2158, %v2179
    %v2181 = vadd.f32 %v2098, %v2180
    %v2182 = vtanh.pop %v2181
    %v2183 = vsub.f32 1.0, %v2178
    %v2184 = vmul.f32 %v2183, %v2182
    %v2185 = vmul.f32 %v2178, %v2095
    %v2186 = vadd.f32 %v2184, %v2185
    %2187 = vst [vmem:[%s1684] sm:$0xff] %v2186
    %v2188 = vld [vmem:[%s1684] sm:$0xff]
    %v2189 = vld [vmem:[%s953] sm:$0xff]
    %v2190 = vld [vmem:[%s953 + $0x8] sm:$0xff]
    %v2191 = vld [vmem:[%s953 + $0x10] sm:$0xff]
    %v2192 = vpack.c.bf16 %v2188, %v2188
    %2193 = vmatpush.bf16.msra.mxu0 %v1791
    %2194 = vmatpush.bf16.msra.mxu0 %v1788
    %2195 = vmatpush.bf16.msra.mxu0 %v1785
    %2196 = vmatpush.bf16.msra.mxu0 %v1782
    %2197 = vmatpush.bf16.msra.mxu0 %v1779
    %2198 = vmatpush.bf16.msra.mxu0 %v1776
    %2199 = vmatpush.bf16.msra.mxu0 %v1773
    %2200 = vmatpush.bf16.msra.mxu0 %v1770
    %2201 = vmatmul.bf16.gmra.mxu0 %v2192
    %v2202 = vpop.f32.mrf.mxu0
    %v2203 = vadd.f32 0.0, %v2202
    %v2204 = vpop.f32.mrf.mxu0
    %2205 = vdwg.mxu0
    %2206 = vmatpush.bf16.msra.mxu0 %v1792
    %2207 = vmatpush.bf16.msra.mxu0 %v1789
    %2208 = vmatpush.bf16.msra.mxu0 %v1786
    %2209 = vmatpush.bf16.msra.mxu0 %v1783
    %2210 = vmatpush.bf16.msra.mxu0 %v1780
    %2211 = vmatpush.bf16.msra.mxu0 %v1777
    %2212 = vmatpush.bf16.msra.mxu0 %v1774
    %2213 = vmatpush.bf16.msra.mxu0 %v1771
    %2214 = vmatmul.bf16.gmra.mxu0 %v2192
    %v2215 = vpop.f32.mrf.mxu0
    %v2216 = vadd.f32 0.0, %v2215
    %v2217 = vpop.f32.mrf.mxu0
    %2218 = vdwg.mxu0
    %2219 = vmatpush.bf16.msra.mxu0 %v1793
    %2220 = vmatpush.bf16.msra.mxu0 %v1790
    %2221 = vmatpush.bf16.msra.mxu0 %v1787
    %2222 = vmatpush.bf16.msra.mxu0 %v1784
    %2223 = vmatpush.bf16.msra.mxu0 %v1781
    %2224 = vmatpush.bf16.msra.mxu0 %v1778
    %2225 = vmatpush.bf16.msra.mxu0 %v1775
    %2226 = vmatpush.bf16.msra.mxu0 %v1772
    %2227 = vmatmul.bf16.gmra.mxu0 %v2192
    %v2228 = vpop.f32.mrf.mxu0
    %v2229 = vadd.f32 0.0, %v2228
    %v2230 = vpop.f32.mrf.mxu0
    %2231 = vdwg.mxu0
    %v2232 = vadd.f32 %v2189, %v2203
    %v2233 = vxor.u32 %v2232, 2147483648
    %v2234 = vmul.f32 %v2233, 1.442695
    %v2235 = vpow.pop %v2234
    %v2236 = vadd.f32 %v2235, 1.0
    %v2237 = vrcp.pop %v2236
    %v2238 = vmul.f32 %v2236, %v2237
    %v2239 = vsub.f32 1.0, %v2238
    %v2240 = vmul.f32 %v2237, %v2239
    %v2241 = vadd.f32 %v2237, %v2240
    %vm2242 = vweird.f32 %v2236
    %vm2243 = vweird.f32 %v2237
    %vm2244 = vmor %vm2242, %vm2243
    %v2245 = vsel %vm2244, %v2237, %v2241
    %v2246 = vand.u32 2147483647, %v2236
    %vm2247 = vcmp.eq.f32.partialorder %v2246, 8.507059e+37
    %v2248 = vand.u32 %v2236, 2147483648
    %v2249 = vor.u32 1.1754944e-38, %v2248
    %v2250 = vsel %vm2247, %v2249, %v2245
    %v2251 = vmul.f32 1.0, %v2250
    %v2252 = vadd.f32 %v2190, %v2216
    %v2253 = vxor.u32 %v2252, 2147483648
    %v2254 = vmul.f32 %v2253, 1.442695
    %v2255 = vpow.pop %v2254
    %v2256 = vadd.f32 %v2255, 1.0
    %v2257 = vrcp.pop %v2256
    %v2258 = vmul.f32 %v2256, %v2257
    %v2259 = vsub.f32 1.0, %v2258
    %v2260 = vmul.f32 %v2257, %v2259
    %v2261 = vadd.f32 %v2257, %v2260
    %vm2262 = vweird.f32 %v2256
    %vm2263 = vweird.f32 %v2257
    %vm2264 = vmor %vm2262, %vm2263
    %v2265 = vsel %vm2264, %v2257, %v2261
    %v2266 = vand.u32 2147483647, %v2256
    %vm2267 = vcmp.eq.f32.partialorder %v2266, 8.507059e+37
    %v2268 = vand.u32 %v2256, 2147483648
    %v2269 = vor.u32 1.1754944e-38, %v2268
    %v2270 = vsel %vm2267, %v2269, %v2265
    %v2271 = vmul.f32 1.0, %v2270
    %v2272 = vadd.f32 %v2229, %v1898
    %v2273 = vmul.f32 %v2251, %v2272
    %v2274 = vadd.f32 %v2191, %v2273
    %v2275 = vtanh.pop %v2274
    %v2276 = vsub.f32 1.0, %v2271
    %v2277 = vmul.f32 %v2276, %v2275
    %v2278 = vmul.f32 %v2271, %v2188
    %v2279 = vadd.f32 %v2277, %v2278
    %2280 = vst [vmem:[%s1684] sm:$0xff] %v2279
    %v2281 = vld [vmem:[%s1684] sm:$0xff]
    %v2282 = vld [vmem:[%s1050] sm:$0xff]
    %v2283 = vld [vmem:[%s1050 + $0x8] sm:$0xff]
    %v2284 = vld [vmem:[%s1050 + $0x10] sm:$0xff]
    %v2285 = vpack.c.bf16 %v2281, %v2281
    %2286 = vmatpush.bf16.msra.mxu0 %v1791
    %2287 = vmatpush.bf16.msra.mxu0 %v1788
    %2288 = vmatpush.bf16.msra.mxu0 %v1785
    %2289 = vmatpush.bf16.msra.mxu0 %v1782
    %2290 = vmatpush.bf16.msra.mxu0 %v1779
    %2291 = vmatpush.bf16.msra.mxu0 %v1776
    %2292 = vmatpush.bf16.msra.mxu0 %v1773
    %2293 = vmatpush.bf16.msra.mxu0 %v1770
    %2294 = vmatmul.bf16.gmra.mxu0 %v2285
    %v2295 = vpop.f32.mrf.mxu0
    %v2296 = vadd.f32 0.0, %v2295
    %v2297 = vpop.f32.mrf.mxu0
    %2298 = vdwg.mxu0
    %2299 = vmatpush.bf16.msra.mxu0 %v1792
    %2300 = vmatpush.bf16.msra.mxu0 %v1789
    %2301 = vmatpush.bf16.msra.mxu0 %v1786
    %2302 = vmatpush.bf16.msra.mxu0 %v1783
    %2303 = vmatpush.bf16.msra.mxu0 %v1780
    %2304 = vmatpush.bf16.msra.mxu0 %v1777
    %2305 = vmatpush.bf16.msra.mxu0 %v1774
    %2306 = vmatpush.bf16.msra.mxu0 %v1771
    %2307 = vmatmul.bf16.gmra.mxu0 %v2285
    %v2308 = vpop.f32.mrf.mxu0
    %v2309 = vadd.f32 0.0, %v2308
    %v2310 = vpop.f32.mrf.mxu0
    %2311 = vdwg.mxu0
    %2312 = vmatpush.bf16.msra.mxu0 %v1793
    %2313 = vmatpush.bf16.msra.mxu0 %v1790
    %2314 = vmatpush.bf16.msra.mxu0 %v1787
    %2315 = vmatpush.bf16.msra.mxu0 %v1784
    %2316 = vmatpush.bf16.msra.mxu0 %v1781
    %2317 = vmatpush.bf16.msra.mxu0 %v1778
    %2318 = vmatpush.bf16.msra.mxu0 %v1775
    %2319 = vmatpush.bf16.msra.mxu0 %v1772
    %2320 = vmatmul.bf16.gmra.mxu0 %v2285
    %v2321 = vpop.f32.mrf.mxu0
    %v2322 = vadd.f32 0.0, %v2321
    %v2323 = vpop.f32.mrf.mxu0
    %2324 = vdwg.mxu0
    %v2325 = vadd.f32 %v2282, %v2296
    %v2326 = vxor.u32 %v2325, 2147483648
    %v2327 = vmul.f32 %v2326, 1.442695
    %v2328 = vpow.pop %v2327
    %v2329 = vadd.f32 %v2328, 1.0
    %v2330 = vrcp.pop %v2329
    %v2331 = vmul.f32 %v2329, %v2330
    %v2332 = vsub.f32 1.0, %v2331
    %v2333 = vmul.f32 %v2330, %v2332
    %v2334 = vadd.f32 %v2330, %v2333
    %vm2335 = vweird.f32 %v2329
    %vm2336 = vweird.f32 %v2330
    %vm2337 = vmor %vm2335, %vm2336
    %v2338 = vsel %vm2337, %v2330, %v2334
    %v2339 = vand.u32 2147483647, %v2329
    %vm2340 = vcmp.eq.f32.partialorder %v2339, 8.507059e+37
    %v2341 = vand.u32 %v2329, 2147483648
    %v2342 = vor.u32 1.1754944e-38, %v2341
    %v2343 = vsel %vm2340, %v2342, %v2338
    %v2344 = vmul.f32 1.0, %v2343
    %v2345 = vadd.f32 %v2283, %v2309
    %v2346 = vxor.u32 %v2345, 2147483648
    %v2347 = vmul.f32 %v2346, 1.442695
    %v2348 = vpow.pop %v2347
    %v2349 = vadd.f32 %v2348, 1.0
    %v2350 = vrcp.pop %v2349
    %v2351 = vmul.f32 %v2349, %v2350
    %v2352 = vsub.f32 1.0, %v2351
    %v2353 = vmul.f32 %v2350, %v2352
    %v2354 = vadd.f32 %v2350, %v2353
    %vm2355 = vweird.f32 %v2349
    %vm2356 = vweird.f32 %v2350
    %vm2357 = vmor %vm2355, %vm2356
    %v2358 = vsel %vm2357, %v2350, %v2354
    %v2359 = vand.u32 2147483647, %v2349
    %vm2360 = vcmp.eq.f32.partialorder %v2359, 8.507059e+37
    %v2361 = vand.u32 %v2349, 2147483648
    %v2362 = vor.u32 1.1754944e-38, %v2361
    %v2363 = vsel %vm2360, %v2362, %v2358
    %v2364 = vmul.f32 1.0, %v2363
    %v2365 = vadd.f32 %v2322, %v1898
    %v2366 = vmul.f32 %v2344, %v2365
    %v2367 = vadd.f32 %v2284, %v2366
    %v2368 = vtanh.pop %v2367
    %v2369 = vsub.f32 1.0, %v2364
    %v2370 = vmul.f32 %v2369, %v2368
    %v2371 = vmul.f32 %v2364, %v2281
    %v2372 = vadd.f32 %v2370, %v2371
    %2373 = vst [vmem:[%s1684] sm:$0xff] %v2372
    %v2374 = vld [vmem:[%s1684] sm:$0xff]
    %v2375 = vld [vmem:[%s1147] sm:$0xff]
    %v2376 = vld [vmem:[%s1147 + $0x8] sm:$0xff]
    %v2377 = vld [vmem:[%s1147 + $0x10] sm:$0xff]
    %v2378 = vpack.c.bf16 %v2374, %v2374
    %2379 = vmatpush.bf16.msra.mxu0 %v1791
    %2380 = vmatpush.bf16.msra.mxu0 %v1788
    %2381 = vmatpush.bf16.msra.mxu0 %v1785
    %2382 = vmatpush.bf16.msra.mxu0 %v1782
    %2383 = vmatpush.bf16.msra.mxu0 %v1779
    %2384 = vmatpush.bf16.msra.mxu0 %v1776
    %2385 = vmatpush.bf16.msra.mxu0 %v1773
    %2386 = vmatpush.bf16.msra.mxu0 %v1770
    %2387 = vmatmul.bf16.gmra.mxu0 %v2378
    %v2388 = vpop.f32.mrf.mxu0
    %v2389 = vadd.f32 0.0, %v2388
    %v2390 = vpop.f32.mrf.mxu0
    %2391 = vdwg.mxu0
    %2392 = vmatpush.bf16.msra.mxu0 %v1792
    %2393 = vmatpush.bf16.msra.mxu0 %v1789
    %2394 = vmatpush.bf16.msra.mxu0 %v1786
    %2395 = vmatpush.bf16.msra.mxu0 %v1783
    %2396 = vmatpush.bf16.msra.mxu0 %v1780
    %2397 = vmatpush.bf16.msra.mxu0 %v1777
    %2398 = vmatpush.bf16.msra.mxu0 %v1774
    %2399 = vmatpush.bf16.msra.mxu0 %v1771
    %2400 = vmatmul.bf16.gmra.mxu0 %v2378
    %v2401 = vpop.f32.mrf.mxu0
    %v2402 = vadd.f32 0.0, %v2401
    %v2403 = vpop.f32.mrf.mxu0
    %2404 = vdwg.mxu0
    %2405 = vmatpush.bf16.msra.mxu0 %v1793
    %2406 = vmatpush.bf16.msra.mxu0 %v1790
    %2407 = vmatpush.bf16.msra.mxu0 %v1787
    %2408 = vmatpush.bf16.msra.mxu0 %v1784
    %2409 = vmatpush.bf16.msra.mxu0 %v1781
    %2410 = vmatpush.bf16.msra.mxu0 %v1778
    %2411 = vmatpush.bf16.msra.mxu0 %v1775
    %2412 = vmatpush.bf16.msra.mxu0 %v1772
    %2413 = vmatmul.bf16.gmra.mxu0 %v2378
    %v2414 = vpop.f32.mrf.mxu0
    %v2415 = vadd.f32 0.0, %v2414
    %v2416 = vpop.f32.mrf.mxu0
    %2417 = vdwg.mxu0
    %v2418 = vadd.f32 %v2375, %v2389
    %v2419 = vxor.u32 %v2418, 2147483648
    %v2420 = vmul.f32 %v2419, 1.442695
    %v2421 = vpow.pop %v2420
    %v2422 = vadd.f32 %v2421, 1.0
    %v2423 = vrcp.pop %v2422
    %v2424 = vmul.f32 %v2422, %v2423
    %v2425 = vsub.f32 1.0, %v2424
    %v2426 = vmul.f32 %v2423, %v2425
    %v2427 = vadd.f32 %v2423, %v2426
    %vm2428 = vweird.f32 %v2422
    %vm2429 = vweird.f32 %v2423
    %vm2430 = vmor %vm2428, %vm2429
    %v2431 = vsel %vm2430, %v2423, %v2427
    %v2432 = vand.u32 2147483647, %v2422
    %vm2433 = vcmp.eq.f32.partialorder %v2432, 8.507059e+37
    %v2434 = vand.u32 %v2422, 2147483648
    %v2435 = vor.u32 1.1754944e-38, %v2434
    %v2436 = vsel %vm2433, %v2435, %v2431
    %v2437 = vmul.f32 1.0, %v2436
    %v2438 = vadd.f32 %v2376, %v2402
    %v2439 = vxor.u32 %v2438, 2147483648
    %v2440 = vmul.f32 %v2439, 1.442695
    %v2441 = vpow.pop %v2440
    %v2442 = vadd.f32 %v2441, 1.0
    %v2443 = vrcp.pop %v2442
    %v2444 = vmul.f32 %v2442, %v2443
    %v2445 = vsub.f32 1.0, %v2444
    %v2446 = vmul.f32 %v2443, %v2445
    %v2447 = vadd.f32 %v2443, %v2446
    %vm2448 = vweird.f32 %v2442
    %vm2449 = vweird.f32 %v2443
    %vm2450 = vmor %vm2448, %vm2449
    %v2451 = vsel %vm2450, %v2443, %v2447
    %v2452 = vand.u32 2147483647, %v2442
    %vm2453 = vcmp.eq.f32.partialorder %v2452, 8.507059e+37
    %v2454 = vand.u32 %v2442, 2147483648
    %v2455 = vor.u32 1.1754944e-38, %v2454
    %v2456 = vsel %vm2453, %v2455, %v2451
    %v2457 = vmul.f32 1.0, %v2456
    %v2458 = vadd.f32 %v2415, %v1898
    %v2459 = vmul.f32 %v2437, %v2458
    %v2460 = vadd.f32 %v2377, %v2459
    %v2461 = vtanh.pop %v2460
    %v2462 = vsub.f32 1.0, %v2457
    %v2463 = vmul.f32 %v2462, %v2461
    %v2464 = vmul.f32 %v2457, %v2374
    %v2465 = vadd.f32 %v2463, %v2464
    %2466 = vst [vmem:[%s1684] sm:$0xff] %v2465
    %v2467 = vld [vmem:[%s1684] sm:$0xff]
    %v2468 = vld [vmem:[%s1244] sm:$0xff]
    %v2469 = vld [vmem:[%s1244 + $0x8] sm:$0xff]
    %v2470 = vld [vmem:[%s1244 + $0x10] sm:$0xff]
    %v2471 = vpack.c.bf16 %v2467, %v2467
    %2472 = vmatpush.bf16.msra.mxu0 %v1791
    %2473 = vmatpush.bf16.msra.mxu0 %v1788
    %2474 = vmatpush.bf16.msra.mxu0 %v1785
    %2475 = vmatpush.bf16.msra.mxu0 %v1782
    %2476 = vmatpush.bf16.msra.mxu0 %v1779
    %2477 = vmatpush.bf16.msra.mxu0 %v1776
    %2478 = vmatpush.bf16.msra.mxu0 %v1773
    %2479 = vmatpush.bf16.msra.mxu0 %v1770
    %2480 = vmatmul.bf16.gmra.mxu0 %v2471
    %v2481 = vpop.f32.mrf.mxu0
    %v2482 = vadd.f32 0.0, %v2481
    %v2483 = vpop.f32.mrf.mxu0
    %2484 = vdwg.mxu0
    %2485 = vmatpush.bf16.msra.mxu0 %v1792
    %2486 = vmatpush.bf16.msra.mxu0 %v1789
    %2487 = vmatpush.bf16.msra.mxu0 %v1786
    %2488 = vmatpush.bf16.msra.mxu0 %v1783
    %2489 = vmatpush.bf16.msra.mxu0 %v1780
    %2490 = vmatpush.bf16.msra.mxu0 %v1777
    %2491 = vmatpush.bf16.msra.mxu0 %v1774
    %2492 = vmatpush.bf16.msra.mxu0 %v1771
    %2493 = vmatmul.bf16.gmra.mxu0 %v2471
    %v2494 = vpop.f32.mrf.mxu0
    %v2495 = vadd.f32 0.0, %v2494
    %v2496 = vpop.f32.mrf.mxu0
    %2497 = vdwg.mxu0
    %2498 = vmatpush.bf16.msra.mxu0 %v1793
    %2499 = vmatpush.bf16.msra.mxu0 %v1790
    %2500 = vmatpush.bf16.msra.mxu0 %v1787
    %2501 = vmatpush.bf16.msra.mxu0 %v1784
    %2502 = vmatpush.bf16.msra.mxu0 %v1781
    %2503 = vmatpush.bf16.msra.mxu0 %v1778
    %2504 = vmatpush.bf16.msra.mxu0 %v1775
    %2505 = vmatpush.bf16.msra.mxu0 %v1772
    %2506 = vmatmul.bf16.gmra.mxu0 %v2471
    %v2507 = vpop.f32.mrf.mxu0
    %v2508 = vadd.f32 0.0, %v2507
    %v2509 = vpop.f32.mrf.mxu0
    %2510 = vdwg.mxu0
    %v2511 = vadd.f32 %v2468, %v2482
    %v2512 = vxor.u32 %v2511, 2147483648
    %v2513 = vmul.f32 %v2512, 1.442695
    %v2514 = vpow.pop %v2513
    %v2515 = vadd.f32 %v2514, 1.0
    %v2516 = vrcp.pop %v2515
    %v2517 = vmul.f32 %v2515, %v2516
    %v2518 = vsub.f32 1.0, %v2517
    %v2519 = vmul.f32 %v2516, %v2518
    %v2520 = vadd.f32 %v2516, %v2519
    %vm2521 = vweird.f32 %v2515
    %vm2522 = vweird.f32 %v2516
    %vm2523 = vmor %vm2521, %vm2522
    %v2524 = vsel %vm2523, %v2516, %v2520
    %v2525 = vand.u32 2147483647, %v2515
    %vm2526 = vcmp.eq.f32.partialorder %v2525, 8.507059e+37
    %v2527 = vand.u32 %v2515, 2147483648
    %v2528 = vor.u32 1.1754944e-38, %v2527
    %v2529 = vsel %vm2526, %v2528, %v2524
    %v2530 = vmul.f32 1.0, %v2529
    %v2531 = vadd.f32 %v2469, %v2495
    %v2532 = vxor.u32 %v2531, 2147483648
    %v2533 = vmul.f32 %v2532, 1.442695
    %v2534 = vpow.pop %v2533
    %v2535 = vadd.f32 %v2534, 1.0
    %v2536 = vrcp.pop %v2535
    %v2537 = vmul.f32 %v2535, %v2536
    %v2538 = vsub.f32 1.0, %v2537
    %v2539 = vmul.f32 %v2536, %v2538
    %v2540 = vadd.f32 %v2536, %v2539
    %vm2541 = vweird.f32 %v2535
    %vm2542 = vweird.f32 %v2536
    %vm2543 = vmor %vm2541, %vm2542
    %v2544 = vsel %vm2543, %v2536, %v2540
    %v2545 = vand.u32 2147483647, %v2535
    %vm2546 = vcmp.eq.f32.partialorder %v2545, 8.507059e+37
    %v2547 = vand.u32 %v2535, 2147483648
    %v2548 = vor.u32 1.1754944e-38, %v2547
    %v2549 = vsel %vm2546, %v2548, %v2544
    %v2550 = vmul.f32 1.0, %v2549
    %v2551 = vadd.f32 %v2508, %v1898
    %v2552 = vmul.f32 %v2530, %v2551
    %v2553 = vadd.f32 %v2470, %v2552
    %v2554 = vtanh.pop %v2553
    %v2555 = vsub.f32 1.0, %v2550
    %v2556 = vmul.f32 %v2555, %v2554
    %v2557 = vmul.f32 %v2550, %v2467
    %v2558 = vadd.f32 %v2556, %v2557
    %2559 = vst [vmem:[%s1684] sm:$0xff] %v2558
    // Predicated region
    $region62: #{gru_forward.1} parent=1 // pred_check
      %p2560 = pneg %p85
    $region63: #{gru_forward.1} parent=1 // pred_check_branch
      %2562 = sbr.rel (%p2560) target = $region65
    $region64: #{gru_forward.1} parent=1 // pred_region
      %v2563 = vld [vmem:[%s1684] sm:$0xff]
      %v2564 = vpack.c.bf16 %v2563, %v2563
      %v2565 = vld [vmem:[#allocation9] sm:$0xf]
      %v2566 = vld [vmem:[#allocation9 + $0x4] sm:$0xf]
      %v2567 = vld [vmem:[#allocation9 + $0x8] sm:$0xf]
      %v2568 = vld [vmem:[#allocation9 + $0xc] sm:$0xf]
      %v2569 = vld [vmem:[#allocation9 + $0x10] sm:$0xf]
      %v2570 = vld [vmem:[#allocation9 + $0x14] sm:$0xf]
      %v2571 = vld [vmem:[#allocation9 + $0x18] sm:$0xf]
      %v2572 = vld [vmem:[#allocation9 + $0x1c] sm:$0xf]
      %v2573 = vld [vmem:[#allocation9 + $0x20] sm:$0xf]
      %v2574 = vld [vmem:[#allocation9 + $0x24] sm:$0xf]
      %v2575 = vld [vmem:[#allocation9 + $0x28] sm:$0xf]
      %v2576 = vld [vmem:[#allocation9 + $0x2c] sm:$0xf]
      %v2577 = vld [vmem:[#allocation9 + $0x30] sm:$0xf]
      %v2578 = vld [vmem:[#allocation9 + $0x34] sm:$0xf]
      %v2579 = vld [vmem:[#allocation9 + $0x38] sm:$0xf]
      %v2580 = vld [vmem:[#allocation9 + $0x3c] sm:$0xf]
      %v2581 = vld [vmem:[%s10] sm:$0x1]
      %v2583 = vperm.slane %v2581, 0
      %v2601 = vunpack.c.l.b16 %v2565
      %v2602 = vunpack.c.l.b16 %v2566
      %v2603 = vunpack.c.l.b16 %v2567
      %v2604 = vunpack.c.l.b16 %v2568
      %v2605 = vunpack.c.l.b16 %v2569
      %v2606 = vunpack.c.l.b16 %v2570
      %v2607 = vunpack.c.l.b16 %v2571
      %v2608 = vunpack.c.l.b16 %v2572
      %v2609 = vunpack.c.l.b16 %v2573
      %v2610 = vunpack.c.l.b16 %v2574
      %v2611 = vunpack.c.l.b16 %v2575
      %v2612 = vunpack.c.l.b16 %v2576
      %v2613 = vunpack.c.l.b16 %v2577
      %v2614 = vunpack.c.l.b16 %v2578
      %v2615 = vunpack.c.l.b16 %v2579
      %v2616 = vunpack.c.l.b16 %v2580
      %v2617 = vpack.c.b16 %v2602, %v2601
      %v2618 = vpack.c.b16 %v2604, %v2603
      %v2619 = vpack.c.b16 %v2606, %v2605
      %v2620 = vpack.c.b16 %v2608, %v2607
      %v2621 = vpack.c.b16 %v2610, %v2609
      %v2622 = vpack.c.b16 %v2612, %v2611
      %v2623 = vpack.c.b16 %v2614, %v2613
      %v2624 = vpack.c.b16 %v2616, %v2615
      %2633 = vmatpush.bf16.msra.mxu0 %v2624
      %2634 = vmatpush.bf16.msra.mxu0 %v2623
      %2635 = vmatpush.bf16.msra.mxu0 %v2622
      %2636 = vmatpush.bf16.msra.mxu0 %v2621
      %2637 = vmatpush.bf16.msra.mxu0 %v2620
      %2638 = vmatpush.bf16.msra.mxu0 %v2619
      %2639 = vmatpush.bf16.msra.mxu0 %v2618
      %2640 = vmatpush.bf16.msra.mxu0 %v2617
      %2641 = vmatmul.bf16.gmra.mxu0 %v2564
      %v2642 = vpop.f32.mrf.mxu0
      %v2643 = vadd.f32 %v2583, %v2642
      %v2644 = vpop.f32.mrf.mxu0
      %2645 = vdwg.mxu0
      %2646 = vst [vmem:[%s11] sm:$0xff] %v2643
    $region65: #{gru_forward.1} parent=1 // pred_fallthru
      _
    // Predicated region
    $region66: #{gru_forward.1} parent=1 // pred_check
      _
    $region67: #{gru_forward.1} parent=1 // pred_check_branch
      %2648 = sbr.rel (0) target = $region69
    $region68: #{gru_forward.1} parent=1 // pred_region
      _
    $region69: #{gru_forward.1} parent=1 // pred_fallthru
      _
    // Predicated region
    $region70: #{gru_forward.1} parent=1 // pred_check
      _
    $region71: #{gru_forward.1} parent=1 // pred_check_branch
      %2650 = sbr.rel (0) target = $region73
    $region72: #{gru_forward.1} parent=1 // pred_region
      _
    $region73: #{gru_forward.1} parent=1 // pred_fallthru
      _
    %2651 = vsyncpa [#allocation6], 1
    %2652 = vsyncpa [#allocation8], 1

</llo_original>
